<compile_context>
chip_gen: v7x
topology: tpu7x:2x2x1
jax: 0.10.0
libtpu: 0.0.40
codegen_flags: <defaults>
</compile_context>

<pallas_src>
import functools

import jax
import jax.numpy as jnp
from jax import lax
from jax.experimental import pallas as pl
from jax.experimental.pallas import tpu as pltpu
import numpy as np


# ----------------------------------------------------------------------------------
# Pallas kernel: full autoencoder forward for one batch tile.
# ----------------------------------------------------------------------------------
def _lstm_ae_kernel(x_ref,                          # (1, T*TB, V)  row = t*TB + local_batch
                    wih_e_ref, whh_e_ref, b_e_ref,  # encoder LSTM (V,4Hs) (H,4Hs) (1,4Hs)
                    wih_d_ref, whh_d_ref, b_d_ref,  # decoder LSTM (H,4Hs) (H,4Hs) (1,4Hs)
                    wh_ref, bh_ref,                 # hidden Linear (H,H) (1,H)
                    wo_ref, bo_ref,                 # output Linear (H,V) (1,V)
                    out_ref,                        # (1, T*TB, V)
                    z_ref,                          # (TB, H)
                    gx_scr,                         # (T*TB, 4Hs) f32  precomputed x-gates
                    hdec_scr):                      # (T*TB, H)   f32  decoder hidden states
    TB, H = z_ref.shape
    T = hdec_scr.shape[0] // TB
    Hs = whh_e_ref.shape[1] // 4                    # lane-aligned gate stride (>= H)
    unroll = True if T <= 32 else 8

    def sigmoid(u):
        # 0.5*(tanh(u/2)+1): a single EUP transcendental instead of exp + reciprocal.
        return 0.5 * jnp.tanh(0.5 * u) + 0.5

    # Hoisted, loop-invariant weight loads (refs are mutable -> load once, not per step).
    whh_e = whh_e_ref[...]
    whh_d = whh_d_ref[...]

    # ---------------- encoder input projection: ONE big MXU matmul ----------------
    gx_scr[...] = (jnp.dot(x_ref[0], wih_e_ref[...],
                           preferred_element_type=jnp.float32) + b_e_ref[...])

    def cell(gates_x, whh, h, c):
        # gates_x already contains the input projection + bias; only h @ whh is serial.
        g_all = gates_x + jnp.dot(h, whh, preferred_element_type=jnp.float32)
        # PyTorch gate order: i, f, g, o; each slice starts on a 128-lane boundary.
        i = sigmoid(g_all[:, 0 * Hs:0 * Hs + H])
        f = sigmoid(g_all[:, 1 * Hs:1 * Hs + H])
        g = jnp.tanh(g_all[:, 2 * Hs:2 * Hs + H])
        o = sigmoid(g_all[:, 3 * Hs:3 * Hs + H])
        c_new = f * c + i * g
        h_new = o * jnp.tanh(c_new)
        return h_new, c_new

    zeros = jnp.zeros((TB, H), jnp.float32)

    # ---------------- encoder recurrence (state carried in vregs) ----------------
    def enc_body(t, carry):
        h, c = carry
        row = pl.multiple_of(t * TB, TB)
        return cell(gx_scr[pl.ds(row, TB), :], whh_e, h, c)

    z, _ = lax.fori_loop(0, T, enc_body, (zeros, zeros), unroll=unroll)
    z_ref[...] = z.astype(z_ref.dtype)

    # ---------------- decoder: constant-z input projection hoisted out of the loop ----------------
    gz = jnp.dot(z, wih_d_ref[...], preferred_element_type=jnp.float32) + b_d_ref[...]

    def dec_body(t, carry):
        h, c = carry
        h_new, c_new = cell(gz, whh_d, h, c)
        row = pl.multiple_of(t * TB, TB)
        hdec_scr[pl.ds(row, TB), :] = h_new
        return (h_new, c_new)

    lax.fori_loop(0, T, dec_body, (zeros, zeros), unroll=unroll)

    # ---------------- MLP head: two big batched matmuls + one contiguous store ----------------
    hid = jnp.tanh(jnp.dot(hdec_scr[...], wh_ref[...],
                           preferred_element_type=jnp.float32) + bh_ref[...])
    # TODO(synk): nn.Dropout(0.2) is identity in eval mode; training-mode dropout would need
    # pltpu.prng_seed + pltpu.prng_random_bits masking here.
    out = jnp.dot(hid, wo_ref[...], preferred_element_type=jnp.float32) + bo_ref[...]
    out_ref[0] = out.astype(out_ref.dtype)


# ----------------------------------------------------------------------------------
# Wrapper
# ----------------------------------------------------------------------------------
def _round_up(n, m):
    return ((n + m - 1) // m) * m


def _pad_gate_cols(w, h, hs):
    """(..., 4h) gate-stacked weights/biases -> (..., 4*hs): each gate block zero-padded to a
    128-lane-aligned stride so in-kernel gate slices start on a vreg lane boundary."""
    if hs == h:
        return w
    lead = w.shape[:-1]
    w4 = w.reshape(lead + (4, h))
    w4 = jnp.pad(w4, [(0, 0)] * len(lead) + [(0, 0), (0, hs - h)])
    return w4.reshape(lead + (4 * hs,))


@functools.partial(jax.jit, static_argnames=("return_z", "batch_tile"))
def lstm_autoencoder_forward(x, params, return_z=False, batch_tile=None):
    """x: (B, T, V) float32, batch-first like the PyTorch module."""
    B, T, V = x.shape
    H = params["wh"].shape[0]
    Hs = _round_up(H, 128)                 # lane-aligned gate stride

    Bp = _round_up(B, 8)                   # pad batch to a full sublane tile
    tb = 8 if batch_tile is None else batch_tile
    tb = min(tb, Bp)
    assert tb % 8 == 0 and Bp % tb == 0
    nb = Bp // tb

    x_p = jnp.pad(x, ((0, Bp - B), (0, 0), (0, 0))) if Bp != B else x
    # batch-tile-major, time-flattened 2-D slab: row = t*tb + local_batch
    x_r = x_p.reshape(nb, tb, T, V).transpose(0, 2, 1, 3).reshape(nb, T * tb, V)

    wih_e = _pad_gate_cols(params["wih_e"], H, Hs)
    whh_e = _pad_gate_cols(params["whh_e"], H, Hs)
    b_e = _pad_gate_cols(params["b_e"], H, Hs)
    wih_d = _pad_gate_cols(params["wih_d"], H, Hs)
    whh_d = _pad_gate_cols(params["whh_d"], H, Hs)
    b_d = _pad_gate_cols(params["b_d"], H, Hs)

    def _full(shape):
        return pl.BlockSpec(shape, lambda b: (0,) * len(shape))

    out_r, z = pl.pallas_call(
        _lstm_ae_kernel,
        out_shape=(
            jax.ShapeDtypeStruct((nb, T * tb, V), jnp.float32),
            jax.ShapeDtypeStruct((Bp, H), jnp.float32),
        ),
        grid_spec=pltpu.PrefetchScalarGridSpec(
            num_scalar_prefetch=0,
            grid=(nb,),
            in_specs=[
                pl.BlockSpec((1, T * tb, V), lambda b: (b, 0, 0)),   # x slab (per batch tile)
                _full((V, 4 * Hs)), _full((H, 4 * Hs)), _full((1, 4 * Hs)),   # encoder LSTM
                _full((H, 4 * Hs)), _full((H, 4 * Hs)), _full((1, 4 * Hs)),   # decoder LSTM
                _full((H, H)), _full((1, H)),                                  # hidden Linear
                _full((H, V)), _full((1, V)),                                  # output Linear
            ],
            out_specs=(
                pl.BlockSpec((1, T * tb, V), lambda b: (b, 0, 0)),
                pl.BlockSpec((tb, H), lambda b: (b, 0)),
            ),
            scratch_shapes=[
                pltpu.VMEM((T * tb, 4 * Hs), jnp.float32),   # precomputed x-gates
                pltpu.VMEM((T * tb, H), jnp.float32),        # decoder hidden states
            ],
        ),
        compiler_params=pltpu.CompilerParams(
            dimension_semantics=("parallel",),
        ),
    )(
        x_r,
        wih_e, whh_e, b_e,
        wih_d, whh_d, b_d,
        params["wh"], params["bh"],
        params["wo"], params["bo"],
    )

    out = out_r.reshape(nb, T, tb, V).transpose(0, 2, 1, 3).reshape(Bp, T, V)[:B]
    z = z[:B]
    return (out, z) if return_z else out


# ----------------------------------------------------------------------------------
# Deterministic parameter init (matches module __init__: xavier_uniform weights,
# zero biases).  Weights are stored pre-transposed to (in, out) for the kernel.
# ----------------------------------------------------------------------------------
def _xavier_uniform(key, shape_torch):
    # shape_torch = (fan_out, fan_in) as PyTorch stores it
    fan_out, fan_in = shape_torch
    a = float(np.sqrt(6.0 / (fan_in + fan_out)))
    w = jax.random.uniform(key, shape_torch, jnp.float32, minval=-a, maxval=a)
    return jnp.transpose(w)  # -> (in, out)


def init_params(key, n_vars, latent_dim):
    H, V = latent_dim, n_vars
    ks = jax.random.split(key, 6)
    params = {
        # encoder LSTM
        "wih_e": _xavier_uniform(ks[0], (4 * H, V)),      # (V, 4H)
        "whh_e": _xavier_uniform(ks[1], (4 * H, H)),      # (H, 4H)
        "b_e": jnp.zeros((1, 4 * H), jnp.float32),        # b_ih + b_hh (both zero at init)
        # decoder LSTM
        "wih_d": _xavier_uniform(ks[2], (4 * H, H)),      # (H, 4H)
        "whh_d": _xavier_uniform(ks[3], (4 * H, H)),      # (H, 4H)
        "b_d": jnp.zeros((1, 4 * H), jnp.float32),
        # hidden Linear + output Linear
        "wh": _xavier_uniform(ks[4], (H, H)),             # (H, H)
        "bh": jnp.zeros((1, H), jnp.float32),
        "wo": _xavier_uniform(ks[5], (V, H)),             # (H, V)
        "bo": jnp.zeros((1, V), jnp.float32),
    }
    return params


# ----------------------------------------------------------------------------------
# Pure-JAX reference (mirrors PyTorch nn.LSTM + Linear semantics) for validation.
# ----------------------------------------------------------------------------------
def _lstm_ref(x_btv, wih, whh, b):
    B = x_btv.shape[0]
    H = whh.shape[0]
    h0 = jnp.zeros((B, H), jnp.float32)
    c0 = jnp.zeros((B, H), jnp.float32)

    def step(carry, x_t):
        h, c = carry
        gates = x_t @ wih + h @ whh + b
        i, f, g, o = jnp.split(gates, 4, axis=-1)
        i, f, o = jax.nn.sigmoid(i), jax.nn.sigmoid(f), jax.nn.sigmoid(o)
        g = jnp.tanh(g)
        c = f * c + i * g
        h = o * jnp.tanh(c)
        return (h, c), h

    (h_n, _), hs = lax.scan(step, (h0, c0), jnp.transpose(x_btv, (1, 0, 2)))
    return jnp.transpose(hs, (1, 0, 2)), h_n


def reference_forward(x, params):
    B, T, V = x.shape
    _, z = _lstm_ref(x, params["wih_e"], params["whh_e"], params["b_e"])
    z_rep = jnp.broadcast_to(z[:, None, :], (B, T, z.shape[-1]))
    dec_out, _ = _lstm_ref(z_rep, params["wih_d"], params["whh_d"], params["b_d"])
    h = jnp.tanh(dec_out @ params["wh"] + params["bh"])
    out = h @ params["wo"] + params["bo"]
    return out, z


# ----------------------------------------------------------------------------------
if __name__ == "__main__":
    B, T, V, H = 2, 8, 4, 32  # batch, n_timesteps, n_vars, latent_dim (small shapes)

    key = jax.random.PRNGKey(0)
    k_x, k_p = jax.random.split(key)
    x = jax.random.normal(k_x, (B, T, V), jnp.float32)
    params = init_params(k_p, n_vars=V, latent_dim=H)

    out, z = lstm_autoencoder_forward(x, params, return_z=True)
    out, z = jax.block_until_ready((out, z))

    out_ref, z_ref = reference_forward(x, params)
    np.testing.assert_allclose(np.asarray(out), np.asarray(out_ref), rtol=2e-4, atol=2e-5)
    np.testing.assert_allclose(np.asarray(z), np.asarray(z_ref), rtol=2e-4, atol=2e-5)
    assert out.shape == (B, T, V) and z.shape == (B, H)

    print("KERNEL_OK")
</pallas_src>

<mosaic_0001>
module attributes {stable_mosaic.version = 11 : i64} {
  func.func @_lstm_ae_kernel(%arg0: i32, %arg1: memref<1x64x4xf32, #tpu.memory_space<vmem>>, %arg2: memref<4x512xf32, #tpu.memory_space<vmem>>, %arg3: memref<32x512xf32, #tpu.memory_space<vmem>>, %arg4: memref<1x512xf32, #tpu.memory_space<vmem>>, %arg5: memref<32x512xf32, #tpu.memory_space<vmem>>, %arg6: memref<32x512xf32, #tpu.memory_space<vmem>>, %arg7: memref<1x512xf32, #tpu.memory_space<vmem>>, %arg8: memref<32x32xf32, #tpu.memory_space<vmem>>, %arg9: memref<1x32xf32, #tpu.memory_space<vmem>>, %arg10: memref<32x4xf32, #tpu.memory_space<vmem>>, %arg11: memref<1x4xf32, #tpu.memory_space<vmem>>, %arg12: memref<1x64x4xf32, #tpu.memory_space<vmem>>, %arg13: memref<8x32xf32, #tpu.memory_space<vmem>>, %arg14: memref<64x512xf32, #tpu.memory_space<vmem>>, %arg15: memref<64x32xf32, #tpu.memory_space<vmem>>) attributes {dimension_semantics = [#tpu.dimension_semantics<parallel>], iteration_bounds = array<i64: 1>, scalar_prefetch = 0 : i64, scratch_operands = 2 : i64, tpu.core_type = #tpu.core_type<tc>, window_params = [{transform_indices = @transform_0, window_bounds = array<i64: 1, 64, 4>}, {pipeline_mode = #tpu.pipeline_mode<synchronous>, transform_indices = @transform_1, window_bounds = array<i64: 4, 512>}, {pipeline_mode = #tpu.pipeline_mode<synchronous>, transform_indices = @transform_2, window_bounds = array<i64: 32, 512>}, {pipeline_mode = #tpu.pipeline_mode<synchronous>, transform_indices = @transform_3, window_bounds = array<i64: 1, 512>}, {pipeline_mode = #tpu.pipeline_mode<synchronous>, transform_indices = @transform_4, window_bounds = array<i64: 32, 512>}, {pipeline_mode = #tpu.pipeline_mode<synchronous>, transform_indices = @transform_5, window_bounds = array<i64: 32, 512>}, {pipeline_mode = #tpu.pipeline_mode<synchronous>, transform_indices = @transform_6, window_bounds = array<i64: 1, 512>}, {pipeline_mode = #tpu.pipeline_mode<synchronous>, transform_indices = @transform_7, window_bounds = array<i64: 32, 32>}, {pipeline_mode = #tpu.pipeline_mode<synchronous>, transform_indices = @transform_8, window_bounds = array<i64: 1, 32>}, {pipeline_mode = #tpu.pipeline_mode<synchronous>, transform_indices = @transform_9, window_bounds = array<i64: 32, 4>}, {pipeline_mode = #tpu.pipeline_mode<synchronous>, transform_indices = @transform_10, window_bounds = array<i64: 1, 4>}, {transform_indices = @transform_11, window_bounds = array<i64: 1, 64, 4>}, {transform_indices = @transform_12, window_bounds = array<i64: 8, 32>}]} {
    %c0 = arith.constant 0 : index
    %c0_0 = arith.constant 0 : index
    %0 = vector.load %arg3[%c0, %c0_0] : memref<32x512xf32, #tpu.memory_space<vmem>>, vector<32x512xf32>
    %c0_1 = arith.constant 0 : index
    %c0_2 = arith.constant 0 : index
    %1 = vector.load %arg6[%c0_1, %c0_2] : memref<32x512xf32, #tpu.memory_space<vmem>>, vector<32x512xf32>
    %c0_3 = arith.constant 0 : index
    %c0_4 = arith.constant 0 : index
    %c0_5 = arith.constant 0 : index
    %2 = vector.load %arg1[%c0_3, %c0_4, %c0_5] : memref<1x64x4xf32, #tpu.memory_space<vmem>>, vector<1x64x4xf32>
    %3 = vector.shape_cast %2 : vector<1x64x4xf32> to vector<64x4xf32>
    %c0_6 = arith.constant 0 : index
    %c0_7 = arith.constant 0 : index
    %4 = vector.load %arg2[%c0_6, %c0_7] : memref<4x512xf32, #tpu.memory_space<vmem>>, vector<4x512xf32>
    %cst = arith.constant dense<0.000000e+00> : vector<64x512xf32>
    %5 = tpu.matmul %3, %4, %cst {dimension_numbers = #tpu.dot_dimension_numbers<[1], [0], [0], [1], [0, 0, 1, 1], [], []>} : vector<64x4xf32>, vector<4x512xf32>, vector<64x512xf32> -> vector<64x512xf32>
    %c0_8 = arith.constant 0 : index
    %c0_9 = arith.constant 0 : index
    %6 = vector.load %arg4[%c0_8, %c0_9] : memref<1x512xf32, #tpu.memory_space<vmem>>, vector<1x512xf32>
    %7 = vector.broadcast %6 : vector<1x512xf32> to vector<64x512xf32>
    %8 = arith.addf %5, %7 : vector<64x512xf32>
    %c0_10 = arith.constant 0 : index
    %c0_11 = arith.constant 0 : index
    %9 = vector.load %arg14[%c0_10, %c0_11] : memref<64x512xf32, #tpu.memory_space<vmem>>, vector<64x512xf32>
    tpu.vector_store %arg14[%c0_10, %c0_11], %8 {strides = array<i32>} : memref<64x512xf32, #tpu.memory_space<vmem>>, vector<64x512xf32>,
    %cst_12 = arith.constant 0.000000e+00 : f32
    %10 = vector.broadcast %cst_12 : f32 to vector<8x32xf32>
    %c0_i32 = arith.constant 0 : i32
    %c8_i32 = arith.constant 8 : i32
    %11 = arith.muli %c0_i32, %c8_i32 : i32
    %12 = tpu.assume_multiple %11, 8 : i32
    %13 = arith.index_cast %12 : i32 to index
    %c0_13 = arith.constant 0 : index
    %14 = vector.load %arg14[%13, %c0_13] : memref<64x512xf32, #tpu.memory_space<vmem>>, vector<8x512xf32>
    %cst_14 = arith.constant dense<0.000000e+00> : vector<8x512xf32>
    %15 = tpu.matmul %10, %0, %cst_14 {dimension_numbers = #tpu.dot_dimension_numbers<[1], [0], [0], [1], [0, 0, 1, 1], [], []>} : vector<8x32xf32>, vector<32x512xf32>, vector<8x512xf32> -> vector<8x512xf32>
    %16 = arith.addf %14, %15 : vector<8x512xf32>
    %17 = vector.extract_strided_slice %16 {offsets = [0, 0], sizes = [8, 32], strides = [1, 1]} : vector<8x512xf32> to vector<8x32xf32>
    %cst_15 = arith.constant 5.000000e-01 : f32
    %18 = vector.broadcast %cst_15 : f32 to vector<8x32xf32>
    %19 = arith.mulf %18, %17 : vector<8x32xf32>
    %20 = math.tanh %19 : vector<8x32xf32>
    %cst_16 = arith.constant 5.000000e-01 : f32
    %21 = vector.broadcast %cst_16 : f32 to vector<8x32xf32>
    %22 = arith.mulf %21, %20 : vector<8x32xf32>
    %cst_17 = arith.constant 5.000000e-01 : f32
    %23 = vector.broadcast %cst_17 : f32 to vector<8x32xf32>
    %24 = arith.addf %22, %23 : vector<8x32xf32>
    %25 = vector.extract_strided_slice %16 {offsets = [0, 128], sizes = [8, 32], strides = [1, 1]} : vector<8x512xf32> to vector<8x32xf32>
    %cst_18 = arith.constant 5.000000e-01 : f32
    %26 = vector.broadcast %cst_18 : f32 to vector<8x32xf32>
    %27 = arith.mulf %26, %25 : vector<8x32xf32>
    %28 = math.tanh %27 : vector<8x32xf32>
    %cst_19 = arith.constant 5.000000e-01 : f32
    %29 = vector.broadcast %cst_19 : f32 to vector<8x32xf32>
    %30 = arith.mulf %29, %28 : vector<8x32xf32>
    %cst_20 = arith.constant 5.000000e-01 : f32
    %31 = vector.broadcast %cst_20 : f32 to vector<8x32xf32>
    %32 = arith.addf %30, %31 : vector<8x32xf32>
    %33 = vector.extract_strided_slice %16 {offsets = [0, 256], sizes = [8, 32], strides = [1, 1]} : vector<8x512xf32> to vector<8x32xf32>
    %34 = math.tanh %33 : vector<8x32xf32>
    %35 = vector.extract_strided_slice %16 {offsets = [0, 384], sizes = [8, 32], strides = [1, 1]} : vector<8x512xf32> to vector<8x32xf32>
    %cst_21 = arith.constant 5.000000e-01 : f32
    %36 = vector.broadcast %cst_21 : f32 to vector<8x32xf32>
    %37 = arith.mulf %36, %35 : vector<8x32xf32>
    %38 = math.tanh %37 : vector<8x32xf32>
    %cst_22 = arith.constant 5.000000e-01 : f32
    %39 = vector.broadcast %cst_22 : f32 to vector<8x32xf32>
    %40 = arith.mulf %39, %38 : vector<8x32xf32>
    %cst_23 = arith.constant 5.000000e-01 : f32
    %41 = vector.broadcast %cst_23 : f32 to vector<8x32xf32>
    %42 = arith.addf %40, %41 : vector<8x32xf32>
    %43 = arith.mulf %32, %10 : vector<8x32xf32>
    %44 = arith.mulf %24, %34 : vector<8x32xf32>
    %45 = arith.addf %43, %44 : vector<8x32xf32>
    %46 = math.tanh %45 : vector<8x32xf32>
    %47 = arith.mulf %42, %46 : vector<8x32xf32>
    %c1_i32 = arith.constant 1 : i32
    %c8_i32_24 = arith.constant 8 : i32
    %48 = arith.muli %c1_i32, %c8_i32_24 : i32
    %49 = tpu.assume_multiple %48, 8 : i32
    %50 = arith.index_cast %49 : i32 to index
    %c0_25 = arith.constant 0 : index
    %51 = vector.load %arg14[%50, %c0_25] : memref<64x512xf32, #tpu.memory_space<vmem>>, vector<8x512xf32>
    %cst_26 = arith.constant dense<0.000000e+00> : vector<8x512xf32>
    %52 = tpu.matmul %47, %0, %cst_26 {dimension_numbers = #tpu.dot_dimension_numbers<[1], [0], [0], [1], [0, 0, 1, 1], [], []>} : vector<8x32xf32>, vector<32x512xf32>, vector<8x512xf32> -> vector<8x512xf32>
    %53 = arith.addf %51, %52 : vector<8x512xf32>
    %54 = vector.extract_strided_slice %53 {offsets = [0, 0], sizes = [8, 32], strides = [1, 1]} : vector<8x512xf32> to vector<8x32xf32>
    %cst_27 = arith.constant 5.000000e-01 : f32
    %55 = vector.broadcast %cst_27 : f32 to vector<8x32xf32>
    %56 = arith.mulf %55, %54 : vector<8x32xf32>
    %57 = math.tanh %56 : vector<8x32xf32>
    %cst_28 = arith.constant 5.000000e-01 : f32
    %58 = vector.broadcast %cst_28 : f32 to vector<8x32xf32>
    %59 = arith.mulf %58, %57 : vector<8x32xf32>
    %cst_29 = arith.constant 5.000000e-01 : f32
    %60 = vector.broadcast %cst_29 : f32 to vector<8x32xf32>
    %61 = arith.addf %59, %60 : vector<8x32xf32>
    %62 = vector.extract_strided_slice %53 {offsets = [0, 128], sizes = [8, 32], strides = [1, 1]} : vector<8x512xf32> to vector<8x32xf32>
    %cst_30 = arith.constant 5.000000e-01 : f32
    %63 = vector.broadcast %cst_30 : f32 to vector<8x32xf32>
    %64 = arith.mulf %63, %62 : vector<8x32xf32>
    %65 = math.tanh %64 : vector<8x32xf32>
    %cst_31 = arith.constant 5.000000e-01 : f32
    %66 = vector.broadcast %cst_31 : f32 to vector<8x32xf32>
    %67 = arith.mulf %66, %65 : vector<8x32xf32>
    %cst_32 = arith.constant 5.000000e-01 : f32
    %68 = vector.broadcast %cst_32 : f32 to vector<8x32xf32>
    %69 = arith.addf %67, %68 : vector<8x32xf32>
    %70 = vector.extract_strided_slice %53 {offsets = [0, 256], sizes = [8, 32], strides = [1, 1]} : vector<8x512xf32> to vector<8x32xf32>
    %71 = math.tanh %70 : vector<8x32xf32>
    %72 = vector.extract_strided_slice %53 {offsets = [0, 384], sizes = [8, 32], strides = [1, 1]} : vector<8x512xf32> to vector<8x32xf32>
    %cst_33 = arith.constant 5.000000e-01 : f32
    %73 = vector.broadcast %cst_33 : f32 to vector<8x32xf32>
    %74 = arith.mulf %73, %72 : vector<8x32xf32>
    %75 = math.tanh %74 : vector<8x32xf32>
    %cst_34 = arith.constant 5.000000e-01 : f32
    %76 = vector.broadcast %cst_34 : f32 to vector<8x32xf32>
    %77 = arith.mulf %76, %75 : vector<8x32xf32>
    %cst_35 = arith.constant 5.000000e-01 : f32
    %78 = vector.broadcast %cst_35 : f32 to vector<8x32xf32>
    %79 = arith.addf %77, %78 : vector<8x32xf32>
    %80 = arith.mulf %69, %45 : vector<8x32xf32>
    %81 = arith.mulf %61, %71 : vector<8x32xf32>
    %82 = arith.addf %80, %81 : vector<8x32xf32>
    %83 = math.tanh %82 : vector<8x32xf32>
    %84 = arith.mulf %79, %83 : vector<8x32xf32>
    %c2_i32 = arith.constant 2 : i32
    %c8_i32_36 = arith.constant 8 : i32
    %85 = arith.muli %c2_i32, %c8_i32_36 : i32
    %86 = tpu.assume_multiple %85, 8 : i32
    %87 = arith.index_cast %86 : i32 to index
    %c0_37 = arith.constant 0 : index
    %88 = vector.load %arg14[%87, %c0_37] : memref<64x512xf32, #tpu.memory_space<vmem>>, vector<8x512xf32>
    %cst_38 = arith.constant dense<0.000000e+00> : vector<8x512xf32>
    %89 = tpu.matmul %84, %0, %cst_38 {dimension_numbers = #tpu.dot_dimension_numbers<[1], [0], [0], [1], [0, 0, 1, 1], [], []>} : vector<8x32xf32>, vector<32x512xf32>, vector<8x512xf32> -> vector<8x512xf32>
    %90 = arith.addf %88, %89 : vector<8x512xf32>
    %91 = vector.extract_strided_slice %90 {offsets = [0, 0], sizes = [8, 32], strides = [1, 1]} : vector<8x512xf32> to vector<8x32xf32>
    %cst_39 = arith.constant 5.000000e-01 : f32
    %92 = vector.broadcast %cst_39 : f32 to vector<8x32xf32>
    %93 = arith.mulf %92, %91 : vector<8x32xf32>
    %94 = math.tanh %93 : vector<8x32xf32>
    %cst_40 = arith.constant 5.000000e-01 : f32
    %95 = vector.broadcast %cst_40 : f32 to vector<8x32xf32>
    %96 = arith.mulf %95, %94 : vector<8x32xf32>
    %cst_41 = arith.constant 5.000000e-01 : f32
    %97 = vector.broadcast %cst_41 : f32 to vector<8x32xf32>
    %98 = arith.addf %96, %97 : vector<8x32xf32>
    %99 = vector.extract_strided_slice %90 {offsets = [0, 128], sizes = [8, 32], strides = [1, 1]} : vector<8x512xf32> to vector<8x32xf32>
    %cst_42 = arith.constant 5.000000e-01 : f32
    %100 = vector.broadcast %cst_42 : f32 to vector<8x32xf32>
    %101 = arith.mulf %100, %99 : vector<8x32xf32>
    %102 = math.tanh %101 : vector<8x32xf32>
    %cst_43 = arith.constant 5.000000e-01 : f32
    %103 = vector.broadcast %cst_43 : f32 to vector<8x32xf32>
    %104 = arith.mulf %103, %102 : vector<8x32xf32>
    %cst_44 = arith.constant 5.000000e-01 : f32
    %105 = vector.broadcast %cst_44 : f32 to vector<8x32xf32>
    %106 = arith.addf %104, %105 : vector<8x32xf32>
    %107 = vector.extract_strided_slice %90 {offsets = [0, 256], sizes = [8, 32], strides = [1, 1]} : vector<8x512xf32> to vector<8x32xf32>
    %108 = math.tanh %107 : vector<8x32xf32>
    %109 = vector.extract_strided_slice %90 {offsets = [0, 384], sizes = [8, 32], strides = [1, 1]} : vector<8x512xf32> to vector<8x32xf32>
    %cst_45 = arith.constant 5.000000e-01 : f32
    %110 = vector.broadcast %cst_45 : f32 to vector<8x32xf32>
    %111 = arith.mulf %110, %109 : vector<8x32xf32>
    %112 = math.tanh %111 : vector<8x32xf32>
    %cst_46 = arith.constant 5.000000e-01 : f32
    %113 = vector.broadcast %cst_46 : f32 to vector<8x32xf32>
    %114 = arith.mulf %113, %112 : vector<8x32xf32>
    %cst_47 = arith.constant 5.000000e-01 : f32
    %115 = vector.broadcast %cst_47 : f32 to vector<8x32xf32>
    %116 = arith.addf %114, %115 : vector<8x32xf32>
    %117 = arith.mulf %106, %82 : vector<8x32xf32>
    %118 = arith.mulf %98, %108 : vector<8x32xf32>
    %119 = arith.addf %117, %118 : vector<8x32xf32>
    %120 = math.tanh %119 : vector<8x32xf32>
    %121 = arith.mulf %116, %120 : vector<8x32xf32>
    %c3_i32 = arith.constant 3 : i32
    %c8_i32_48 = arith.constant 8 : i32
    %122 = arith.muli %c3_i32, %c8_i32_48 : i32
    %123 = tpu.assume_multiple %122, 8 : i32
    %124 = arith.index_cast %123 : i32 to index
    %c0_49 = arith.constant 0 : index
    %125 = vector.load %arg14[%124, %c0_49] : memref<64x512xf32, #tpu.memory_space<vmem>>, vector<8x512xf32>
    %cst_50 = arith.constant dense<0.000000e+00> : vector<8x512xf32>
    %126 = tpu.matmul %121, %0, %cst_50 {dimension_numbers = #tpu.dot_dimension_numbers<[1], [0], [0], [1], [0, 0, 1, 1], [], []>} : vector<8x32xf32>, vector<32x512xf32>, vector<8x512xf32> -> vector<8x512xf32>
    %127 = arith.addf %125, %126 : vector<8x512xf32>
    %128 = vector.extract_strided_slice %127 {offsets = [0, 0], sizes = [8, 32], strides = [1, 1]} : vector<8x512xf32> to vector<8x32xf32>
    %cst_51 = arith.constant 5.000000e-01 : f32
    %129 = vector.broadcast %cst_51 : f32 to vector<8x32xf32>
    %130 = arith.mulf %129, %128 : vector<8x32xf32>
    %131 = math.tanh %130 : vector<8x32xf32>
    %cst_52 = arith.constant 5.000000e-01 : f32
    %132 = vector.broadcast %cst_52 : f32 to vector<8x32xf32>
    %133 = arith.mulf %132, %131 : vector<8x32xf32>
    %cst_53 = arith.constant 5.000000e-01 : f32
    %134 = vector.broadcast %cst_53 : f32 to vector<8x32xf32>
    %135 = arith.addf %133, %134 : vector<8x32xf32>
    %136 = vector.extract_strided_slice %127 {offsets = [0, 128], sizes = [8, 32], strides = [1, 1]} : vector<8x512xf32> to vector<8x32xf32>
    %cst_54 = arith.constant 5.000000e-01 : f32
    %137 = vector.broadcast %cst_54 : f32 to vector<8x32xf32>
    %138 = arith.mulf %137, %136 : vector<8x32xf32>
    %139 = math.tanh %138 : vector<8x32xf32>
    %cst_55 = arith.constant 5.000000e-01 : f32
    %140 = vector.broadcast %cst_55 : f32 to vector<8x32xf32>
    %141 = arith.mulf %140, %139 : vector<8x32xf32>
    %cst_56 = arith.constant 5.000000e-01 : f32
    %142 = vector.broadcast %cst_56 : f32 to vector<8x32xf32>
    %143 = arith.addf %141, %142 : vector<8x32xf32>
    %144 = vector.extract_strided_slice %127 {offsets = [0, 256], sizes = [8, 32], strides = [1, 1]} : vector<8x512xf32> to vector<8x32xf32>
    %145 = math.tanh %144 : vector<8x32xf32>
    %146 = vector.extract_strided_slice %127 {offsets = [0, 384], sizes = [8, 32], strides = [1, 1]} : vector<8x512xf32> to vector<8x32xf32>
    %cst_57 = arith.constant 5.000000e-01 : f32
    %147 = vector.broadcast %cst_57 : f32 to vector<8x32xf32>
    %148 = arith.mulf %147, %146 : vector<8x32xf32>
    %149 = math.tanh %148 : vector<8x32xf32>
    %cst_58 = arith.constant 5.000000e-01 : f32
    %150 = vector.broadcast %cst_58 : f32 to vector<8x32xf32>
    %151 = arith.mulf %150, %149 : vector<8x32xf32>
    %cst_59 = arith.constant 5.000000e-01 : f32
    %152 = vector.broadcast %cst_59 : f32 to vector<8x32xf32>
    %153 = arith.addf %151, %152 : vector<8x32xf32>
    %154 = arith.mulf %143, %119 : vector<8x32xf32>
    %155 = arith.mulf %135, %145 : vector<8x32xf32>
    %156 = arith.addf %154, %155 : vector<8x32xf32>
    %157 = math.tanh %156 : vector<8x32xf32>
    %158 = arith.mulf %153, %157 : vector<8x32xf32>
    %c4_i32 = arith.constant 4 : i32
    %c8_i32_60 = arith.constant 8 : i32
    %159 = arith.muli %c4_i32, %c8_i32_60 : i32
    %160 = tpu.assume_multiple %159, 8 : i32
    %161 = arith.index_cast %160 : i32 to index
    %c0_61 = arith.constant 0 : index
    %162 = vector.load %arg14[%161, %c0_61] : memref<64x512xf32, #tpu.memory_space<vmem>>, vector<8x512xf32>
    %cst_62 = arith.constant dense<0.000000e+00> : vector<8x512xf32>
    %163 = tpu.matmul %158, %0, %cst_62 {dimension_numbers = #tpu.dot_dimension_numbers<[1], [0], [0], [1], [0, 0, 1, 1], [], []>} : vector<8x32xf32>, vector<32x512xf32>, vector<8x512xf32> -> vector<8x512xf32>
    %164 = arith.addf %162, %163 : vector<8x512xf32>
    %165 = vector.extract_strided_slice %164 {offsets = [0, 0], sizes = [8, 32], strides = [1, 1]} : vector<8x512xf32> to vector<8x32xf32>
    %cst_63 = arith.constant 5.000000e-01 : f32
    %166 = vector.broadcast %cst_63 : f32 to vector<8x32xf32>
    %167 = arith.mulf %166, %165 : vector<8x32xf32>
    %168 = math.tanh %167 : vector<8x32xf32>
    %cst_64 = arith.constant 5.000000e-01 : f32
    %169 = vector.broadcast %cst_64 : f32 to vector<8x32xf32>
    %170 = arith.mulf %169, %168 : vector<8x32xf32>
    %cst_65 = arith.constant 5.000000e-01 : f32
    %171 = vector.broadcast %cst_65 : f32 to vector<8x32xf32>
    %172 = arith.addf %170, %171 : vector<8x32xf32>
    %173 = vector.extract_strided_slice %164 {offsets = [0, 128], sizes = [8, 32], strides = [1, 1]} : vector<8x512xf32> to vector<8x32xf32>
    %cst_66 = arith.constant 5.000000e-01 : f32
    %174 = vector.broadcast %cst_66 : f32 to vector<8x32xf32>
    %175 = arith.mulf %174, %173 : vector<8x32xf32>
    %176 = math.tanh %175 : vector<8x32xf32>
    %cst_67 = arith.constant 5.000000e-01 : f32
    %177 = vector.broadcast %cst_67 : f32 to vector<8x32xf32>
    %178 = arith.mulf %177, %176 : vector<8x32xf32>
    %cst_68 = arith.constant 5.000000e-01 : f32
    %179 = vector.broadcast %cst_68 : f32 to vector<8x32xf32>
    %180 = arith.addf %178, %179 : vector<8x32xf32>
    %181 = vector.extract_strided_slice %164 {offsets = [0, 256], sizes = [8, 32], strides = [1, 1]} : vector<8x512xf32> to vector<8x32xf32>
    %182 = math.tanh %181 : vector<8x32xf32>
    %183 = vector.extract_strided_slice %164 {offsets = [0, 384], sizes = [8, 32], strides = [1, 1]} : vector<8x512xf32> to vector<8x32xf32>
    %cst_69 = arith.constant 5.000000e-01 : f32
    %184 = vector.broadcast %cst_69 : f32 to vector<8x32xf32>
    %185 = arith.mulf %184, %183 : vector<8x32xf32>
    %186 = math.tanh %185 : vector<8x32xf32>
    %cst_70 = arith.constant 5.000000e-01 : f32
    %187 = vector.broadcast %cst_70 : f32 to vector<8x32xf32>
    %188 = arith.mulf %187, %186 : vector<8x32xf32>
    %cst_71 = arith.constant 5.000000e-01 : f32
    %189 = vector.broadcast %cst_71 : f32 to vector<8x32xf32>
    %190 = arith.addf %188, %189 : vector<8x32xf32>
    %191 = arith.mulf %180, %156 : vector<8x32xf32>
    %192 = arith.mulf %172, %182 : vector<8x32xf32>
    %193 = arith.addf %191, %192 : vector<8x32xf32>
    %194 = math.tanh %193 : vector<8x32xf32>
    %195 = arith.mulf %190, %194 : vector<8x32xf32>
    %c5_i32 = arith.constant 5 : i32
    %c8_i32_72 = arith.constant 8 : i32
    %196 = arith.muli %c5_i32, %c8_i32_72 : i32
    %197 = tpu.assume_multiple %196, 8 : i32
    %198 = arith.index_cast %197 : i32 to index
    %c0_73 = arith.constant 0 : index
    %199 = vector.load %arg14[%198, %c0_73] : memref<64x512xf32, #tpu.memory_space<vmem>>, vector<8x512xf32>
    %cst_74 = arith.constant dense<0.000000e+00> : vector<8x512xf32>
    %200 = tpu.matmul %195, %0, %cst_74 {dimension_numbers = #tpu.dot_dimension_numbers<[1], [0], [0], [1], [0, 0, 1, 1], [], []>} : vector<8x32xf32>, vector<32x512xf32>, vector<8x512xf32> -> vector<8x512xf32>
    %201 = arith.addf %199, %200 : vector<8x512xf32>
    %202 = vector.extract_strided_slice %201 {offsets = [0, 0], sizes = [8, 32], strides = [1, 1]} : vector<8x512xf32> to vector<8x32xf32>
    %cst_75 = arith.constant 5.000000e-01 : f32
    %203 = vector.broadcast %cst_75 : f32 to vector<8x32xf32>
    %204 = arith.mulf %203, %202 : vector<8x32xf32>
    %205 = math.tanh %204 : vector<8x32xf32>
    %cst_76 = arith.constant 5.000000e-01 : f32
    %206 = vector.broadcast %cst_76 : f32 to vector<8x32xf32>
    %207 = arith.mulf %206, %205 : vector<8x32xf32>
    %cst_77 = arith.constant 5.000000e-01 : f32
    %208 = vector.broadcast %cst_77 : f32 to vector<8x32xf32>
    %209 = arith.addf %207, %208 : vector<8x32xf32>
    %210 = vector.extract_strided_slice %201 {offsets = [0, 128], sizes = [8, 32], strides = [1, 1]} : vector<8x512xf32> to vector<8x32xf32>
    %cst_78 = arith.constant 5.000000e-01 : f32
    %211 = vector.broadcast %cst_78 : f32 to vector<8x32xf32>
    %212 = arith.mulf %211, %210 : vector<8x32xf32>
    %213 = math.tanh %212 : vector<8x32xf32>
    %cst_79 = arith.constant 5.000000e-01 : f32
    %214 = vector.broadcast %cst_79 : f32 to vector<8x32xf32>
    %215 = arith.mulf %214, %213 : vector<8x32xf32>
    %cst_80 = arith.constant 5.000000e-01 : f32
    %216 = vector.broadcast %cst_80 : f32 to vector<8x32xf32>
    %217 = arith.addf %215, %216 : vector<8x32xf32>
    %218 = vector.extract_strided_slice %201 {offsets = [0, 256], sizes = [8, 32], strides = [1, 1]} : vector<8x512xf32> to vector<8x32xf32>
    %219 = math.tanh %218 : vector<8x32xf32>
    %220 = vector.extract_strided_slice %201 {offsets = [0, 384], sizes = [8, 32], strides = [1, 1]} : vector<8x512xf32> to vector<8x32xf32>
    %cst_81 = arith.constant 5.000000e-01 : f32
    %221 = vector.broadcast %cst_81 : f32 to vector<8x32xf32>
    %222 = arith.mulf %221, %220 : vector<8x32xf32>
    %223 = math.tanh %222 : vector<8x32xf32>
    %cst_82 = arith.constant 5.000000e-01 : f32
    %224 = vector.broadcast %cst_82 : f32 to vector<8x32xf32>
    %225 = arith.mulf %224, %223 : vector<8x32xf32>
    %cst_83 = arith.constant 5.000000e-01 : f32
    %226 = vector.broadcast %cst_83 : f32 to vector<8x32xf32>
    %227 = arith.addf %225, %226 : vector<8x32xf32>
    %228 = arith.mulf %217, %193 : vector<8x32xf32>
    %229 = arith.mulf %209, %219 : vector<8x32xf32>
    %230 = arith.addf %228, %229 : vector<8x32xf32>
    %231 = math.tanh %230 : vector<8x32xf32>
    %232 = arith.mulf %227, %231 : vector<8x32xf32>
    %c6_i32 = arith.constant 6 : i32
    %c8_i32_84 = arith.constant 8 : i32
    %233 = arith.muli %c6_i32, %c8_i32_84 : i32
    %234 = tpu.assume_multiple %233, 8 : i32
    %235 = arith.index_cast %234 : i32 to index
    %c0_85 = arith.constant 0 : index
    %236 = vector.load %arg14[%235, %c0_85] : memref<64x512xf32, #tpu.memory_space<vmem>>, vector<8x512xf32>
    %cst_86 = arith.constant dense<0.000000e+00> : vector<8x512xf32>
    %237 = tpu.matmul %232, %0, %cst_86 {dimension_numbers = #tpu.dot_dimension_numbers<[1], [0], [0], [1], [0, 0, 1, 1], [], []>} : vector<8x32xf32>, vector<32x512xf32>, vector<8x512xf32> -> vector<8x512xf32>
    %238 = arith.addf %236, %237 : vector<8x512xf32>
    %239 = vector.extract_strided_slice %238 {offsets = [0, 0], sizes = [8, 32], strides = [1, 1]} : vector<8x512xf32> to vector<8x32xf32>
    %cst_87 = arith.constant 5.000000e-01 : f32
    %240 = vector.broadcast %cst_87 : f32 to vector<8x32xf32>
    %241 = arith.mulf %240, %239 : vector<8x32xf32>
    %242 = math.tanh %241 : vector<8x32xf32>
    %cst_88 = arith.constant 5.000000e-01 : f32
    %243 = vector.broadcast %cst_88 : f32 to vector<8x32xf32>
    %244 = arith.mulf %243, %242 : vector<8x32xf32>
    %cst_89 = arith.constant 5.000000e-01 : f32
    %245 = vector.broadcast %cst_89 : f32 to vector<8x32xf32>
    %246 = arith.addf %244, %245 : vector<8x32xf32>
    %247 = vector.extract_strided_slice %238 {offsets = [0, 128], sizes = [8, 32], strides = [1, 1]} : vector<8x512xf32> to vector<8x32xf32>
    %cst_90 = arith.constant 5.000000e-01 : f32
    %248 = vector.broadcast %cst_90 : f32 to vector<8x32xf32>
    %249 = arith.mulf %248, %247 : vector<8x32xf32>
    %250 = math.tanh %249 : vector<8x32xf32>
    %cst_91 = arith.constant 5.000000e-01 : f32
    %251 = vector.broadcast %cst_91 : f32 to vector<8x32xf32>
    %252 = arith.mulf %251, %250 : vector<8x32xf32>
    %cst_92 = arith.constant 5.000000e-01 : f32
    %253 = vector.broadcast %cst_92 : f32 to vector<8x32xf32>
    %254 = arith.addf %252, %253 : vector<8x32xf32>
    %255 = vector.extract_strided_slice %238 {offsets = [0, 256], sizes = [8, 32], strides = [1, 1]} : vector<8x512xf32> to vector<8x32xf32>
    %256 = math.tanh %255 : vector<8x32xf32>
    %257 = vector.extract_strided_slice %238 {offsets = [0, 384], sizes = [8, 32], strides = [1, 1]} : vector<8x512xf32> to vector<8x32xf32>
    %cst_93 = arith.constant 5.000000e-01 : f32
    %258 = vector.broadcast %cst_93 : f32 to vector<8x32xf32>
    %259 = arith.mulf %258, %257 : vector<8x32xf32>
    %260 = math.tanh %259 : vector<8x32xf32>
    %cst_94 = arith.constant 5.000000e-01 : f32
    %261 = vector.broadcast %cst_94 : f32 to vector<8x32xf32>
    %262 = arith.mulf %261, %260 : vector<8x32xf32>
    %cst_95 = arith.constant 5.000000e-01 : f32
    %263 = vector.broadcast %cst_95 : f32 to vector<8x32xf32>
    %264 = arith.addf %262, %263 : vector<8x32xf32>
    %265 = arith.mulf %254, %230 : vector<8x32xf32>
    %266 = arith.mulf %246, %256 : vector<8x32xf32>
    %267 = arith.addf %265, %266 : vector<8x32xf32>
    %268 = math.tanh %267 : vector<8x32xf32>
    %269 = arith.mulf %264, %268 : vector<8x32xf32>
    %c7_i32 = arith.constant 7 : i32
    %c8_i32_96 = arith.constant 8 : i32
    %270 = arith.muli %c7_i32, %c8_i32_96 : i32
    %271 = tpu.assume_multiple %270, 8 : i32
    %272 = arith.index_cast %271 : i32 to index
    %c0_97 = arith.constant 0 : index
    %273 = vector.load %arg14[%272, %c0_97] : memref<64x512xf32, #tpu.memory_space<vmem>>, vector<8x512xf32>
    %cst_98 = arith.constant dense<0.000000e+00> : vector<8x512xf32>
    %274 = tpu.matmul %269, %0, %cst_98 {dimension_numbers = #tpu.dot_dimension_numbers<[1], [0], [0], [1], [0, 0, 1, 1], [], []>} : vector<8x32xf32>, vector<32x512xf32>, vector<8x512xf32> -> vector<8x512xf32>
    %275 = arith.addf %273, %274 : vector<8x512xf32>
    %276 = vector.extract_strided_slice %275 {offsets = [0, 0], sizes = [8, 32], strides = [1, 1]} : vector<8x512xf32> to vector<8x32xf32>
    %cst_99 = arith.constant 5.000000e-01 : f32
    %277 = vector.broadcast %cst_99 : f32 to vector<8x32xf32>
    %278 = arith.mulf %277, %276 : vector<8x32xf32>
    %279 = math.tanh %278 : vector<8x32xf32>
    %cst_100 = arith.constant 5.000000e-01 : f32
    %280 = vector.broadcast %cst_100 : f32 to vector<8x32xf32>
    %281 = arith.mulf %280, %279 : vector<8x32xf32>
    %cst_101 = arith.constant 5.000000e-01 : f32
    %282 = vector.broadcast %cst_101 : f32 to vector<8x32xf32>
    %283 = arith.addf %281, %282 : vector<8x32xf32>
    %284 = vector.extract_strided_slice %275 {offsets = [0, 128], sizes = [8, 32], strides = [1, 1]} : vector<8x512xf32> to vector<8x32xf32>
    %cst_102 = arith.constant 5.000000e-01 : f32
    %285 = vector.broadcast %cst_102 : f32 to vector<8x32xf32>
    %286 = arith.mulf %285, %284 : vector<8x32xf32>
    %287 = math.tanh %286 : vector<8x32xf32>
    %cst_103 = arith.constant 5.000000e-01 : f32
    %288 = vector.broadcast %cst_103 : f32 to vector<8x32xf32>
    %289 = arith.mulf %288, %287 : vector<8x32xf32>
    %cst_104 = arith.constant 5.000000e-01 : f32
    %290 = vector.broadcast %cst_104 : f32 to vector<8x32xf32>
    %291 = arith.addf %289, %290 : vector<8x32xf32>
    %292 = vector.extract_strided_slice %275 {offsets = [0, 256], sizes = [8, 32], strides = [1, 1]} : vector<8x512xf32> to vector<8x32xf32>
    %293 = math.tanh %292 : vector<8x32xf32>
    %294 = vector.extract_strided_slice %275 {offsets = [0, 384], sizes = [8, 32], strides = [1, 1]} : vector<8x512xf32> to vector<8x32xf32>
    %cst_105 = arith.constant 5.000000e-01 : f32
    %295 = vector.broadcast %cst_105 : f32 to vector<8x32xf32>
    %296 = arith.mulf %295, %294 : vector<8x32xf32>
    %297 = math.tanh %296 : vector<8x32xf32>
    %cst_106 = arith.constant 5.000000e-01 : f32
    %298 = vector.broadcast %cst_106 : f32 to vector<8x32xf32>
    %299 = arith.mulf %298, %297 : vector<8x32xf32>
    %cst_107 = arith.constant 5.000000e-01 : f32
    %300 = vector.broadcast %cst_107 : f32 to vector<8x32xf32>
    %301 = arith.addf %299, %300 : vector<8x32xf32>
    %302 = arith.mulf %291, %267 : vector<8x32xf32>
    %303 = arith.mulf %283, %293 : vector<8x32xf32>
    %304 = arith.addf %302, %303 : vector<8x32xf32>
    %305 = math.tanh %304 : vector<8x32xf32>
    %306 = arith.mulf %301, %305 : vector<8x32xf32>
    %c8_i32_108 = arith.constant 8 : i32
    %c0_109 = arith.constant 0 : index
    %c0_110 = arith.constant 0 : index
    %307 = vector.load %arg13[%c0_109, %c0_110] : memref<8x32xf32, #tpu.memory_space<vmem>>, vector<8x32xf32>
    tpu.vector_store %arg13[%c0_109, %c0_110], %306 {strides = array<i32>} : memref<8x32xf32, #tpu.memory_space<vmem>>, vector<8x32xf32>,
    %c0_111 = arith.constant 0 : index
    %c0_112 = arith.constant 0 : index
    %308 = vector.load %arg5[%c0_111, %c0_112] : memref<32x512xf32, #tpu.memory_space<vmem>>, vector<32x512xf32>
    %cst_113 = arith.constant dense<0.000000e+00> : vector<8x512xf32>
    %309 = tpu.matmul %306, %308, %cst_113 {dimension_numbers = #tpu.dot_dimension_numbers<[1], [0], [0], [1], [0, 0, 1, 1], [], []>} : vector<8x32xf32>, vector<32x512xf32>, vector<8x512xf32> -> vector<8x512xf32>
    %c0_114 = arith.constant 0 : index
    %c0_115 = arith.constant 0 : index
    %310 = vector.load %arg7[%c0_114, %c0_115] : memref<1x512xf32, #tpu.memory_space<vmem>>, vector<1x512xf32>
    %311 = vector.broadcast %310 : vector<1x512xf32> to vector<8x512xf32>
    %312 = arith.addf %309, %311 : vector<8x512xf32>
    %c0_i32_116 = arith.constant 0 : i32
    %cst_117 = arith.constant dense<0.000000e+00> : vector<8x512xf32>
    %313 = tpu.matmul %10, %1, %cst_117 {dimension_numbers = #tpu.dot_dimension_numbers<[1], [0], [0], [1], [0, 0, 1, 1], [], []>} : vector<8x32xf32>, vector<32x512xf32>, vector<8x512xf32> -> vector<8x512xf32>
    %314 = arith.addf %312, %313 : vector<8x512xf32>
    %315 = vector.extract_strided_slice %314 {offsets = [0, 0], sizes = [8, 32], strides = [1, 1]} : vector<8x512xf32> to vector<8x32xf32>
    %cst_118 = arith.constant 5.000000e-01 : f32
    %316 = vector.broadcast %cst_118 : f32 to vector<8x32xf32>
    %317 = arith.mulf %316, %315 : vector<8x32xf32>
    %318 = math.tanh %317 : vector<8x32xf32>
    %cst_119 = arith.constant 5.000000e-01 : f32
    %319 = vector.broadcast %cst_119 : f32 to vector<8x32xf32>
    %320 = arith.mulf %319, %318 : vector<8x32xf32>
    %cst_120 = arith.constant 5.000000e-01 : f32
    %321 = vector.broadcast %cst_120 : f32 to vector<8x32xf32>
    %322 = arith.addf %320, %321 : vector<8x32xf32>
    %323 = vector.extract_strided_slice %314 {offsets = [0, 128], sizes = [8, 32], strides = [1, 1]} : vector<8x512xf32> to vector<8x32xf32>
    %cst_121 = arith.constant 5.000000e-01 : f32
    %324 = vector.broadcast %cst_121 : f32 to vector<8x32xf32>
    %325 = arith.mulf %324, %323 : vector<8x32xf32>
    %326 = math.tanh %325 : vector<8x32xf32>
    %cst_122 = arith.constant 5.000000e-01 : f32
    %327 = vector.broadcast %cst_122 : f32 to vector<8x32xf32>
    %328 = arith.mulf %327, %326 : vector<8x32xf32>
    %cst_123 = arith.constant 5.000000e-01 : f32
    %329 = vector.broadcast %cst_123 : f32 to vector<8x32xf32>
    %330 = arith.addf %328, %329 : vector<8x32xf32>
    %331 = vector.extract_strided_slice %314 {offsets = [0, 256], sizes = [8, 32], strides = [1, 1]} : vector<8x512xf32> to vector<8x32xf32>
    %332 = math.tanh %331 : vector<8x32xf32>
    %333 = vector.extract_strided_slice %314 {offsets = [0, 384], sizes = [8, 32], strides = [1, 1]} : vector<8x512xf32> to vector<8x32xf32>
    %cst_124 = arith.constant 5.000000e-01 : f32
    %334 = vector.broadcast %cst_124 : f32 to vector<8x32xf32>
    %335 = arith.mulf %334, %333 : vector<8x32xf32>
    %336 = math.tanh %335 : vector<8x32xf32>
    %cst_125 = arith.constant 5.000000e-01 : f32
    %337 = vector.broadcast %cst_125 : f32 to vector<8x32xf32>
    %338 = arith.mulf %337, %336 : vector<8x32xf32>
    %cst_126 = arith.constant 5.000000e-01 : f32
    %339 = vector.broadcast %cst_126 : f32 to vector<8x32xf32>
    %340 = arith.addf %338, %339 : vector<8x32xf32>
    %341 = arith.mulf %330, %10 : vector<8x32xf32>
    %342 = arith.mulf %322, %332 : vector<8x32xf32>
    %343 = arith.addf %341, %342 : vector<8x32xf32>
    %344 = math.tanh %343 : vector<8x32xf32>
    %345 = arith.mulf %340, %344 : vector<8x32xf32>
    %c8_i32_127 = arith.constant 8 : i32
    %346 = arith.muli %c0_i32_116, %c8_i32_127 : i32
    %347 = tpu.assume_multiple %346, 8 : i32
    %348 = arith.index_cast %347 : i32 to index
    %c0_128 = arith.constant 0 : index
    %349 = vector.load %arg15[%348, %c0_128] : memref<64x32xf32, #tpu.memory_space<vmem>>, vector<8x32xf32>
    tpu.vector_store %arg15[%348, %c0_128], %345 {strides = array<i32>} : memref<64x32xf32, #tpu.memory_space<vmem>>, vector<8x32xf32>,
    %c1_i32_129 = arith.constant 1 : i32
    %cst_130 = arith.constant dense<0.000000e+00> : vector<8x512xf32>
    %350 = tpu.matmul %345, %1, %cst_130 {dimension_numbers = #tpu.dot_dimension_numbers<[1], [0], [0], [1], [0, 0, 1, 1], [], []>} : vector<8x32xf32>, vector<32x512xf32>, vector<8x512xf32> -> vector<8x512xf32>
    %351 = arith.addf %312, %350 : vector<8x512xf32>
    %352 = vector.extract_strided_slice %351 {offsets = [0, 0], sizes = [8, 32], strides = [1, 1]} : vector<8x512xf32> to vector<8x32xf32>
    %cst_131 = arith.constant 5.000000e-01 : f32
    %353 = vector.broadcast %cst_131 : f32 to vector<8x32xf32>
    %354 = arith.mulf %353, %352 : vector<8x32xf32>
    %355 = math.tanh %354 : vector<8x32xf32>
    %cst_132 = arith.constant 5.000000e-01 : f32
    %356 = vector.broadcast %cst_132 : f32 to vector<8x32xf32>
    %357 = arith.mulf %356, %355 : vector<8x32xf32>
    %cst_133 = arith.constant 5.000000e-01 : f32
    %358 = vector.broadcast %cst_133 : f32 to vector<8x32xf32>
    %359 = arith.addf %357, %358 : vector<8x32xf32>
    %360 = vector.extract_strided_slice %351 {offsets = [0, 128], sizes = [8, 32], strides = [1, 1]} : vector<8x512xf32> to vector<8x32xf32>
    %cst_134 = arith.constant 5.000000e-01 : f32
    %361 = vector.broadcast %cst_134 : f32 to vector<8x32xf32>
    %362 = arith.mulf %361, %360 : vector<8x32xf32>
    %363 = math.tanh %362 : vector<8x32xf32>
    %cst_135 = arith.constant 5.000000e-01 : f32
    %364 = vector.broadcast %cst_135 : f32 to vector<8x32xf32>
    %365 = arith.mulf %364, %363 : vector<8x32xf32>
    %cst_136 = arith.constant 5.000000e-01 : f32
    %366 = vector.broadcast %cst_136 : f32 to vector<8x32xf32>
    %367 = arith.addf %365, %366 : vector<8x32xf32>
    %368 = vector.extract_strided_slice %351 {offsets = [0, 256], sizes = [8, 32], strides = [1, 1]} : vector<8x512xf32> to vector<8x32xf32>
    %369 = math.tanh %368 : vector<8x32xf32>
    %370 = vector.extract_strided_slice %351 {offsets = [0, 384], sizes = [8, 32], strides = [1, 1]} : vector<8x512xf32> to vector<8x32xf32>
    %cst_137 = arith.constant 5.000000e-01 : f32
    %371 = vector.broadcast %cst_137 : f32 to vector<8x32xf32>
    %372 = arith.mulf %371, %370 : vector<8x32xf32>
    %373 = math.tanh %372 : vector<8x32xf32>
    %cst_138 = arith.constant 5.000000e-01 : f32
    %374 = vector.broadcast %cst_138 : f32 to vector<8x32xf32>
    %375 = arith.mulf %374, %373 : vector<8x32xf32>
    %cst_139 = arith.constant 5.000000e-01 : f32
    %376 = vector.broadcast %cst_139 : f32 to vector<8x32xf32>
    %377 = arith.addf %375, %376 : vector<8x32xf32>
    %378 = arith.mulf %367, %343 : vector<8x32xf32>
    %379 = arith.mulf %359, %369 : vector<8x32xf32>
    %380 = arith.addf %378, %379 : vector<8x32xf32>
    %381 = math.tanh %380 : vector<8x32xf32>
    %382 = arith.mulf %377, %381 : vector<8x32xf32>
    %c8_i32_140 = arith.constant 8 : i32
    %383 = arith.muli %c1_i32_129, %c8_i32_140 : i32
    %384 = tpu.assume_multiple %383, 8 : i32
    %385 = arith.index_cast %384 : i32 to index
    %c0_141 = arith.constant 0 : index
    %386 = vector.load %arg15[%385, %c0_141] : memref<64x32xf32, #tpu.memory_space<vmem>>, vector<8x32xf32>
    tpu.vector_store %arg15[%385, %c0_141], %382 {strides = array<i32>} : memref<64x32xf32, #tpu.memory_space<vmem>>, vector<8x32xf32>,
    %c2_i32_142 = arith.constant 2 : i32
    %cst_143 = arith.constant dense<0.000000e+00> : vector<8x512xf32>
    %387 = tpu.matmul %382, %1, %cst_143 {dimension_numbers = #tpu.dot_dimension_numbers<[1], [0], [0], [1], [0, 0, 1, 1], [], []>} : vector<8x32xf32>, vector<32x512xf32>, vector<8x512xf32> -> vector<8x512xf32>
    %388 = arith.addf %312, %387 : vector<8x512xf32>
    %389 = vector.extract_strided_slice %388 {offsets = [0, 0], sizes = [8, 32], strides = [1, 1]} : vector<8x512xf32> to vector<8x32xf32>
    %cst_144 = arith.constant 5.000000e-01 : f32
    %390 = vector.broadcast %cst_144 : f32 to vector<8x32xf32>
    %391 = arith.mulf %390, %389 : vector<8x32xf32>
    %392 = math.tanh %391 : vector<8x32xf32>
    %cst_145 = arith.constant 5.000000e-01 : f32
    %393 = vector.broadcast %cst_145 : f32 to vector<8x32xf32>
    %394 = arith.mulf %393, %392 : vector<8x32xf32>
    %cst_146 = arith.constant 5.000000e-01 : f32
    %395 = vector.broadcast %cst_146 : f32 to vector<8x32xf32>
    %396 = arith.addf %394, %395 : vector<8x32xf32>
    %397 = vector.extract_strided_slice %388 {offsets = [0, 128], sizes = [8, 32], strides = [1, 1]} : vector<8x512xf32> to vector<8x32xf32>
    %cst_147 = arith.constant 5.000000e-01 : f32
    %398 = vector.broadcast %cst_147 : f32 to vector<8x32xf32>
    %399 = arith.mulf %398, %397 : vector<8x32xf32>
    %400 = math.tanh %399 : vector<8x32xf32>
    %cst_148 = arith.constant 5.000000e-01 : f32
    %401 = vector.broadcast %cst_148 : f32 to vector<8x32xf32>
    %402 = arith.mulf %401, %400 : vector<8x32xf32>
    %cst_149 = arith.constant 5.000000e-01 : f32
    %403 = vector.broadcast %cst_149 : f32 to vector<8x32xf32>
    %404 = arith.addf %402, %403 : vector<8x32xf32>
    %405 = vector.extract_strided_slice %388 {offsets = [0, 256], sizes = [8, 32], strides = [1, 1]} : vector<8x512xf32> to vector<8x32xf32>
    %406 = math.tanh %405 : vector<8x32xf32>
    %407 = vector.extract_strided_slice %388 {offsets = [0, 384], sizes = [8, 32], strides = [1, 1]} : vector<8x512xf32> to vector<8x32xf32>
    %cst_150 = arith.constant 5.000000e-01 : f32
    %408 = vector.broadcast %cst_150 : f32 to vector<8x32xf32>
    %409 = arith.mulf %408, %407 : vector<8x32xf32>
    %410 = math.tanh %409 : vector<8x32xf32>
    %cst_151 = arith.constant 5.000000e-01 : f32
    %411 = vector.broadcast %cst_151 : f32 to vector<8x32xf32>
    %412 = arith.mulf %411, %410 : vector<8x32xf32>
    %cst_152 = arith.constant 5.000000e-01 : f32
    %413 = vector.broadcast %cst_152 : f32 to vector<8x32xf32>
    %414 = arith.addf %412, %413 : vector<8x32xf32>
    %415 = arith.mulf %404, %380 : vector<8x32xf32>
    %416 = arith.mulf %396, %406 : vector<8x32xf32>
    %417 = arith.addf %415, %416 : vector<8x32xf32>
    %418 = math.tanh %417 : vector<8x32xf32>
    %419 = arith.mulf %414, %418 : vector<8x32xf32>
    %c8_i32_153 = arith.constant 8 : i32
    %420 = arith.muli %c2_i32_142, %c8_i32_153 : i32
    %421 = tpu.assume_multiple %420, 8 : i32
    %422 = arith.index_cast %421 : i32 to index
    %c0_154 = arith.constant 0 : index
    %423 = vector.load %arg15[%422, %c0_154] : memref<64x32xf32, #tpu.memory_space<vmem>>, vector<8x32xf32>
    tpu.vector_store %arg15[%422, %c0_154], %419 {strides = array<i32>} : memref<64x32xf32, #tpu.memory_space<vmem>>, vector<8x32xf32>,
    %c3_i32_155 = arith.constant 3 : i32
    %cst_156 = arith.constant dense<0.000000e+00> : vector<8x512xf32>
    %424 = tpu.matmul %419, %1, %cst_156 {dimension_numbers = #tpu.dot_dimension_numbers<[1], [0], [0], [1], [0, 0, 1, 1], [], []>} : vector<8x32xf32>, vector<32x512xf32>, vector<8x512xf32> -> vector<8x512xf32>
    %425 = arith.addf %312, %424 : vector<8x512xf32>
    %426 = vector.extract_strided_slice %425 {offsets = [0, 0], sizes = [8, 32], strides = [1, 1]} : vector<8x512xf32> to vector<8x32xf32>
    %cst_157 = arith.constant 5.000000e-01 : f32
    %427 = vector.broadcast %cst_157 : f32 to vector<8x32xf32>
    %428 = arith.mulf %427, %426 : vector<8x32xf32>
    %429 = math.tanh %428 : vector<8x32xf32>
    %cst_158 = arith.constant 5.000000e-01 : f32
    %430 = vector.broadcast %cst_158 : f32 to vector<8x32xf32>
    %431 = arith.mulf %430, %429 : vector<8x32xf32>
    %cst_159 = arith.constant 5.000000e-01 : f32
    %432 = vector.broadcast %cst_159 : f32 to vector<8x32xf32>
    %433 = arith.addf %431, %432 : vector<8x32xf32>
    %434 = vector.extract_strided_slice %425 {offsets = [0, 128], sizes = [8, 32], strides = [1, 1]} : vector<8x512xf32> to vector<8x32xf32>
    %cst_160 = arith.constant 5.000000e-01 : f32
    %435 = vector.broadcast %cst_160 : f32 to vector<8x32xf32>
    %436 = arith.mulf %435, %434 : vector<8x32xf32>
    %437 = math.tanh %436 : vector<8x32xf32>
    %cst_161 = arith.constant 5.000000e-01 : f32
    %438 = vector.broadcast %cst_161 : f32 to vector<8x32xf32>
    %439 = arith.mulf %438, %437 : vector<8x32xf32>
    %cst_162 = arith.constant 5.000000e-01 : f32
    %440 = vector.broadcast %cst_162 : f32 to vector<8x32xf32>
    %441 = arith.addf %439, %440 : vector<8x32xf32>
    %442 = vector.extract_strided_slice %425 {offsets = [0, 256], sizes = [8, 32], strides = [1, 1]} : vector<8x512xf32> to vector<8x32xf32>
    %443 = math.tanh %442 : vector<8x32xf32>
    %444 = vector.extract_strided_slice %425 {offsets = [0, 384], sizes = [8, 32], strides = [1, 1]} : vector<8x512xf32> to vector<8x32xf32>
    %cst_163 = arith.constant 5.000000e-01 : f32
    %445 = vector.broadcast %cst_163 : f32 to vector<8x32xf32>
    %446 = arith.mulf %445, %444 : vector<8x32xf32>
    %447 = math.tanh %446 : vector<8x32xf32>
    %cst_164 = arith.constant 5.000000e-01 : f32
    %448 = vector.broadcast %cst_164 : f32 to vector<8x32xf32>
    %449 = arith.mulf %448, %447 : vector<8x32xf32>
    %cst_165 = arith.constant 5.000000e-01 : f32
    %450 = vector.broadcast %cst_165 : f32 to vector<8x32xf32>
    %451 = arith.addf %449, %450 : vector<8x32xf32>
    %452 = arith.mulf %441, %417 : vector<8x32xf32>
    %453 = arith.mulf %433, %443 : vector<8x32xf32>
    %454 = arith.addf %452, %453 : vector<8x32xf32>
    %455 = math.tanh %454 : vector<8x32xf32>
    %456 = arith.mulf %451, %455 : vector<8x32xf32>
    %c8_i32_166 = arith.constant 8 : i32
    %457 = arith.muli %c3_i32_155, %c8_i32_166 : i32
    %458 = tpu.assume_multiple %457, 8 : i32
    %459 = arith.index_cast %458 : i32 to index
    %c0_167 = arith.constant 0 : index
    %460 = vector.load %arg15[%459, %c0_167] : memref<64x32xf32, #tpu.memory_space<vmem>>, vector<8x32xf32>
    tpu.vector_store %arg15[%459, %c0_167], %456 {strides = array<i32>} : memref<64x32xf32, #tpu.memory_space<vmem>>, vector<8x32xf32>,
    %c4_i32_168 = arith.constant 4 : i32
    %cst_169 = arith.constant dense<0.000000e+00> : vector<8x512xf32>
    %461 = tpu.matmul %456, %1, %cst_169 {dimension_numbers = #tpu.dot_dimension_numbers<[1], [0], [0], [1], [0, 0, 1, 1], [], []>} : vector<8x32xf32>, vector<32x512xf32>, vector<8x512xf32> -> vector<8x512xf32>
    %462 = arith.addf %312, %461 : vector<8x512xf32>
    %463 = vector.extract_strided_slice %462 {offsets = [0, 0], sizes = [8, 32], strides = [1, 1]} : vector<8x512xf32> to vector<8x32xf32>
    %cst_170 = arith.constant 5.000000e-01 : f32
    %464 = vector.broadcast %cst_170 : f32 to vector<8x32xf32>
    %465 = arith.mulf %464, %463 : vector<8x32xf32>
    %466 = math.tanh %465 : vector<8x32xf32>
    %cst_171 = arith.constant 5.000000e-01 : f32
    %467 = vector.broadcast %cst_171 : f32 to vector<8x32xf32>
    %468 = arith.mulf %467, %466 : vector<8x32xf32>
    %cst_172 = arith.constant 5.000000e-01 : f32
    %469 = vector.broadcast %cst_172 : f32 to vector<8x32xf32>
    %470 = arith.addf %468, %469 : vector<8x32xf32>
    %471 = vector.extract_strided_slice %462 {offsets = [0, 128], sizes = [8, 32], strides = [1, 1]} : vector<8x512xf32> to vector<8x32xf32>
    %cst_173 = arith.constant 5.000000e-01 : f32
    %472 = vector.broadcast %cst_173 : f32 to vector<8x32xf32>
    %473 = arith.mulf %472, %471 : vector<8x32xf32>
    %474 = math.tanh %473 : vector<8x32xf32>
    %cst_174 = arith.constant 5.000000e-01 : f32
    %475 = vector.broadcast %cst_174 : f32 to vector<8x32xf32>
    %476 = arith.mulf %475, %474 : vector<8x32xf32>
    %cst_175 = arith.constant 5.000000e-01 : f32
    %477 = vector.broadcast %cst_175 : f32 to vector<8x32xf32>
    %478 = arith.addf %476, %477 : vector<8x32xf32>
    %479 = vector.extract_strided_slice %462 {offsets = [0, 256], sizes = [8, 32], strides = [1, 1]} : vector<8x512xf32> to vector<8x32xf32>
    %480 = math.tanh %479 : vector<8x32xf32>
    %481 = vector.extract_strided_slice %462 {offsets = [0, 384], sizes = [8, 32], strides = [1, 1]} : vector<8x512xf32> to vector<8x32xf32>
    %cst_176 = arith.constant 5.000000e-01 : f32
    %482 = vector.broadcast %cst_176 : f32 to vector<8x32xf32>
    %483 = arith.mulf %482, %481 : vector<8x32xf32>
    %484 = math.tanh %483 : vector<8x32xf32>
    %cst_177 = arith.constant 5.000000e-01 : f32
    %485 = vector.broadcast %cst_177 : f32 to vector<8x32xf32>
    %486 = arith.mulf %485, %484 : vector<8x32xf32>
    %cst_178 = arith.constant 5.000000e-01 : f32
    %487 = vector.broadcast %cst_178 : f32 to vector<8x32xf32>
    %488 = arith.addf %486, %487 : vector<8x32xf32>
    %489 = arith.mulf %478, %454 : vector<8x32xf32>
    %490 = arith.mulf %470, %480 : vector<8x32xf32>
    %491 = arith.addf %489, %490 : vector<8x32xf32>
    %492 = math.tanh %491 : vector<8x32xf32>
    %493 = arith.mulf %488, %492 : vector<8x32xf32>
    %c8_i32_179 = arith.constant 8 : i32
    %494 = arith.muli %c4_i32_168, %c8_i32_179 : i32
    %495 = tpu.assume_multiple %494, 8 : i32
    %496 = arith.index_cast %495 : i32 to index
    %c0_180 = arith.constant 0 : index
    %497 = vector.load %arg15[%496, %c0_180] : memref<64x32xf32, #tpu.memory_space<vmem>>, vector<8x32xf32>
    tpu.vector_store %arg15[%496, %c0_180], %493 {strides = array<i32>} : memref<64x32xf32, #tpu.memory_space<vmem>>, vector<8x32xf32>,
    %c5_i32_181 = arith.constant 5 : i32
    %cst_182 = arith.constant dense<0.000000e+00> : vector<8x512xf32>
    %498 = tpu.matmul %493, %1, %cst_182 {dimension_numbers = #tpu.dot_dimension_numbers<[1], [0], [0], [1], [0, 0, 1, 1], [], []>} : vector<8x32xf32>, vector<32x512xf32>, vector<8x512xf32> -> vector<8x512xf32>
    %499 = arith.addf %312, %498 : vector<8x512xf32>
    %500 = vector.extract_strided_slice %499 {offsets = [0, 0], sizes = [8, 32], strides = [1, 1]} : vector<8x512xf32> to vector<8x32xf32>
    %cst_183 = arith.constant 5.000000e-01 : f32
    %501 = vector.broadcast %cst_183 : f32 to vector<8x32xf32>
    %502 = arith.mulf %501, %500 : vector<8x32xf32>
    %503 = math.tanh %502 : vector<8x32xf32>
    %cst_184 = arith.constant 5.000000e-01 : f32
    %504 = vector.broadcast %cst_184 : f32 to vector<8x32xf32>
    %505 = arith.mulf %504, %503 : vector<8x32xf32>
    %cst_185 = arith.constant 5.000000e-01 : f32
    %506 = vector.broadcast %cst_185 : f32 to vector<8x32xf32>
    %507 = arith.addf %505, %506 : vector<8x32xf32>
    %508 = vector.extract_strided_slice %499 {offsets = [0, 128], sizes = [8, 32], strides = [1, 1]} : vector<8x512xf32> to vector<8x32xf32>
    %cst_186 = arith.constant 5.000000e-01 : f32
    %509 = vector.broadcast %cst_186 : f32 to vector<8x32xf32>
    %510 = arith.mulf %509, %508 : vector<8x32xf32>
    %511 = math.tanh %510 : vector<8x32xf32>
    %cst_187 = arith.constant 5.000000e-01 : f32
    %512 = vector.broadcast %cst_187 : f32 to vector<8x32xf32>
    %513 = arith.mulf %512, %511 : vector<8x32xf32>
    %cst_188 = arith.constant 5.000000e-01 : f32
    %514 = vector.broadcast %cst_188 : f32 to vector<8x32xf32>
    %515 = arith.addf %513, %514 : vector<8x32xf32>
    %516 = vector.extract_strided_slice %499 {offsets = [0, 256], sizes = [8, 32], strides = [1, 1]} : vector<8x512xf32> to vector<8x32xf32>
    %517 = math.tanh %516 : vector<8x32xf32>
    %518 = vector.extract_strided_slice %499 {offsets = [0, 384], sizes = [8, 32], strides = [1, 1]} : vector<8x512xf32> to vector<8x32xf32>
    %cst_189 = arith.constant 5.000000e-01 : f32
    %519 = vector.broadcast %cst_189 : f32 to vector<8x32xf32>
    %520 = arith.mulf %519, %518 : vector<8x32xf32>
    %521 = math.tanh %520 : vector<8x32xf32>
    %cst_190 = arith.constant 5.000000e-01 : f32
    %522 = vector.broadcast %cst_190 : f32 to vector<8x32xf32>
    %523 = arith.mulf %522, %521 : vector<8x32xf32>
    %cst_191 = arith.constant 5.000000e-01 : f32
    %524 = vector.broadcast %cst_191 : f32 to vector<8x32xf32>
    %525 = arith.addf %523, %524 : vector<8x32xf32>
    %526 = arith.mulf %515, %491 : vector<8x32xf32>
    %527 = arith.mulf %507, %517 : vector<8x32xf32>
    %528 = arith.addf %526, %527 : vector<8x32xf32>
    %529 = math.tanh %528 : vector<8x32xf32>
    %530 = arith.mulf %525, %529 : vector<8x32xf32>
    %c8_i32_192 = arith.constant 8 : i32
    %531 = arith.muli %c5_i32_181, %c8_i32_192 : i32
    %532 = tpu.assume_multiple %531, 8 : i32
    %533 = arith.index_cast %532 : i32 to index
    %c0_193 = arith.constant 0 : index
    %534 = vector.load %arg15[%533, %c0_193] : memref<64x32xf32, #tpu.memory_space<vmem>>, vector<8x32xf32>
    tpu.vector_store %arg15[%533, %c0_193], %530 {strides = array<i32>} : memref<64x32xf32, #tpu.memory_space<vmem>>, vector<8x32xf32>,
    %c6_i32_194 = arith.constant 6 : i32
    %cst_195 = arith.constant dense<0.000000e+00> : vector<8x512xf32>
    %535 = tpu.matmul %530, %1, %cst_195 {dimension_numbers = #tpu.dot_dimension_numbers<[1], [0], [0], [1], [0, 0, 1, 1], [], []>} : vector<8x32xf32>, vector<32x512xf32>, vector<8x512xf32> -> vector<8x512xf32>
    %536 = arith.addf %312, %535 : vector<8x512xf32>
    %537 = vector.extract_strided_slice %536 {offsets = [0, 0], sizes = [8, 32], strides = [1, 1]} : vector<8x512xf32> to vector<8x32xf32>
    %cst_196 = arith.constant 5.000000e-01 : f32
    %538 = vector.broadcast %cst_196 : f32 to vector<8x32xf32>
    %539 = arith.mulf %538, %537 : vector<8x32xf32>
    %540 = math.tanh %539 : vector<8x32xf32>
    %cst_197 = arith.constant 5.000000e-01 : f32
    %541 = vector.broadcast %cst_197 : f32 to vector<8x32xf32>
    %542 = arith.mulf %541, %540 : vector<8x32xf32>
    %cst_198 = arith.constant 5.000000e-01 : f32
    %543 = vector.broadcast %cst_198 : f32 to vector<8x32xf32>
    %544 = arith.addf %542, %543 : vector<8x32xf32>
    %545 = vector.extract_strided_slice %536 {offsets = [0, 128], sizes = [8, 32], strides = [1, 1]} : vector<8x512xf32> to vector<8x32xf32>
    %cst_199 = arith.constant 5.000000e-01 : f32
    %546 = vector.broadcast %cst_199 : f32 to vector<8x32xf32>
    %547 = arith.mulf %546, %545 : vector<8x32xf32>
    %548 = math.tanh %547 : vector<8x32xf32>
    %cst_200 = arith.constant 5.000000e-01 : f32
    %549 = vector.broadcast %cst_200 : f32 to vector<8x32xf32>
    %550 = arith.mulf %549, %548 : vector<8x32xf32>
    %cst_201 = arith.constant 5.000000e-01 : f32
    %551 = vector.broadcast %cst_201 : f32 to vector<8x32xf32>
    %552 = arith.addf %550, %551 : vector<8x32xf32>
    %553 = vector.extract_strided_slice %536 {offsets = [0, 256], sizes = [8, 32], strides = [1, 1]} : vector<8x512xf32> to vector<8x32xf32>
    %554 = math.tanh %553 : vector<8x32xf32>
    %555 = vector.extract_strided_slice %536 {offsets = [0, 384], sizes = [8, 32], strides = [1, 1]} : vector<8x512xf32> to vector<8x32xf32>
    %cst_202 = arith.constant 5.000000e-01 : f32
    %556 = vector.broadcast %cst_202 : f32 to vector<8x32xf32>
    %557 = arith.mulf %556, %555 : vector<8x32xf32>
    %558 = math.tanh %557 : vector<8x32xf32>
    %cst_203 = arith.constant 5.000000e-01 : f32
    %559 = vector.broadcast %cst_203 : f32 to vector<8x32xf32>
    %560 = arith.mulf %559, %558 : vector<8x32xf32>
    %cst_204 = arith.constant 5.000000e-01 : f32
    %561 = vector.broadcast %cst_204 : f32 to vector<8x32xf32>
    %562 = arith.addf %560, %561 : vector<8x32xf32>
    %563 = arith.mulf %552, %528 : vector<8x32xf32>
    %564 = arith.mulf %544, %554 : vector<8x32xf32>
    %565 = arith.addf %563, %564 : vector<8x32xf32>
    %566 = math.tanh %565 : vector<8x32xf32>
    %567 = arith.mulf %562, %566 : vector<8x32xf32>
    %c8_i32_205 = arith.constant 8 : i32
    %568 = arith.muli %c6_i32_194, %c8_i32_205 : i32
    %569 = tpu.assume_multiple %568, 8 : i32
    %570 = arith.index_cast %569 : i32 to index
    %c0_206 = arith.constant 0 : index
    %571 = vector.load %arg15[%570, %c0_206] : memref<64x32xf32, #tpu.memory_space<vmem>>, vector<8x32xf32>
    tpu.vector_store %arg15[%570, %c0_206], %567 {strides = array<i32>} : memref<64x32xf32, #tpu.memory_space<vmem>>, vector<8x32xf32>,
    %c7_i32_207 = arith.constant 7 : i32
    %cst_208 = arith.constant dense<0.000000e+00> : vector<8x512xf32>
    %572 = tpu.matmul %567, %1, %cst_208 {dimension_numbers = #tpu.dot_dimension_numbers<[1], [0], [0], [1], [0, 0, 1, 1], [], []>} : vector<8x32xf32>, vector<32x512xf32>, vector<8x512xf32> -> vector<8x512xf32>
    %573 = arith.addf %312, %572 : vector<8x512xf32>
    %574 = vector.extract_strided_slice %573 {offsets = [0, 0], sizes = [8, 32], strides = [1, 1]} : vector<8x512xf32> to vector<8x32xf32>
    %cst_209 = arith.constant 5.000000e-01 : f32
    %575 = vector.broadcast %cst_209 : f32 to vector<8x32xf32>
    %576 = arith.mulf %575, %574 : vector<8x32xf32>
    %577 = math.tanh %576 : vector<8x32xf32>
    %cst_210 = arith.constant 5.000000e-01 : f32
    %578 = vector.broadcast %cst_210 : f32 to vector<8x32xf32>
    %579 = arith.mulf %578, %577 : vector<8x32xf32>
    %cst_211 = arith.constant 5.000000e-01 : f32
    %580 = vector.broadcast %cst_211 : f32 to vector<8x32xf32>
    %581 = arith.addf %579, %580 : vector<8x32xf32>
    %582 = vector.extract_strided_slice %573 {offsets = [0, 128], sizes = [8, 32], strides = [1, 1]} : vector<8x512xf32> to vector<8x32xf32>
    %cst_212 = arith.constant 5.000000e-01 : f32
    %583 = vector.broadcast %cst_212 : f32 to vector<8x32xf32>
    %584 = arith.mulf %583, %582 : vector<8x32xf32>
    %585 = math.tanh %584 : vector<8x32xf32>
    %cst_213 = arith.constant 5.000000e-01 : f32
    %586 = vector.broadcast %cst_213 : f32 to vector<8x32xf32>
    %587 = arith.mulf %586, %585 : vector<8x32xf32>
    %cst_214 = arith.constant 5.000000e-01 : f32
    %588 = vector.broadcast %cst_214 : f32 to vector<8x32xf32>
    %589 = arith.addf %587, %588 : vector<8x32xf32>
    %590 = vector.extract_strided_slice %573 {offsets = [0, 256], sizes = [8, 32], strides = [1, 1]} : vector<8x512xf32> to vector<8x32xf32>
    %591 = math.tanh %590 : vector<8x32xf32>
    %592 = vector.extract_strided_slice %573 {offsets = [0, 384], sizes = [8, 32], strides = [1, 1]} : vector<8x512xf32> to vector<8x32xf32>
    %cst_215 = arith.constant 5.000000e-01 : f32
    %593 = vector.broadcast %cst_215 : f32 to vector<8x32xf32>
    %594 = arith.mulf %593, %592 : vector<8x32xf32>
    %595 = math.tanh %594 : vector<8x32xf32>
    %cst_216 = arith.constant 5.000000e-01 : f32
    %596 = vector.broadcast %cst_216 : f32 to vector<8x32xf32>
    %597 = arith.mulf %596, %595 : vector<8x32xf32>
    %cst_217 = arith.constant 5.000000e-01 : f32
    %598 = vector.broadcast %cst_217 : f32 to vector<8x32xf32>
    %599 = arith.addf %597, %598 : vector<8x32xf32>
    %600 = arith.mulf %589, %565 : vector<8x32xf32>
    %601 = arith.mulf %581, %591 : vector<8x32xf32>
    %602 = arith.addf %600, %601 : vector<8x32xf32>
    %603 = math.tanh %602 : vector<8x32xf32>
    %604 = arith.mulf %599, %603 : vector<8x32xf32>
    %c8_i32_218 = arith.constant 8 : i32
    %605 = arith.muli %c7_i32_207, %c8_i32_218 : i32
    %606 = tpu.assume_multiple %605, 8 : i32
    %607 = arith.index_cast %606 : i32 to index
    %c0_219 = arith.constant 0 : index
    %608 = vector.load %arg15[%607, %c0_219] : memref<64x32xf32, #tpu.memory_space<vmem>>, vector<8x32xf32>
    tpu.vector_store %arg15[%607, %c0_219], %604 {strides = array<i32>} : memref<64x32xf32, #tpu.memory_space<vmem>>, vector<8x32xf32>,
    %c8_i32_220 = arith.constant 8 : i32
    %c0_221 = arith.constant 0 : index
    %c0_222 = arith.constant 0 : index
    %609 = vector.load %arg15[%c0_221, %c0_222] : memref<64x32xf32, #tpu.memory_space<vmem>>, vector<64x32xf32>
    %c0_223 = arith.constant 0 : index
    %c0_224 = arith.constant 0 : index
    %610 = vector.load %arg8[%c0_223, %c0_224] : memref<32x32xf32, #tpu.memory_space<vmem>>, vector<32x32xf32>
    %cst_225 = arith.constant dense<0.000000e+00> : vector<64x32xf32>
    %611 = tpu.matmul %609, %610, %cst_225 {dimension_numbers = #tpu.dot_dimension_numbers<[1], [0], [0], [1], [0, 0, 1, 1], [], []>} : vector<64x32xf32>, vector<32x32xf32>, vector<64x32xf32> -> vector<64x32xf32>
    %c0_226 = arith.constant 0 : index
    %c0_227 = arith.constant 0 : index
    %612 = vector.load %arg9[%c0_226, %c0_227] : memref<1x32xf32, #tpu.memory_space<vmem>>, vector<1x32xf32>
    %613 = vector.broadcast %612 : vector<1x32xf32> to vector<64x32xf32>
    %614 = arith.addf %611, %613 : vector<64x32xf32>
    %615 = math.tanh %614 : vector<64x32xf32>
    %c0_228 = arith.constant 0 : index
    %c0_229 = arith.constant 0 : index
    %616 = vector.load %arg10[%c0_228, %c0_229] : memref<32x4xf32, #tpu.memory_space<vmem>>, vector<32x4xf32>
    %cst_230 = arith.constant dense<0.000000e+00> : vector<64x4xf32>
    %617 = tpu.matmul %615, %616, %cst_230 {dimension_numbers = #tpu.dot_dimension_numbers<[1], [0], [0], [1], [0, 0, 1, 1], [], []>} : vector<64x32xf32>, vector<32x4xf32>, vector<64x4xf32> -> vector<64x4xf32>
    %c0_231 = arith.constant 0 : index
    %c0_232 = arith.constant 0 : index
    %618 = vector.load %arg11[%c0_231, %c0_232] : memref<1x4xf32, #tpu.memory_space<vmem>>, vector<1x4xf32>
    %619 = vector.broadcast %618 : vector<1x4xf32> to vector<64x4xf32>
    %620 = arith.addf %617, %619 : vector<64x4xf32>
    %c0_233 = arith.constant 0 : index
    %c0_234 = arith.constant 0 : index
    %c0_235 = arith.constant 0 : index
    %621 = vector.load %arg12[%c0_233, %c0_234, %c0_235] : memref<1x64x4xf32, #tpu.memory_space<vmem>>, vector<1x64x4xf32>
    %622 = vector.shape_cast %621 : vector<1x64x4xf32> to vector<64x4xf32>
    %623 = vector.shape_cast %620 : vector<64x4xf32> to vector<1x64x4xf32>
    tpu.vector_store %arg12[%c0_233, %c0_234, %c0_235], %623 {strides = array<i32>} : memref<1x64x4xf32, #tpu.memory_space<vmem>>, vector<1x64x4xf32>,
    return
  }
  func.func @transform_0(%arg0: i32) -> (i32, i32, i32) {
    %c0_i32 = arith.constant 0 : i32
    %c0_i32_0 = arith.constant 0 : i32
    %c0_i32_1 = arith.constant 0 : i32
    return %arg0, %c0_i32, %c0_i32_0 : i32, i32, i32
  }
  func.func @transform_1(%arg0: i32) -> (i32, i32) {
    %c0_i32 = arith.constant 0 : i32
    %c0_i32_0 = arith.constant 0 : i32
    %c0_i32_1 = arith.constant 0 : i32
    return %c0_i32, %c0_i32_0 : i32, i32
  }
  func.func @transform_2(%arg0: i32) -> (i32, i32) {
    %c0_i32 = arith.constant 0 : i32
    %c0_i32_0 = arith.constant 0 : i32
    %c0_i32_1 = arith.constant 0 : i32
    return %c0_i32, %c0_i32_0 : i32, i32
  }
  func.func @transform_3(%arg0: i32) -> (i32, i32) {
    %c0_i32 = arith.constant 0 : i32
    %c0_i32_0 = arith.constant 0 : i32
    %c0_i32_1 = arith.constant 0 : i32
    return %c0_i32, %c0_i32_0 : i32, i32
  }
  func.func @transform_4(%arg0: i32) -> (i32, i32) {
    %c0_i32 = arith.constant 0 : i32
    %c0_i32_0 = arith.constant 0 : i32
    %c0_i32_1 = arith.constant 0 : i32
    return %c0_i32, %c0_i32_0 : i32, i32
  }
  func.func @transform_5(%arg0: i32) -> (i32, i32) {
    %c0_i32 = arith.constant 0 : i32
    %c0_i32_0 = arith.constant 0 : i32
    %c0_i32_1 = arith.constant 0 : i32
    return %c0_i32, %c0_i32_0 : i32, i32
  }
  func.func @transform_6(%arg0: i32) -> (i32, i32) {
    %c0_i32 = arith.constant 0 : i32
    %c0_i32_0 = arith.constant 0 : i32
    %c0_i32_1 = arith.constant 0 : i32
    return %c0_i32, %c0_i32_0 : i32, i32
  }
  func.func @transform_7(%arg0: i32) -> (i32, i32) {
    %c0_i32 = arith.constant 0 : i32
    %c0_i32_0 = arith.constant 0 : i32
    %c0_i32_1 = arith.constant 0 : i32
    return %c0_i32, %c0_i32_0 : i32, i32
  }
  func.func @transform_8(%arg0: i32) -> (i32, i32) {
    %c0_i32 = arith.constant 0 : i32
    %c0_i32_0 = arith.constant 0 : i32
    %c0_i32_1 = arith.constant 0 : i32
    return %c0_i32, %c0_i32_0 : i32, i32
  }
  func.func @transform_9(%arg0: i32) -> (i32, i32) {
    %c0_i32 = arith.constant 0 : i32
    %c0_i32_0 = arith.constant 0 : i32
    %c0_i32_1 = arith.constant 0 : i32
    return %c0_i32, %c0_i32_0 : i32, i32
  }
  func.func @transform_10(%arg0: i32) -> (i32, i32) {
    %c0_i32 = arith.constant 0 : i32
    %c0_i32_0 = arith.constant 0 : i32
    %c0_i32_1 = arith.constant 0 : i32
    return %c0_i32, %c0_i32_0 : i32, i32
  }
  func.func @transform_11(%arg0: i32) -> (i32, i32, i32) {
    %c0_i32 = arith.constant 0 : i32
    %c0_i32_0 = arith.constant 0 : i32
    %c0_i32_1 = arith.constant 0 : i32
    return %arg0, %c0_i32, %c0_i32_0 : i32, i32, i32
  }
  func.func @transform_12(%arg0: i32) -> (i32, i32) {
    %c0_i32 = arith.constant 0 : i32
    %c0_i32_0 = arith.constant 0 : i32
    return %arg0, %c0_i32 : i32, i32
  }
}

</mosaic_0001>

<llo_original>
// kernel: lstm_autoencoder_forward.1
$region0: #{lstm_autoencoder_forward.1}
  #allocation0 [shape = 'u32[]', space=smem, size = 0x4, offset = 0x4, fixed_abs, tag = 'smem constant byte address 0x4 - core index']
  #allocation1 [shape = 'u32[144,128]{1,0:T(1,128)}', space=vmem, size = 0x12000, scoped, tag = 'internal scratch']
  #allocation2 [shape = 'f32[64,512]{1,0:T(8,128)}', space=vmem, size = 0x20000, scoped, tag = 'scratch operand']
  #allocation3 [shape = 'f32[64,32]{1,0:T(8,128)}', space=vmem, size = 0x8000, scoped, tag = 'scratch operand']
  %s0 = inlined_call_operand.vmem [shape: f32[1,64,4], index: 0, kind: input, shape index: {}]
  %s1 = inlined_call_operand.vmem [shape: f32[4,512], index: 1, kind: input, shape index: {}]
  %s2 = inlined_call_operand.vmem [shape: f32[32,512], index: 2, kind: input, shape index: {}]
  %s3 = inlined_call_operand.vmem [shape: f32[1,512], index: 3, kind: input, shape index: {}]
  %s4 = inlined_call_operand.vmem [shape: f32[32,512], index: 4, kind: input, shape index: {}]
  %s5 = inlined_call_operand.vmem [shape: f32[32,512], index: 5, kind: input, shape index: {}]
  %s6 = inlined_call_operand.vmem [shape: f32[1,512], index: 6, kind: input, shape index: {}]
  %s7 = inlined_call_operand.vmem [shape: f32[32,32], index: 7, kind: input, shape index: {}]
  %s8 = inlined_call_operand.vmem [shape: f32[1,32], index: 8, kind: input, shape index: {}]
  %s9 = inlined_call_operand.vmem [shape: f32[32,4], index: 9, kind: input, shape index: {}]
  %s10 = inlined_call_operand.vmem [shape: f32[1,4], index: 10, kind: input, shape index: {}]
  %s11 = inlined_call_operand.vmem [shape: f32[1,64,4], index: 11, kind: output, shape index: {0}]
  %s12 = inlined_call_operand.vmem [shape: f32[8,32], index: 12, kind: output, shape index: {1}]
  %13 = xla_tuple %s11, %s12
  %s14 = sld [smem:[#allocation0]]
  $region62: #{lstm_autoencoder_forward.1} parent=0
    _
  %s16 = ssub.s32 1, %s14
  %s17 = scalar_select 0, %s16, %s14
  // Predicated region
  $region2: #{lstm_autoencoder_forward.1} parent=0 // pred_check
    _
  $region3: #{lstm_autoencoder_forward.1} parent=0 // pred_check_branch
    %19 = sbr.rel (0) target = $region5
  $region4: #{lstm_autoencoder_forward.1} parent=0 // pred_region
    _
  $region5: #{lstm_autoencoder_forward.1} parent=0 // pred_fallthru
    _
  // Predicated region
  $region6: #{lstm_autoencoder_forward.1} parent=0 // pred_check
    _
  $region7: #{lstm_autoencoder_forward.1} parent=0 // pred_check_branch
    %21 = sbr.rel (0) target = $region9
  $region8: #{lstm_autoencoder_forward.1} parent=0 // pred_region
    _
  $region9: #{lstm_autoencoder_forward.1} parent=0 // pred_fallthru
    _
  // Predicated region
  $region10: #{lstm_autoencoder_forward.1} parent=0 // pred_check
    _
  $region11: #{lstm_autoencoder_forward.1} parent=0 // pred_check_branch
    %23 = sbr.rel (0) target = $region13
  $region12: #{lstm_autoencoder_forward.1} parent=0 // pred_region
    _
  $region13: #{lstm_autoencoder_forward.1} parent=0 // pred_fallthru
    _
  // Predicated region
  $region14: #{lstm_autoencoder_forward.1} parent=0 // pred_check
    _
  $region15: #{lstm_autoencoder_forward.1} parent=0 // pred_check_branch
    %25 = sbr.rel (0) target = $region17
  $region16: #{lstm_autoencoder_forward.1} parent=0 // pred_region
    _
  $region17: #{lstm_autoencoder_forward.1} parent=0 // pred_fallthru
    _
  // Predicated region
  $region18: #{lstm_autoencoder_forward.1} parent=0 // pred_check
    _
  $region19: #{lstm_autoencoder_forward.1} parent=0 // pred_check_branch
    %27 = sbr.rel (0) target = $region21
  $region20: #{lstm_autoencoder_forward.1} parent=0 // pred_region
    _
  $region21: #{lstm_autoencoder_forward.1} parent=0 // pred_fallthru
    _
  // Predicated region
  $region22: #{lstm_autoencoder_forward.1} parent=0 // pred_check
    _
  $region23: #{lstm_autoencoder_forward.1} parent=0 // pred_check_branch
    %29 = sbr.rel (0) target = $region25
  $region24: #{lstm_autoencoder_forward.1} parent=0 // pred_region
    _
  $region25: #{lstm_autoencoder_forward.1} parent=0 // pred_fallthru
    _
  // Predicated region
  $region26: #{lstm_autoencoder_forward.1} parent=0 // pred_check
    _
  $region27: #{lstm_autoencoder_forward.1} parent=0 // pred_check_branch
    %31 = sbr.rel (0) target = $region29
  $region28: #{lstm_autoencoder_forward.1} parent=0 // pred_region
    _
  $region29: #{lstm_autoencoder_forward.1} parent=0 // pred_fallthru
    _
  // Predicated region
  $region30: #{lstm_autoencoder_forward.1} parent=0 // pred_check
    _
  $region31: #{lstm_autoencoder_forward.1} parent=0 // pred_check_branch
    %33 = sbr.rel (0) target = $region33
  $region32: #{lstm_autoencoder_forward.1} parent=0 // pred_region
    _
  $region33: #{lstm_autoencoder_forward.1} parent=0 // pred_fallthru
    _
  // Predicated region
  $region34: #{lstm_autoencoder_forward.1} parent=0 // pred_check
    _
  $region35: #{lstm_autoencoder_forward.1} parent=0 // pred_check_branch
    %35 = sbr.rel (0) target = $region37
  $region36: #{lstm_autoencoder_forward.1} parent=0 // pred_region
    _
  $region37: #{lstm_autoencoder_forward.1} parent=0 // pred_fallthru
    _
  // Predicated region
  $region38: #{lstm_autoencoder_forward.1} parent=0 // pred_check
    _
  $region39: #{lstm_autoencoder_forward.1} parent=0 // pred_check_branch
    %37 = sbr.rel (0) target = $region41
  $region40: #{lstm_autoencoder_forward.1} parent=0 // pred_region
    _
  $region41: #{lstm_autoencoder_forward.1} parent=0 // pred_fallthru
    _
  // Predicated region
  $region42: #{lstm_autoencoder_forward.1} parent=0 // pred_check
    _
  $region43: #{lstm_autoencoder_forward.1} parent=0 // pred_check_branch
    %39 = sbr.rel (0) target = $region45
  $region44: #{lstm_autoencoder_forward.1} parent=0 // pred_region
    _
  $region45: #{lstm_autoencoder_forward.1} parent=0 // pred_fallthru
    _
  %v40 = vld [vmem:[%s2] sm:$0xff]
  %v41 = vld [vmem:[%s2 + $0x8] sm:$0xff]
  %v42 = vld [vmem:[%s2 + $0x10] sm:$0xff]
  %v43 = vld [vmem:[%s2 + $0x18] sm:$0xff]
  %v44 = vld [vmem:[%s2 + $0x20] sm:$0xff]
  %v45 = vld [vmem:[%s2 + $0x28] sm:$0xff]
  %v46 = vld [vmem:[%s2 + $0x30] sm:$0xff]
  %v47 = vld [vmem:[%s2 + $0x38] sm:$0xff]
  %v48 = vld [vmem:[%s2 + $0x40] sm:$0xff]
  %v49 = vld [vmem:[%s2 + $0x48] sm:$0xff]
  %v50 = vld [vmem:[%s2 + $0x50] sm:$0xff]
  %v51 = vld [vmem:[%s2 + $0x58] sm:$0xff]
  %v52 = vld [vmem:[%s2 + $0x60] sm:$0xff]
  %v53 = vld [vmem:[%s2 + $0x68] sm:$0xff]
  %v54 = vld [vmem:[%s2 + $0x70] sm:$0xff]
  %v55 = vld [vmem:[%s2 + $0x78] sm:$0xff]
  %v56 = vld [vmem:[%s5] sm:$0xff]
  %v57 = vld [vmem:[%s5 + $0x8] sm:$0xff]
  %v58 = vld [vmem:[%s5 + $0x10] sm:$0xff]
  %v59 = vld [vmem:[%s5 + $0x18] sm:$0xff]
  %v60 = vld [vmem:[%s5 + $0x20] sm:$0xff]
  %v61 = vld [vmem:[%s5 + $0x28] sm:$0xff]
  %v62 = vld [vmem:[%s5 + $0x30] sm:$0xff]
  %v63 = vld [vmem:[%s5 + $0x38] sm:$0xff]
  %v64 = vld [vmem:[%s5 + $0x40] sm:$0xff]
  %v65 = vld [vmem:[%s5 + $0x48] sm:$0xff]
  %v66 = vld [vmem:[%s5 + $0x50] sm:$0xff]
  %v67 = vld [vmem:[%s5 + $0x58] sm:$0xff]
  %v68 = vld [vmem:[%s5 + $0x60] sm:$0xff]
  %v69 = vld [vmem:[%s5 + $0x68] sm:$0xff]
  %v70 = vld [vmem:[%s5 + $0x70] sm:$0xff]
  %v71 = vld [vmem:[%s5 + $0x78] sm:$0xff]
  %v72 = vld [vmem:[%s0] sm:$0xff]
  %v73 = vld [vmem:[%s0 + $0x8] sm:$0xff]
  %v74 = vld [vmem:[%s0 + $0x10] sm:$0xff]
  %v75 = vld [vmem:[%s0 + $0x18] sm:$0xff]
  %v76 = vld [vmem:[%s0 + $0x20] sm:$0xff]
  %v77 = vld [vmem:[%s0 + $0x28] sm:$0xff]
  %v78 = vld [vmem:[%s0 + $0x30] sm:$0xff]
  %v79 = vld [vmem:[%s0 + $0x38] sm:$0xff]
  %v80 = vld [vmem:[%s1] sm:$0xff]
  %v81 = vld [vmem:[%s1 + $0x8] sm:$0xff]
  %v82 = vld [vmem:[%s3] sm:$0xf]
  %v84 = vlaneseq
  %v85 = vshrl.u32 %v84, 7
  %v86 = vsub.s32 0, %v85
  %v87 = vrot.slane %v82, %v86
  %v88 = vlaneseq
  %v89 = vshrl.u32 %v88, 7
  %v90 = vsub.s32 1, %v89
  %v91 = vrot.slane %v82, %v90
  %v92 = vlaneseq
  %v93 = vshrl.u32 %v92, 7
  %v94 = vsub.s32 2, %v93
  %v95 = vrot.slane %v82, %v94
  %v96 = vlaneseq
  %v97 = vshrl.u32 %v96, 7
  %v98 = vsub.s32 3, %v97
  %v99 = vrot.slane %v82, %v98
  %v106 = vcombine.high %v80, %v80
  %v107 = vcombine.high %v81, %v81
  %vm108 = vcmask 31744
  %v110 = vsel %vm108, %v72, 0
  %v113 = vsel %vm108, %v73, 0
  %v116 = vsel %vm108, %v74, 0
  %v119 = vsel %vm108, %v75, 0
  %v122 = vsel %vm108, %v76, 0
  %v125 = vsel %vm108, %v77, 0
  %v128 = vsel %vm108, %v78, 0
  %v131 = vsel %vm108, %v79, 0
  %vm133 = vcmask 1043456
  %v134 = vsel %vm133, %v80, 0
  %v136 = vsel %vm133, %v106, 0
  %v138 = vsel %vm133, %v81, 0
  %v140 = vsel %vm133, %v107, 0
  %142 = vmatprep.subr.mxu0 %v136
  %143 = vmatpush1.msra.mxu0 %v134
  %144 = vmatprep.subr.mxu0 0.0
  %145 = vmatpush1.msra.mxu0 0.0
  %146 = vmatprep.subr.mxu0 0.0
  %147 = vmatpush1.msra.mxu0 0.0
  %148 = vmatprep.subr.mxu0 0.0
  %149 = vmatpush1.msra.mxu0 0.0
  %150 = vmatprep.subr.mxu0 0.0
  %151 = vmatpush1.msra.mxu0 0.0
  %152 = vmatprep.subr.mxu0 0.0
  %153 = vmatpush1.msra.mxu0 0.0
  %154 = vmatprep.subr.mxu0 0.0
  %155 = vmatpush1.msra.mxu0 0.0
  %156 = vmatprep.subr.mxu0 0.0
  %157 = vmatpush1.msra.mxu0 0.0
  %158 = vmatprep.subr.mxu0 0.0
  %159 = vmatpush1.msra.mxu0 0.0
  %160 = vmatprep.subr.mxu0 0.0
  %161 = vmatpush1.msra.mxu0 0.0
  %162 = vmatprep.subr.mxu0 0.0
  %163 = vmatpush1.msra.mxu0 0.0
  %164 = vmatprep.subr.mxu0 0.0
  %165 = vmatpush1.msra.mxu0 0.0
  %166 = vmatprep.subr.mxu0 0.0
  %167 = vmatpush1.msra.mxu0 0.0
  %168 = vmatprep.subr.mxu0 0.0
  %169 = vmatpush1.msra.mxu0 0.0
  %170 = vmatprep.subr.mxu0 0.0
  %171 = vmatpush1.msra.mxu0 0.0
  %172 = vmatprep.subr.mxu0 0.0
  %173 = vmatpush1.msra.mxu0 0.0
  %174 = vmatprep.subr.mxu0 0.0
  %175 = vmatpush1.msra.mxu0 0.0
  %176 = vmatprep.subr.mxu0 0.0
  %177 = vmatpush1.msra.mxu0 0.0
  %178 = vmatprep.subr.mxu0 0.0
  %179 = vmatpush1.msra.mxu0 0.0
  %180 = vmatprep.subr.mxu0 0.0
  %181 = vmatpush1.msra.mxu0 0.0
  %182 = vmatprep.subr.mxu0 0.0
  %183 = vmatpush1.msra.mxu0 0.0
  %184 = vmatprep.subr.mxu0 0.0
  %185 = vmatpush1.msra.mxu0 0.0
  %186 = vmatprep.subr.mxu0 0.0
  %187 = vmatpush1.msra.mxu0 0.0
  %188 = vmatprep.subr.mxu0 0.0
  %189 = vmatpush1.msra.mxu0 0.0
  %190 = vmatprep.subr.mxu0 0.0
  %191 = vmatpush1.msra.mxu0 0.0
  %192 = vmatprep.subr.mxu0 0.0
  %193 = vmatpush1.msra.mxu0 0.0
  %194 = vmatprep.subr.mxu0 0.0
  %195 = vmatpush1.msra.mxu0 0.0
  %196 = vmatprep.subr.mxu0 0.0
  %197 = vmatpush1.msra.mxu0 0.0
  %198 = vmatprep.subr.mxu0 0.0
  %199 = vmatpush1.msra.mxu0 0.0
  %200 = vmatprep.subr.mxu0 0.0
  %201 = vmatpush1.msra.mxu0 0.0
  %202 = vmatprep.subr.mxu0 0.0
  %203 = vmatpush1.msra.mxu0 0.0
  %204 = vmatprep.subr.mxu0 0.0
  %205 = vmatpush1.msra.mxu0 0.0
  %206 = vmatprep.mubr.f32.mxu0 0.0
  %207 = vmatmul.mubr.f32.gmra.mrb[0].mxu0 %v110
  %v208 = vpop.f32.mrb[0].mxu0
  %v209 = vadd.f32 %v87, %v208
  %v210 = vpop.f32.mrb[0].mxu0
  %v211 = vadd.f32 %v91, %v210
  %212 = vmatprep.mubr.f32.mxu0 0.0
  %213 = vmatmul.mubr.f32.gmra.mrb[0].mxu0 %v113
  %v214 = vpop.f32.mrb[0].mxu0
  %v215 = vadd.f32 %v87, %v214
  %v216 = vpop.f32.mrb[0].mxu0
  %v217 = vadd.f32 %v91, %v216
  %218 = vmatprep.mubr.f32.mxu0 0.0
  %219 = vmatmul.mubr.f32.gmra.mrb[0].mxu0 %v116
  %v220 = vpop.f32.mrb[0].mxu0
  %v221 = vadd.f32 %v87, %v220
  %v222 = vpop.f32.mrb[0].mxu0
  %v223 = vadd.f32 %v91, %v222
  %224 = vmatprep.mubr.f32.mxu0 0.0
  %225 = vmatmul.mubr.f32.gmra.mrb[0].mxu0 %v119
  %v226 = vpop.f32.mrb[0].mxu0
  %v227 = vadd.f32 %v87, %v226
  %v228 = vpop.f32.mrb[0].mxu0
  %v229 = vadd.f32 %v91, %v228
  %230 = vmatprep.mubr.f32.mxu0 0.0
  %231 = vmatmul.mubr.f32.gmra.mrb[0].mxu0 %v122
  %v232 = vpop.f32.mrb[0].mxu0
  %v233 = vadd.f32 %v87, %v232
  %v234 = vpop.f32.mrb[0].mxu0
  %v235 = vadd.f32 %v91, %v234
  %236 = vmatprep.mubr.f32.mxu0 0.0
  %237 = vmatmul.mubr.f32.gmra.mrb[0].mxu0 %v125
  %v238 = vpop.f32.mrb[0].mxu0
  %v239 = vadd.f32 %v87, %v238
  %v240 = vpop.f32.mrb[0].mxu0
  %v241 = vadd.f32 %v91, %v240
  %242 = vmatprep.mubr.f32.mxu0 0.0
  %243 = vmatmul.mubr.f32.gmra.mrb[0].mxu0 %v128
  %v244 = vpop.f32.mrb[0].mxu0
  %v245 = vadd.f32 %v87, %v244
  %v246 = vpop.f32.mrb[0].mxu0
  %v247 = vadd.f32 %v91, %v246
  %248 = vmatprep.mubr.f32.mxu0 0.0
  %249 = vmatmul.mubr.f32.gmra.mrb[0].mxu0 %v131
  %v250 = vpop.f32.mrb[0].mxu0
  %v251 = vadd.f32 %v87, %v250
  %v252 = vpop.f32.mrb[0].mxu0
  %v253 = vadd.f32 %v91, %v252
  %254 = vdwg.mxu0
  %255 = vmatprep.subr.mxu0 %v140
  %256 = vmatpush1.msra.mxu0 %v138
  %257 = vmatprep.subr.mxu0 0.0
  %258 = vmatpush1.msra.mxu0 0.0
  %259 = vmatprep.subr.mxu0 0.0
  %260 = vmatpush1.msra.mxu0 0.0
  %261 = vmatprep.subr.mxu0 0.0
  %262 = vmatpush1.msra.mxu0 0.0
  %263 = vmatprep.subr.mxu0 0.0
  %264 = vmatpush1.msra.mxu0 0.0
  %265 = vmatprep.subr.mxu0 0.0
  %266 = vmatpush1.msra.mxu0 0.0
  %267 = vmatprep.subr.mxu0 0.0
  %268 = vmatpush1.msra.mxu0 0.0
  %269 = vmatprep.subr.mxu0 0.0
  %270 = vmatpush1.msra.mxu0 0.0
  %271 = vmatprep.subr.mxu0 0.0
  %272 = vmatpush1.msra.mxu0 0.0
  %273 = vmatprep.subr.mxu0 0.0
  %274 = vmatpush1.msra.mxu0 0.0
  %275 = vmatprep.subr.mxu0 0.0
  %276 = vmatpush1.msra.mxu0 0.0
  %277 = vmatprep.subr.mxu0 0.0
  %278 = vmatpush1.msra.mxu0 0.0
  %279 = vmatprep.subr.mxu0 0.0
  %280 = vmatpush1.msra.mxu0 0.0
  %281 = vmatprep.subr.mxu0 0.0
  %282 = vmatpush1.msra.mxu0 0.0
  %283 = vmatprep.subr.mxu0 0.0
  %284 = vmatpush1.msra.mxu0 0.0
  %285 = vmatprep.subr.mxu0 0.0
  %286 = vmatpush1.msra.mxu0 0.0
  %287 = vmatprep.subr.mxu0 0.0
  %288 = vmatpush1.msra.mxu0 0.0
  %289 = vmatprep.subr.mxu0 0.0
  %290 = vmatpush1.msra.mxu0 0.0
  %291 = vmatprep.subr.mxu0 0.0
  %292 = vmatpush1.msra.mxu0 0.0
  %293 = vmatprep.subr.mxu0 0.0
  %294 = vmatpush1.msra.mxu0 0.0
  %295 = vmatprep.subr.mxu0 0.0
  %296 = vmatpush1.msra.mxu0 0.0
  %297 = vmatprep.subr.mxu0 0.0
  %298 = vmatpush1.msra.mxu0 0.0
  %299 = vmatprep.subr.mxu0 0.0
  %300 = vmatpush1.msra.mxu0 0.0
  %301 = vmatprep.subr.mxu0 0.0
  %302 = vmatpush1.msra.mxu0 0.0
  %303 = vmatprep.subr.mxu0 0.0
  %304 = vmatpush1.msra.mxu0 0.0
  %305 = vmatprep.subr.mxu0 0.0
  %306 = vmatpush1.msra.mxu0 0.0
  %307 = vmatprep.subr.mxu0 0.0
  %308 = vmatpush1.msra.mxu0 0.0
  %309 = vmatprep.subr.mxu0 0.0
  %310 = vmatpush1.msra.mxu0 0.0
  %311 = vmatprep.subr.mxu0 0.0
  %312 = vmatpush1.msra.mxu0 0.0
  %313 = vmatprep.subr.mxu0 0.0
  %314 = vmatpush1.msra.mxu0 0.0
  %315 = vmatprep.subr.mxu0 0.0
  %316 = vmatpush1.msra.mxu0 0.0
  %317 = vmatprep.subr.mxu0 0.0
  %318 = vmatpush1.msra.mxu0 0.0
  %319 = vmatprep.mubr.f32.mxu0 0.0
  %320 = vmatmul.mubr.f32.gmra.mrb[0].mxu0 %v110
  %v321 = vpop.f32.mrb[0].mxu0
  %v322 = vadd.f32 %v95, %v321
  %v323 = vpop.f32.mrb[0].mxu0
  %v324 = vadd.f32 %v99, %v323
  %325 = vmatprep.mubr.f32.mxu0 0.0
  %326 = vmatmul.mubr.f32.gmra.mrb[0].mxu0 %v113
  %v327 = vpop.f32.mrb[0].mxu0
  %v328 = vadd.f32 %v95, %v327
  %v329 = vpop.f32.mrb[0].mxu0
  %v330 = vadd.f32 %v99, %v329
  %331 = vmatprep.mubr.f32.mxu0 0.0
  %332 = vmatmul.mubr.f32.gmra.mrb[0].mxu0 %v116
  %v333 = vpop.f32.mrb[0].mxu0
  %v334 = vadd.f32 %v95, %v333
  %v335 = vpop.f32.mrb[0].mxu0
  %v336 = vadd.f32 %v99, %v335
  %337 = vmatprep.mubr.f32.mxu0 0.0
  %338 = vmatmul.mubr.f32.gmra.mrb[0].mxu0 %v119
  %v339 = vpop.f32.mrb[0].mxu0
  %v340 = vadd.f32 %v95, %v339
  %v341 = vpop.f32.mrb[0].mxu0
  %v342 = vadd.f32 %v99, %v341
  %343 = vmatprep.mubr.f32.mxu0 0.0
  %344 = vmatmul.mubr.f32.gmra.mrb[0].mxu0 %v122
  %v345 = vpop.f32.mrb[0].mxu0
  %v346 = vadd.f32 %v95, %v345
  %v347 = vpop.f32.mrb[0].mxu0
  %v348 = vadd.f32 %v99, %v347
  %349 = vmatprep.mubr.f32.mxu0 0.0
  %350 = vmatmul.mubr.f32.gmra.mrb[0].mxu0 %v125
  %v351 = vpop.f32.mrb[0].mxu0
  %v352 = vadd.f32 %v95, %v351
  %v353 = vpop.f32.mrb[0].mxu0
  %v354 = vadd.f32 %v99, %v353
  %355 = vmatprep.mubr.f32.mxu0 0.0
  %356 = vmatmul.mubr.f32.gmra.mrb[0].mxu0 %v128
  %v357 = vpop.f32.mrb[0].mxu0
  %v358 = vadd.f32 %v95, %v357
  %v359 = vpop.f32.mrb[0].mxu0
  %v360 = vadd.f32 %v99, %v359
  %361 = vmatprep.mubr.f32.mxu0 0.0
  %362 = vmatmul.mubr.f32.gmra.mrb[0].mxu0 %v131
  %v363 = vpop.f32.mrb[0].mxu0
  %v364 = vadd.f32 %v95, %v363
  %v365 = vpop.f32.mrb[0].mxu0
  %v366 = vadd.f32 %v99, %v365
  %367 = vdwg.mxu0
  %368 = vst [vmem:[#allocation2] sm:$0xff] %v209
  %369 = vst [vmem:[#allocation2 + $0x8] sm:$0xff] %v211
  %370 = vst [vmem:[#allocation2 + $0x10] sm:$0xff] %v322
  %371 = vst [vmem:[#allocation2 + $0x18] sm:$0xff] %v324
  %372 = vst [vmem:[#allocation2 + $0x20] sm:$0xff] %v215
  %373 = vst [vmem:[#allocation2 + $0x28] sm:$0xff] %v217
  %374 = vst [vmem:[#allocation2 + $0x30] sm:$0xff] %v328
  %375 = vst [vmem:[#allocation2 + $0x38] sm:$0xff] %v330
  %376 = vst [vmem:[#allocation2 + $0x40] sm:$0xff] %v221
  %377 = vst [vmem:[#allocation2 + $0x48] sm:$0xff] %v223
  %378 = vst [vmem:[#allocation2 + $0x50] sm:$0xff] %v334
  %379 = vst [vmem:[#allocation2 + $0x58] sm:$0xff] %v336
  %380 = vst [vmem:[#allocation2 + $0x60] sm:$0xff] %v227
  %381 = vst [vmem:[#allocation2 + $0x68] sm:$0xff] %v229
  %382 = vst [vmem:[#allocation2 + $0x70] sm:$0xff] %v340
  %383 = vst [vmem:[#allocation2 + $0x78] sm:$0xff] %v342
  %384 = vst [vmem:[#allocation2 + $0x80] sm:$0xff] %v233
  %385 = vst [vmem:[#allocation2 + $0x88] sm:$0xff] %v235
  %386 = vst [vmem:[#allocation2 + $0x90] sm:$0xff] %v346
  %387 = vst [vmem:[#allocation2 + $0x98] sm:$0xff] %v348
  %388 = vst [vmem:[#allocation2 + $0xa0] sm:$0xff] %v239
  %389 = vst [vmem:[#allocation2 + $0xa8] sm:$0xff] %v241
  %390 = vst [vmem:[#allocation2 + $0xb0] sm:$0xff] %v352
  %391 = vst [vmem:[#allocation2 + $0xb8] sm:$0xff] %v354
  %392 = vst [vmem:[#allocation2 + $0xc0] sm:$0xff] %v245
  %393 = vst [vmem:[#allocation2 + $0xc8] sm:$0xff] %v247
  %394 = vst [vmem:[#allocation2 + $0xd0] sm:$0xff] %v358
  %395 = vst [vmem:[#allocation2 + $0xd8] sm:$0xff] %v360
  %396 = vst [vmem:[#allocation2 + $0xe0] sm:$0xff] %v251
  %397 = vst [vmem:[#allocation2 + $0xe8] sm:$0xff] %v253
  %398 = vst [vmem:[#allocation2 + $0xf0] sm:$0xff] %v364
  %399 = vst [vmem:[#allocation2 + $0xf8] sm:$0xff] %v366
  %s400 = smul.u32 0, 4
  %s401 = smul.addr %s400, 8
  %s402 = scalar_lea.vmem [#allocation2], %s401
  %v403 = vld [vmem:[%s402] sm:$0xff]
  %v404 = vld [vmem:[%s402 + $0x8] sm:$0xff]
  %v405 = vld [vmem:[%s402 + $0x10] sm:$0xff]
  %v406 = vld [vmem:[%s402 + $0x18] sm:$0xff]
  %vm407 = vcmask 261120
  %v409 = vsel %vm407, 0.0, 0
  %411 = vmatprep.subr.mxu0 %v41
  %412 = vmatpush1.msra.mxu0 %v40
  %413 = vmatprep.subr.mxu0 %v45
  %414 = vmatpush1.msra.mxu0 %v44
  %415 = vmatprep.subr.mxu0 %v49
  %416 = vmatpush1.msra.mxu0 %v48
  %417 = vmatprep.subr.mxu0 %v53
  %418 = vmatpush1.msra.mxu0 %v52
  %419 = vmatprep.subr.mxu0 0.0
  %420 = vmatpush1.msra.mxu0 0.0
  %421 = vmatprep.subr.mxu0 0.0
  %422 = vmatpush1.msra.mxu0 0.0
  %423 = vmatprep.subr.mxu0 0.0
  %424 = vmatpush1.msra.mxu0 0.0
  %425 = vmatprep.subr.mxu0 0.0
  %426 = vmatpush1.msra.mxu0 0.0
  %427 = vmatprep.subr.mxu0 0.0
  %428 = vmatpush1.msra.mxu0 0.0
  %429 = vmatprep.subr.mxu0 0.0
  %430 = vmatpush1.msra.mxu0 0.0
  %431 = vmatprep.subr.mxu0 0.0
  %432 = vmatpush1.msra.mxu0 0.0
  %433 = vmatprep.subr.mxu0 0.0
  %434 = vmatpush1.msra.mxu0 0.0
  %435 = vmatprep.subr.mxu0 0.0
  %436 = vmatpush1.msra.mxu0 0.0
  %437 = vmatprep.subr.mxu0 0.0
  %438 = vmatpush1.msra.mxu0 0.0
  %439 = vmatprep.subr.mxu0 0.0
  %440 = vmatpush1.msra.mxu0 0.0
  %441 = vmatprep.subr.mxu0 0.0
  %442 = vmatpush1.msra.mxu0 0.0
  %443 = vmatprep.subr.mxu0 0.0
  %444 = vmatpush1.msra.mxu0 0.0
  %445 = vmatprep.subr.mxu0 0.0
  %446 = vmatpush1.msra.mxu0 0.0
  %447 = vmatprep.subr.mxu0 0.0
  %448 = vmatpush1.msra.mxu0 0.0
  %449 = vmatprep.subr.mxu0 0.0
  %450 = vmatpush1.msra.mxu0 0.0
  %451 = vmatprep.subr.mxu0 0.0
  %452 = vmatpush1.msra.mxu0 0.0
  %453 = vmatprep.subr.mxu0 0.0
  %454 = vmatpush1.msra.mxu0 0.0
  %455 = vmatprep.subr.mxu0 0.0
  %456 = vmatpush1.msra.mxu0 0.0
  %457 = vmatprep.subr.mxu0 0.0
  %458 = vmatpush1.msra.mxu0 0.0
  %459 = vmatprep.subr.mxu0 0.0
  %460 = vmatpush1.msra.mxu0 0.0
  %461 = vmatprep.subr.mxu0 0.0
  %462 = vmatpush1.msra.mxu0 0.0
  %463 = vmatprep.subr.mxu0 0.0
  %464 = vmatpush1.msra.mxu0 0.0
  %465 = vmatprep.subr.mxu0 0.0
  %466 = vmatpush1.msra.mxu0 0.0
  %467 = vmatprep.subr.mxu0 0.0
  %468 = vmatpush1.msra.mxu0 0.0
  %469 = vmatprep.subr.mxu0 0.0
  %470 = vmatpush1.msra.mxu0 0.0
  %471 = vmatprep.subr.mxu0 0.0
  %472 = vmatpush1.msra.mxu0 0.0
  %473 = vmatprep.subr.mxu0 0.0
  %474 = vmatpush1.msra.mxu0 0.0
  %475 = vmatprep.mubr.f32.mxu0 0.0
  %476 = vmatmul.mubr.f32.gmra.mrb[0].mxu0 %v409
  %v477 = vpop.f32.mrb[0].mxu0
  %v478 = vadd.f32 0.0, %v477
  %v479 = vpop.f32.mrb[0].mxu0
  %v480 = vadd.f32 0.0, %v479
  %481 = vdwg.mxu0
  %482 = vmatprep.subr.mxu0 %v43
  %483 = vmatpush1.msra.mxu0 %v42
  %484 = vmatprep.subr.mxu0 %v47
  %485 = vmatpush1.msra.mxu0 %v46
  %486 = vmatprep.subr.mxu0 %v51
  %487 = vmatpush1.msra.mxu0 %v50
  %488 = vmatprep.subr.mxu0 %v55
  %489 = vmatpush1.msra.mxu0 %v54
  %490 = vmatprep.subr.mxu0 0.0
  %491 = vmatpush1.msra.mxu0 0.0
  %492 = vmatprep.subr.mxu0 0.0
  %493 = vmatpush1.msra.mxu0 0.0
  %494 = vmatprep.subr.mxu0 0.0
  %495 = vmatpush1.msra.mxu0 0.0
  %496 = vmatprep.subr.mxu0 0.0
  %497 = vmatpush1.msra.mxu0 0.0
  %498 = vmatprep.subr.mxu0 0.0
  %499 = vmatpush1.msra.mxu0 0.0
  %500 = vmatprep.subr.mxu0 0.0
  %501 = vmatpush1.msra.mxu0 0.0
  %502 = vmatprep.subr.mxu0 0.0
  %503 = vmatpush1.msra.mxu0 0.0
  %504 = vmatprep.subr.mxu0 0.0
  %505 = vmatpush1.msra.mxu0 0.0
  %506 = vmatprep.subr.mxu0 0.0
  %507 = vmatpush1.msra.mxu0 0.0
  %508 = vmatprep.subr.mxu0 0.0
  %509 = vmatpush1.msra.mxu0 0.0
  %510 = vmatprep.subr.mxu0 0.0
  %511 = vmatpush1.msra.mxu0 0.0
  %512 = vmatprep.subr.mxu0 0.0
  %513 = vmatpush1.msra.mxu0 0.0
  %514 = vmatprep.subr.mxu0 0.0
  %515 = vmatpush1.msra.mxu0 0.0
  %516 = vmatprep.subr.mxu0 0.0
  %517 = vmatpush1.msra.mxu0 0.0
  %518 = vmatprep.subr.mxu0 0.0
  %519 = vmatpush1.msra.mxu0 0.0
  %520 = vmatprep.subr.mxu0 0.0
  %521 = vmatpush1.msra.mxu0 0.0
  %522 = vmatprep.subr.mxu0 0.0
  %523 = vmatpush1.msra.mxu0 0.0
  %524 = vmatprep.subr.mxu0 0.0
  %525 = vmatpush1.msra.mxu0 0.0
  %526 = vmatprep.subr.mxu0 0.0
  %527 = vmatpush1.msra.mxu0 0.0
  %528 = vmatprep.subr.mxu0 0.0
  %529 = vmatpush1.msra.mxu0 0.0
  %530 = vmatprep.subr.mxu0 0.0
  %531 = vmatpush1.msra.mxu0 0.0
  %532 = vmatprep.subr.mxu0 0.0
  %533 = vmatpush1.msra.mxu0 0.0
  %534 = vmatprep.subr.mxu0 0.0
  %535 = vmatpush1.msra.mxu0 0.0
  %536 = vmatprep.subr.mxu0 0.0
  %537 = vmatpush1.msra.mxu0 0.0
  %538 = vmatprep.subr.mxu0 0.0
  %539 = vmatpush1.msra.mxu0 0.0
  %540 = vmatprep.subr.mxu0 0.0
  %541 = vmatpush1.msra.mxu0 0.0
  %542 = vmatprep.subr.mxu0 0.0
  %543 = vmatpush1.msra.mxu0 0.0
  %544 = vmatprep.subr.mxu0 0.0
  %545 = vmatpush1.msra.mxu0 0.0
  %546 = vmatprep.mubr.f32.mxu0 0.0
  %547 = vmatmul.mubr.f32.gmra.mrb[0].mxu0 %v409
  %v548 = vpop.f32.mrb[0].mxu0
  %v549 = vadd.f32 0.0, %v548
  %v550 = vpop.f32.mrb[0].mxu0
  %v551 = vadd.f32 0.0, %v550
  %552 = vdwg.mxu0
  %v553 = vadd.f32 %v403, %v478
  %v554 = vadd.f32 %v404, %v480
  %v555 = vadd.f32 %v405, %v549
  %v556 = vadd.f32 %v406, %v551
  %v557 = vmul.f32 %v553, 0.5
  %v558 = vtanh.pop %v557
  %v559 = vmul.f32 %v558, 0.5
  %v560 = vadd.f32 %v559, 0.5
  %v561 = vmul.f32 %v554, 0.5
  %v562 = vtanh.pop %v561
  %v563 = vmul.f32 %v562, 0.5
  %v564 = vadd.f32 %v563, 0.5
  %v565 = vtanh.pop %v555
  %v566 = vmul.f32 %v556, 0.5
  %v567 = vtanh.pop %v566
  %v568 = vmul.f32 %v567, 0.5
  %v569 = vadd.f32 %v568, 0.5
  %v570 = vmul.f32 %v564, 0.0
  %v571 = vmul.f32 %v560, %v565
  %v572 = vadd.f32 %v570, %v571
  %v573 = vtanh.pop %v572
  %v574 = vmul.f32 %v569, %v573
  %s575 = smul.u32 1, 4
  %s576 = smul.addr %s575, 8
  %s577 = scalar_lea.vmem [#allocation2], %s576
  %v578 = vld [vmem:[%s577] sm:$0xff]
  %v579 = vld [vmem:[%s577 + $0x8] sm:$0xff]
  %v580 = vld [vmem:[%s577 + $0x10] sm:$0xff]
  %v581 = vld [vmem:[%s577 + $0x18] sm:$0xff]
  %v583 = vsel %vm407, %v574, 0
  %585 = vmatprep.subr.mxu0 %v41
  %586 = vmatpush1.msra.mxu0 %v40
  %587 = vmatprep.subr.mxu0 %v45
  %588 = vmatpush1.msra.mxu0 %v44
  %589 = vmatprep.subr.mxu0 %v49
  %590 = vmatpush1.msra.mxu0 %v48
  %591 = vmatprep.subr.mxu0 %v53
  %592 = vmatpush1.msra.mxu0 %v52
  %593 = vmatprep.subr.mxu0 0.0
  %594 = vmatpush1.msra.mxu0 0.0
  %595 = vmatprep.subr.mxu0 0.0
  %596 = vmatpush1.msra.mxu0 0.0
  %597 = vmatprep.subr.mxu0 0.0
  %598 = vmatpush1.msra.mxu0 0.0
  %599 = vmatprep.subr.mxu0 0.0
  %600 = vmatpush1.msra.mxu0 0.0
  %601 = vmatprep.subr.mxu0 0.0
  %602 = vmatpush1.msra.mxu0 0.0
  %603 = vmatprep.subr.mxu0 0.0
  %604 = vmatpush1.msra.mxu0 0.0
  %605 = vmatprep.subr.mxu0 0.0
  %606 = vmatpush1.msra.mxu0 0.0
  %607 = vmatprep.subr.mxu0 0.0
  %608 = vmatpush1.msra.mxu0 0.0
  %609 = vmatprep.subr.mxu0 0.0
  %610 = vmatpush1.msra.mxu0 0.0
  %611 = vmatprep.subr.mxu0 0.0
  %612 = vmatpush1.msra.mxu0 0.0
  %613 = vmatprep.subr.mxu0 0.0
  %614 = vmatpush1.msra.mxu0 0.0
  %615 = vmatprep.subr.mxu0 0.0
  %616 = vmatpush1.msra.mxu0 0.0
  %617 = vmatprep.subr.mxu0 0.0
  %618 = vmatpush1.msra.mxu0 0.0
  %619 = vmatprep.subr.mxu0 0.0
  %620 = vmatpush1.msra.mxu0 0.0
  %621 = vmatprep.subr.mxu0 0.0
  %622 = vmatpush1.msra.mxu0 0.0
  %623 = vmatprep.subr.mxu0 0.0
  %624 = vmatpush1.msra.mxu0 0.0
  %625 = vmatprep.subr.mxu0 0.0
  %626 = vmatpush1.msra.mxu0 0.0
  %627 = vmatprep.subr.mxu0 0.0
  %628 = vmatpush1.msra.mxu0 0.0
  %629 = vmatprep.subr.mxu0 0.0
  %630 = vmatpush1.msra.mxu0 0.0
  %631 = vmatprep.subr.mxu0 0.0
  %632 = vmatpush1.msra.mxu0 0.0
  %633 = vmatprep.subr.mxu0 0.0
  %634 = vmatpush1.msra.mxu0 0.0
  %635 = vmatprep.subr.mxu0 0.0
  %636 = vmatpush1.msra.mxu0 0.0
  %637 = vmatprep.subr.mxu0 0.0
  %638 = vmatpush1.msra.mxu0 0.0
  %639 = vmatprep.subr.mxu0 0.0
  %640 = vmatpush1.msra.mxu0 0.0
  %641 = vmatprep.subr.mxu0 0.0
  %642 = vmatpush1.msra.mxu0 0.0
  %643 = vmatprep.subr.mxu0 0.0
  %644 = vmatpush1.msra.mxu0 0.0
  %645 = vmatprep.subr.mxu0 0.0
  %646 = vmatpush1.msra.mxu0 0.0
  %647 = vmatprep.subr.mxu0 0.0
  %648 = vmatpush1.msra.mxu0 0.0
  %649 = vmatprep.mubr.f32.mxu0 0.0
  %650 = vmatmul.mubr.f32.gmra.mrb[0].mxu0 %v583
  %v651 = vpop.f32.mrb[0].mxu0
  %v652 = vadd.f32 0.0, %v651
  %v653 = vpop.f32.mrb[0].mxu0
  %v654 = vadd.f32 0.0, %v653
  %655 = vdwg.mxu0
  %656 = vmatprep.subr.mxu0 %v43
  %657 = vmatpush1.msra.mxu0 %v42
  %658 = vmatprep.subr.mxu0 %v47
  %659 = vmatpush1.msra.mxu0 %v46
  %660 = vmatprep.subr.mxu0 %v51
  %661 = vmatpush1.msra.mxu0 %v50
  %662 = vmatprep.subr.mxu0 %v55
  %663 = vmatpush1.msra.mxu0 %v54
  %664 = vmatprep.subr.mxu0 0.0
  %665 = vmatpush1.msra.mxu0 0.0
  %666 = vmatprep.subr.mxu0 0.0
  %667 = vmatpush1.msra.mxu0 0.0
  %668 = vmatprep.subr.mxu0 0.0
  %669 = vmatpush1.msra.mxu0 0.0
  %670 = vmatprep.subr.mxu0 0.0
  %671 = vmatpush1.msra.mxu0 0.0
  %672 = vmatprep.subr.mxu0 0.0
  %673 = vmatpush1.msra.mxu0 0.0
  %674 = vmatprep.subr.mxu0 0.0
  %675 = vmatpush1.msra.mxu0 0.0
  %676 = vmatprep.subr.mxu0 0.0
  %677 = vmatpush1.msra.mxu0 0.0
  %678 = vmatprep.subr.mxu0 0.0
  %679 = vmatpush1.msra.mxu0 0.0
  %680 = vmatprep.subr.mxu0 0.0
  %681 = vmatpush1.msra.mxu0 0.0
  %682 = vmatprep.subr.mxu0 0.0
  %683 = vmatpush1.msra.mxu0 0.0
  %684 = vmatprep.subr.mxu0 0.0
  %685 = vmatpush1.msra.mxu0 0.0
  %686 = vmatprep.subr.mxu0 0.0
  %687 = vmatpush1.msra.mxu0 0.0
  %688 = vmatprep.subr.mxu0 0.0
  %689 = vmatpush1.msra.mxu0 0.0
  %690 = vmatprep.subr.mxu0 0.0
  %691 = vmatpush1.msra.mxu0 0.0
  %692 = vmatprep.subr.mxu0 0.0
  %693 = vmatpush1.msra.mxu0 0.0
  %694 = vmatprep.subr.mxu0 0.0
  %695 = vmatpush1.msra.mxu0 0.0
  %696 = vmatprep.subr.mxu0 0.0
  %697 = vmatpush1.msra.mxu0 0.0
  %698 = vmatprep.subr.mxu0 0.0
  %699 = vmatpush1.msra.mxu0 0.0
  %700 = vmatprep.subr.mxu0 0.0
  %701 = vmatpush1.msra.mxu0 0.0
  %702 = vmatprep.subr.mxu0 0.0
  %703 = vmatpush1.msra.mxu0 0.0
  %704 = vmatprep.subr.mxu0 0.0
  %705 = vmatpush1.msra.mxu0 0.0
  %706 = vmatprep.subr.mxu0 0.0
  %707 = vmatpush1.msra.mxu0 0.0
  %708 = vmatprep.subr.mxu0 0.0
  %709 = vmatpush1.msra.mxu0 0.0
  %710 = vmatprep.subr.mxu0 0.0
  %711 = vmatpush1.msra.mxu0 0.0
  %712 = vmatprep.subr.mxu0 0.0
  %713 = vmatpush1.msra.mxu0 0.0
  %714 = vmatprep.subr.mxu0 0.0
  %715 = vmatpush1.msra.mxu0 0.0
  %716 = vmatprep.subr.mxu0 0.0
  %717 = vmatpush1.msra.mxu0 0.0
  %718 = vmatprep.subr.mxu0 0.0
  %719 = vmatpush1.msra.mxu0 0.0
  %720 = vmatprep.mubr.f32.mxu0 0.0
  %721 = vmatmul.mubr.f32.gmra.mrb[0].mxu0 %v583
  %v722 = vpop.f32.mrb[0].mxu0
  %v723 = vadd.f32 0.0, %v722
  %v724 = vpop.f32.mrb[0].mxu0
  %v725 = vadd.f32 0.0, %v724
  %726 = vdwg.mxu0
  %v727 = vadd.f32 %v578, %v652
  %v728 = vadd.f32 %v579, %v654
  %v729 = vadd.f32 %v580, %v723
  %v730 = vadd.f32 %v581, %v725
  %v731 = vmul.f32 %v727, 0.5
  %v732 = vtanh.pop %v731
  %v733 = vmul.f32 %v732, 0.5
  %v734 = vadd.f32 %v733, 0.5
  %v735 = vmul.f32 %v728, 0.5
  %v736 = vtanh.pop %v735
  %v737 = vmul.f32 %v736, 0.5
  %v738 = vadd.f32 %v737, 0.5
  %v739 = vtanh.pop %v729
  %v740 = vmul.f32 %v730, 0.5
  %v741 = vtanh.pop %v740
  %v742 = vmul.f32 %v741, 0.5
  %v743 = vadd.f32 %v742, 0.5
  %v744 = vmul.f32 %v738, %v572
  %v745 = vmul.f32 %v734, %v739
  %v746 = vadd.f32 %v744, %v745
  %v747 = vtanh.pop %v746
  %v748 = vmul.f32 %v743, %v747
  %s749 = smul.u32 2, 4
  %s750 = smul.addr %s749, 8
  %s751 = scalar_lea.vmem [#allocation2], %s750
  %v752 = vld [vmem:[%s751] sm:$0xff]
  %v753 = vld [vmem:[%s751 + $0x8] sm:$0xff]
  %v754 = vld [vmem:[%s751 + $0x10] sm:$0xff]
  %v755 = vld [vmem:[%s751 + $0x18] sm:$0xff]
  %v757 = vsel %vm407, %v748, 0
  %759 = vmatprep.subr.mxu0 %v41
  %760 = vmatpush1.msra.mxu0 %v40
  %761 = vmatprep.subr.mxu0 %v45
  %762 = vmatpush1.msra.mxu0 %v44
  %763 = vmatprep.subr.mxu0 %v49
  %764 = vmatpush1.msra.mxu0 %v48
  %765 = vmatprep.subr.mxu0 %v53
  %766 = vmatpush1.msra.mxu0 %v52
  %767 = vmatprep.subr.mxu0 0.0
  %768 = vmatpush1.msra.mxu0 0.0
  %769 = vmatprep.subr.mxu0 0.0
  %770 = vmatpush1.msra.mxu0 0.0
  %771 = vmatprep.subr.mxu0 0.0
  %772 = vmatpush1.msra.mxu0 0.0
  %773 = vmatprep.subr.mxu0 0.0
  %774 = vmatpush1.msra.mxu0 0.0
  %775 = vmatprep.subr.mxu0 0.0
  %776 = vmatpush1.msra.mxu0 0.0
  %777 = vmatprep.subr.mxu0 0.0
  %778 = vmatpush1.msra.mxu0 0.0
  %779 = vmatprep.subr.mxu0 0.0
  %780 = vmatpush1.msra.mxu0 0.0
  %781 = vmatprep.subr.mxu0 0.0
  %782 = vmatpush1.msra.mxu0 0.0
  %783 = vmatprep.subr.mxu0 0.0
  %784 = vmatpush1.msra.mxu0 0.0
  %785 = vmatprep.subr.mxu0 0.0
  %786 = vmatpush1.msra.mxu0 0.0
  %787 = vmatprep.subr.mxu0 0.0
  %788 = vmatpush1.msra.mxu0 0.0
  %789 = vmatprep.subr.mxu0 0.0
  %790 = vmatpush1.msra.mxu0 0.0
  %791 = vmatprep.subr.mxu0 0.0
  %792 = vmatpush1.msra.mxu0 0.0
  %793 = vmatprep.subr.mxu0 0.0
  %794 = vmatpush1.msra.mxu0 0.0
  %795 = vmatprep.subr.mxu0 0.0
  %796 = vmatpush1.msra.mxu0 0.0
  %797 = vmatprep.subr.mxu0 0.0
  %798 = vmatpush1.msra.mxu0 0.0
  %799 = vmatprep.subr.mxu0 0.0
  %800 = vmatpush1.msra.mxu0 0.0
  %801 = vmatprep.subr.mxu0 0.0
  %802 = vmatpush1.msra.mxu0 0.0
  %803 = vmatprep.subr.mxu0 0.0
  %804 = vmatpush1.msra.mxu0 0.0
  %805 = vmatprep.subr.mxu0 0.0
  %806 = vmatpush1.msra.mxu0 0.0
  %807 = vmatprep.subr.mxu0 0.0
  %808 = vmatpush1.msra.mxu0 0.0
  %809 = vmatprep.subr.mxu0 0.0
  %810 = vmatpush1.msra.mxu0 0.0
  %811 = vmatprep.subr.mxu0 0.0
  %812 = vmatpush1.msra.mxu0 0.0
  %813 = vmatprep.subr.mxu0 0.0
  %814 = vmatpush1.msra.mxu0 0.0
  %815 = vmatprep.subr.mxu0 0.0
  %816 = vmatpush1.msra.mxu0 0.0
  %817 = vmatprep.subr.mxu0 0.0
  %818 = vmatpush1.msra.mxu0 0.0
  %819 = vmatprep.subr.mxu0 0.0
  %820 = vmatpush1.msra.mxu0 0.0
  %821 = vmatprep.subr.mxu0 0.0
  %822 = vmatpush1.msra.mxu0 0.0
  %823 = vmatprep.mubr.f32.mxu0 0.0
  %824 = vmatmul.mubr.f32.gmra.mrb[0].mxu0 %v757
  %v825 = vpop.f32.mrb[0].mxu0
  %v826 = vadd.f32 0.0, %v825
  %v827 = vpop.f32.mrb[0].mxu0
  %v828 = vadd.f32 0.0, %v827
  %829 = vdwg.mxu0
  %830 = vmatprep.subr.mxu0 %v43
  %831 = vmatpush1.msra.mxu0 %v42
  %832 = vmatprep.subr.mxu0 %v47
  %833 = vmatpush1.msra.mxu0 %v46
  %834 = vmatprep.subr.mxu0 %v51
  %835 = vmatpush1.msra.mxu0 %v50
  %836 = vmatprep.subr.mxu0 %v55
  %837 = vmatpush1.msra.mxu0 %v54
  %838 = vmatprep.subr.mxu0 0.0
  %839 = vmatpush1.msra.mxu0 0.0
  %840 = vmatprep.subr.mxu0 0.0
  %841 = vmatpush1.msra.mxu0 0.0
  %842 = vmatprep.subr.mxu0 0.0
  %843 = vmatpush1.msra.mxu0 0.0
  %844 = vmatprep.subr.mxu0 0.0
  %845 = vmatpush1.msra.mxu0 0.0
  %846 = vmatprep.subr.mxu0 0.0
  %847 = vmatpush1.msra.mxu0 0.0
  %848 = vmatprep.subr.mxu0 0.0
  %849 = vmatpush1.msra.mxu0 0.0
  %850 = vmatprep.subr.mxu0 0.0
  %851 = vmatpush1.msra.mxu0 0.0
  %852 = vmatprep.subr.mxu0 0.0
  %853 = vmatpush1.msra.mxu0 0.0
  %854 = vmatprep.subr.mxu0 0.0
  %855 = vmatpush1.msra.mxu0 0.0
  %856 = vmatprep.subr.mxu0 0.0
  %857 = vmatpush1.msra.mxu0 0.0
  %858 = vmatprep.subr.mxu0 0.0
  %859 = vmatpush1.msra.mxu0 0.0
  %860 = vmatprep.subr.mxu0 0.0
  %861 = vmatpush1.msra.mxu0 0.0
  %862 = vmatprep.subr.mxu0 0.0
  %863 = vmatpush1.msra.mxu0 0.0
  %864 = vmatprep.subr.mxu0 0.0
  %865 = vmatpush1.msra.mxu0 0.0
  %866 = vmatprep.subr.mxu0 0.0
  %867 = vmatpush1.msra.mxu0 0.0
  %868 = vmatprep.subr.mxu0 0.0
  %869 = vmatpush1.msra.mxu0 0.0
  %870 = vmatprep.subr.mxu0 0.0
  %871 = vmatpush1.msra.mxu0 0.0
  %872 = vmatprep.subr.mxu0 0.0
  %873 = vmatpush1.msra.mxu0 0.0
  %874 = vmatprep.subr.mxu0 0.0
  %875 = vmatpush1.msra.mxu0 0.0
  %876 = vmatprep.subr.mxu0 0.0
  %877 = vmatpush1.msra.mxu0 0.0
  %878 = vmatprep.subr.mxu0 0.0
  %879 = vmatpush1.msra.mxu0 0.0
  %880 = vmatprep.subr.mxu0 0.0
  %881 = vmatpush1.msra.mxu0 0.0
  %882 = vmatprep.subr.mxu0 0.0
  %883 = vmatpush1.msra.mxu0 0.0
  %884 = vmatprep.subr.mxu0 0.0
  %885 = vmatpush1.msra.mxu0 0.0
  %886 = vmatprep.subr.mxu0 0.0
  %887 = vmatpush1.msra.mxu0 0.0
  %888 = vmatprep.subr.mxu0 0.0
  %889 = vmatpush1.msra.mxu0 0.0
  %890 = vmatprep.subr.mxu0 0.0
  %891 = vmatpush1.msra.mxu0 0.0
  %892 = vmatprep.subr.mxu0 0.0
  %893 = vmatpush1.msra.mxu0 0.0
  %894 = vmatprep.mubr.f32.mxu0 0.0
  %895 = vmatmul.mubr.f32.gmra.mrb[0].mxu0 %v757
  %v896 = vpop.f32.mrb[0].mxu0
  %v897 = vadd.f32 0.0, %v896
  %v898 = vpop.f32.mrb[0].mxu0
  %v899 = vadd.f32 0.0, %v898
  %900 = vdwg.mxu0
  %v901 = vadd.f32 %v752, %v826
  %v902 = vadd.f32 %v753, %v828
  %v903 = vadd.f32 %v754, %v897
  %v904 = vadd.f32 %v755, %v899
  %v905 = vmul.f32 %v901, 0.5
  %v906 = vtanh.pop %v905
  %v907 = vmul.f32 %v906, 0.5
  %v908 = vadd.f32 %v907, 0.5
  %v909 = vmul.f32 %v902, 0.5
  %v910 = vtanh.pop %v909
  %v911 = vmul.f32 %v910, 0.5
  %v912 = vadd.f32 %v911, 0.5
  %v913 = vtanh.pop %v903
  %v914 = vmul.f32 %v904, 0.5
  %v915 = vtanh.pop %v914
  %v916 = vmul.f32 %v915, 0.5
  %v917 = vadd.f32 %v916, 0.5
  %v918 = vmul.f32 %v912, %v746
  %v919 = vmul.f32 %v908, %v913
  %v920 = vadd.f32 %v918, %v919
  %v921 = vtanh.pop %v920
  %v922 = vmul.f32 %v917, %v921
  %s923 = smul.u32 3, 4
  %s924 = smul.addr %s923, 8
  %s925 = scalar_lea.vmem [#allocation2], %s924
  %v926 = vld [vmem:[%s925] sm:$0xff]
  %v927 = vld [vmem:[%s925 + $0x8] sm:$0xff]
  %v928 = vld [vmem:[%s925 + $0x10] sm:$0xff]
  %v929 = vld [vmem:[%s925 + $0x18] sm:$0xff]
  %v931 = vsel %vm407, %v922, 0
  %933 = vmatprep.subr.mxu0 %v41
  %934 = vmatpush1.msra.mxu0 %v40
  %935 = vmatprep.subr.mxu0 %v45
  %936 = vmatpush1.msra.mxu0 %v44
  %937 = vmatprep.subr.mxu0 %v49
  %938 = vmatpush1.msra.mxu0 %v48
  %939 = vmatprep.subr.mxu0 %v53
  %940 = vmatpush1.msra.mxu0 %v52
  %941 = vmatprep.subr.mxu0 0.0
  %942 = vmatpush1.msra.mxu0 0.0
  %943 = vmatprep.subr.mxu0 0.0
  %944 = vmatpush1.msra.mxu0 0.0
  %945 = vmatprep.subr.mxu0 0.0
  %946 = vmatpush1.msra.mxu0 0.0
  %947 = vmatprep.subr.mxu0 0.0
  %948 = vmatpush1.msra.mxu0 0.0
  %949 = vmatprep.subr.mxu0 0.0
  %950 = vmatpush1.msra.mxu0 0.0
  %951 = vmatprep.subr.mxu0 0.0
  %952 = vmatpush1.msra.mxu0 0.0
  %953 = vmatprep.subr.mxu0 0.0
  %954 = vmatpush1.msra.mxu0 0.0
  %955 = vmatprep.subr.mxu0 0.0
  %956 = vmatpush1.msra.mxu0 0.0
  %957 = vmatprep.subr.mxu0 0.0
  %958 = vmatpush1.msra.mxu0 0.0
  %959 = vmatprep.subr.mxu0 0.0
  %960 = vmatpush1.msra.mxu0 0.0
  %961 = vmatprep.subr.mxu0 0.0
  %962 = vmatpush1.msra.mxu0 0.0
  %963 = vmatprep.subr.mxu0 0.0
  %964 = vmatpush1.msra.mxu0 0.0
  %965 = vmatprep.subr.mxu0 0.0
  %966 = vmatpush1.msra.mxu0 0.0
  %967 = vmatprep.subr.mxu0 0.0
  %968 = vmatpush1.msra.mxu0 0.0
  %969 = vmatprep.subr.mxu0 0.0
  %970 = vmatpush1.msra.mxu0 0.0
  %971 = vmatprep.subr.mxu0 0.0
  %972 = vmatpush1.msra.mxu0 0.0
  %973 = vmatprep.subr.mxu0 0.0
  %974 = vmatpush1.msra.mxu0 0.0
  %975 = vmatprep.subr.mxu0 0.0
  %976 = vmatpush1.msra.mxu0 0.0
  %977 = vmatprep.subr.mxu0 0.0
  %978 = vmatpush1.msra.mxu0 0.0
  %979 = vmatprep.subr.mxu0 0.0
  %980 = vmatpush1.msra.mxu0 0.0
  %981 = vmatprep.subr.mxu0 0.0
  %982 = vmatpush1.msra.mxu0 0.0
  %983 = vmatprep.subr.mxu0 0.0
  %984 = vmatpush1.msra.mxu0 0.0
  %985 = vmatprep.subr.mxu0 0.0
  %986 = vmatpush1.msra.mxu0 0.0
  %987 = vmatprep.subr.mxu0 0.0
  %988 = vmatpush1.msra.mxu0 0.0
  %989 = vmatprep.subr.mxu0 0.0
  %990 = vmatpush1.msra.mxu0 0.0
  %991 = vmatprep.subr.mxu0 0.0
  %992 = vmatpush1.msra.mxu0 0.0
  %993 = vmatprep.subr.mxu0 0.0
  %994 = vmatpush1.msra.mxu0 0.0
  %995 = vmatprep.subr.mxu0 0.0
  %996 = vmatpush1.msra.mxu0 0.0
  %997 = vmatprep.mubr.f32.mxu0 0.0
  %998 = vmatmul.mubr.f32.gmra.mrb[0].mxu0 %v931
  %v999 = vpop.f32.mrb[0].mxu0
  %v1000 = vadd.f32 0.0, %v999
  %v1001 = vpop.f32.mrb[0].mxu0
  %v1002 = vadd.f32 0.0, %v1001
  %1003 = vdwg.mxu0
  %1004 = vmatprep.subr.mxu0 %v43
  %1005 = vmatpush1.msra.mxu0 %v42
  %1006 = vmatprep.subr.mxu0 %v47
  %1007 = vmatpush1.msra.mxu0 %v46
  %1008 = vmatprep.subr.mxu0 %v51
  %1009 = vmatpush1.msra.mxu0 %v50
  %1010 = vmatprep.subr.mxu0 %v55
  %1011 = vmatpush1.msra.mxu0 %v54
  %1012 = vmatprep.subr.mxu0 0.0
  %1013 = vmatpush1.msra.mxu0 0.0
  %1014 = vmatprep.subr.mxu0 0.0
  %1015 = vmatpush1.msra.mxu0 0.0
  %1016 = vmatprep.subr.mxu0 0.0
  %1017 = vmatpush1.msra.mxu0 0.0
  %1018 = vmatprep.subr.mxu0 0.0
  %1019 = vmatpush1.msra.mxu0 0.0
  %1020 = vmatprep.subr.mxu0 0.0
  %1021 = vmatpush1.msra.mxu0 0.0
  %1022 = vmatprep.subr.mxu0 0.0
  %1023 = vmatpush1.msra.mxu0 0.0
  %1024 = vmatprep.subr.mxu0 0.0
  %1025 = vmatpush1.msra.mxu0 0.0
  %1026 = vmatprep.subr.mxu0 0.0
  %1027 = vmatpush1.msra.mxu0 0.0
  %1028 = vmatprep.subr.mxu0 0.0
  %1029 = vmatpush1.msra.mxu0 0.0
  %1030 = vmatprep.subr.mxu0 0.0
  %1031 = vmatpush1.msra.mxu0 0.0
  %1032 = vmatprep.subr.mxu0 0.0
  %1033 = vmatpush1.msra.mxu0 0.0
  %1034 = vmatprep.subr.mxu0 0.0
  %1035 = vmatpush1.msra.mxu0 0.0
  %1036 = vmatprep.subr.mxu0 0.0
  %1037 = vmatpush1.msra.mxu0 0.0
  %1038 = vmatprep.subr.mxu0 0.0
  %1039 = vmatpush1.msra.mxu0 0.0
  %1040 = vmatprep.subr.mxu0 0.0
  %1041 = vmatpush1.msra.mxu0 0.0
  %1042 = vmatprep.subr.mxu0 0.0
  %1043 = vmatpush1.msra.mxu0 0.0
  %1044 = vmatprep.subr.mxu0 0.0
  %1045 = vmatpush1.msra.mxu0 0.0
  %1046 = vmatprep.subr.mxu0 0.0
  %1047 = vmatpush1.msra.mxu0 0.0
  %1048 = vmatprep.subr.mxu0 0.0
  %1049 = vmatpush1.msra.mxu0 0.0
  %1050 = vmatprep.subr.mxu0 0.0
  %1051 = vmatpush1.msra.mxu0 0.0
  %1052 = vmatprep.subr.mxu0 0.0
  %1053 = vmatpush1.msra.mxu0 0.0
  %1054 = vmatprep.subr.mxu0 0.0
  %1055 = vmatpush1.msra.mxu0 0.0
  %1056 = vmatprep.subr.mxu0 0.0
  %1057 = vmatpush1.msra.mxu0 0.0
  %1058 = vmatprep.subr.mxu0 0.0
  %1059 = vmatpush1.msra.mxu0 0.0
  %1060 = vmatprep.subr.mxu0 0.0
  %1061 = vmatpush1.msra.mxu0 0.0
  %1062 = vmatprep.subr.mxu0 0.0
  %1063 = vmatpush1.msra.mxu0 0.0
  %1064 = vmatprep.subr.mxu0 0.0
  %1065 = vmatpush1.msra.mxu0 0.0
  %1066 = vmatprep.subr.mxu0 0.0
  %1067 = vmatpush1.msra.mxu0 0.0
  %1068 = vmatprep.mubr.f32.mxu0 0.0
  %1069 = vmatmul.mubr.f32.gmra.mrb[0].mxu0 %v931
  %v1070 = vpop.f32.mrb[0].mxu0
  %v1071 = vadd.f32 0.0, %v1070
  %v1072 = vpop.f32.mrb[0].mxu0
  %v1073 = vadd.f32 0.0, %v1072
  %1074 = vdwg.mxu0
  %v1075 = vadd.f32 %v926, %v1000
  %v1076 = vadd.f32 %v927, %v1002
  %v1077 = vadd.f32 %v928, %v1071
  %v1078 = vadd.f32 %v929, %v1073
  %v1079 = vmul.f32 %v1075, 0.5
  %v1080 = vtanh.pop %v1079
  %v1081 = vmul.f32 %v1080, 0.5
  %v1082 = vadd.f32 %v1081, 0.5
  %v1083 = vmul.f32 %v1076, 0.5
  %v1084 = vtanh.pop %v1083
  %v1085 = vmul.f32 %v1084, 0.5
  %v1086 = vadd.f32 %v1085, 0.5
  %v1087 = vtanh.pop %v1077
  %v1088 = vmul.f32 %v1078, 0.5
  %v1089 = vtanh.pop %v1088
  %v1090 = vmul.f32 %v1089, 0.5
  %v1091 = vadd.f32 %v1090, 0.5
  %v1092 = vmul.f32 %v1086, %v920
  %v1093 = vmul.f32 %v1082, %v1087
  %v1094 = vadd.f32 %v1092, %v1093
  %v1095 = vtanh.pop %v1094
  %v1096 = vmul.f32 %v1091, %v1095
  %s1097 = smul.u32 4, 4
  %s1098 = smul.addr %s1097, 8
  %s1099 = scalar_lea.vmem [#allocation2], %s1098
  %v1100 = vld [vmem:[%s1099] sm:$0xff]
  %v1101 = vld [vmem:[%s1099 + $0x8] sm:$0xff]
  %v1102 = vld [vmem:[%s1099 + $0x10] sm:$0xff]
  %v1103 = vld [vmem:[%s1099 + $0x18] sm:$0xff]
  %v1105 = vsel %vm407, %v1096, 0
  %1107 = vmatprep.subr.mxu0 %v41
  %1108 = vmatpush1.msra.mxu0 %v40
  %1109 = vmatprep.subr.mxu0 %v45
  %1110 = vmatpush1.msra.mxu0 %v44
  %1111 = vmatprep.subr.mxu0 %v49
  %1112 = vmatpush1.msra.mxu0 %v48
  %1113 = vmatprep.subr.mxu0 %v53
  %1114 = vmatpush1.msra.mxu0 %v52
  %1115 = vmatprep.subr.mxu0 0.0
  %1116 = vmatpush1.msra.mxu0 0.0
  %1117 = vmatprep.subr.mxu0 0.0
  %1118 = vmatpush1.msra.mxu0 0.0
  %1119 = vmatprep.subr.mxu0 0.0
  %1120 = vmatpush1.msra.mxu0 0.0
  %1121 = vmatprep.subr.mxu0 0.0
  %1122 = vmatpush1.msra.mxu0 0.0
  %1123 = vmatprep.subr.mxu0 0.0
  %1124 = vmatpush1.msra.mxu0 0.0
  %1125 = vmatprep.subr.mxu0 0.0
  %1126 = vmatpush1.msra.mxu0 0.0
  %1127 = vmatprep.subr.mxu0 0.0
  %1128 = vmatpush1.msra.mxu0 0.0
  %1129 = vmatprep.subr.mxu0 0.0
  %1130 = vmatpush1.msra.mxu0 0.0
  %1131 = vmatprep.subr.mxu0 0.0
  %1132 = vmatpush1.msra.mxu0 0.0
  %1133 = vmatprep.subr.mxu0 0.0
  %1134 = vmatpush1.msra.mxu0 0.0
  %1135 = vmatprep.subr.mxu0 0.0
  %1136 = vmatpush1.msra.mxu0 0.0
  %1137 = vmatprep.subr.mxu0 0.0
  %1138 = vmatpush1.msra.mxu0 0.0
  %1139 = vmatprep.subr.mxu0 0.0
  %1140 = vmatpush1.msra.mxu0 0.0
  %1141 = vmatprep.subr.mxu0 0.0
  %1142 = vmatpush1.msra.mxu0 0.0
  %1143 = vmatprep.subr.mxu0 0.0
  %1144 = vmatpush1.msra.mxu0 0.0
  %1145 = vmatprep.subr.mxu0 0.0
  %1146 = vmatpush1.msra.mxu0 0.0
  %1147 = vmatprep.subr.mxu0 0.0
  %1148 = vmatpush1.msra.mxu0 0.0
  %1149 = vmatprep.subr.mxu0 0.0
  %1150 = vmatpush1.msra.mxu0 0.0
  %1151 = vmatprep.subr.mxu0 0.0
  %1152 = vmatpush1.msra.mxu0 0.0
  %1153 = vmatprep.subr.mxu0 0.0
  %1154 = vmatpush1.msra.mxu0 0.0
  %1155 = vmatprep.subr.mxu0 0.0
  %1156 = vmatpush1.msra.mxu0 0.0
  %1157 = vmatprep.subr.mxu0 0.0
  %1158 = vmatpush1.msra.mxu0 0.0
  %1159 = vmatprep.subr.mxu0 0.0
  %1160 = vmatpush1.msra.mxu0 0.0
  %1161 = vmatprep.subr.mxu0 0.0
  %1162 = vmatpush1.msra.mxu0 0.0
  %1163 = vmatprep.subr.mxu0 0.0
  %1164 = vmatpush1.msra.mxu0 0.0
  %1165 = vmatprep.subr.mxu0 0.0
  %1166 = vmatpush1.msra.mxu0 0.0
  %1167 = vmatprep.subr.mxu0 0.0
  %1168 = vmatpush1.msra.mxu0 0.0
  %1169 = vmatprep.subr.mxu0 0.0
  %1170 = vmatpush1.msra.mxu0 0.0
  %1171 = vmatprep.mubr.f32.mxu0 0.0
  %1172 = vmatmul.mubr.f32.gmra.mrb[0].mxu0 %v1105
  %v1173 = vpop.f32.mrb[0].mxu0
  %v1174 = vadd.f32 0.0, %v1173
  %v1175 = vpop.f32.mrb[0].mxu0
  %v1176 = vadd.f32 0.0, %v1175
  %1177 = vdwg.mxu0
  %1178 = vmatprep.subr.mxu0 %v43
  %1179 = vmatpush1.msra.mxu0 %v42
  %1180 = vmatprep.subr.mxu0 %v47
  %1181 = vmatpush1.msra.mxu0 %v46
  %1182 = vmatprep.subr.mxu0 %v51
  %1183 = vmatpush1.msra.mxu0 %v50
  %1184 = vmatprep.subr.mxu0 %v55
  %1185 = vmatpush1.msra.mxu0 %v54
  %1186 = vmatprep.subr.mxu0 0.0
  %1187 = vmatpush1.msra.mxu0 0.0
  %1188 = vmatprep.subr.mxu0 0.0
  %1189 = vmatpush1.msra.mxu0 0.0
  %1190 = vmatprep.subr.mxu0 0.0
  %1191 = vmatpush1.msra.mxu0 0.0
  %1192 = vmatprep.subr.mxu0 0.0
  %1193 = vmatpush1.msra.mxu0 0.0
  %1194 = vmatprep.subr.mxu0 0.0
  %1195 = vmatpush1.msra.mxu0 0.0
  %1196 = vmatprep.subr.mxu0 0.0
  %1197 = vmatpush1.msra.mxu0 0.0
  %1198 = vmatprep.subr.mxu0 0.0
  %1199 = vmatpush1.msra.mxu0 0.0
  %1200 = vmatprep.subr.mxu0 0.0
  %1201 = vmatpush1.msra.mxu0 0.0
  %1202 = vmatprep.subr.mxu0 0.0
  %1203 = vmatpush1.msra.mxu0 0.0
  %1204 = vmatprep.subr.mxu0 0.0
  %1205 = vmatpush1.msra.mxu0 0.0
  %1206 = vmatprep.subr.mxu0 0.0
  %1207 = vmatpush1.msra.mxu0 0.0
  %1208 = vmatprep.subr.mxu0 0.0
  %1209 = vmatpush1.msra.mxu0 0.0
  %1210 = vmatprep.subr.mxu0 0.0
  %1211 = vmatpush1.msra.mxu0 0.0
  %1212 = vmatprep.subr.mxu0 0.0
  %1213 = vmatpush1.msra.mxu0 0.0
  %1214 = vmatprep.subr.mxu0 0.0
  %1215 = vmatpush1.msra.mxu0 0.0
  %1216 = vmatprep.subr.mxu0 0.0
  %1217 = vmatpush1.msra.mxu0 0.0
  %1218 = vmatprep.subr.mxu0 0.0
  %1219 = vmatpush1.msra.mxu0 0.0
  %1220 = vmatprep.subr.mxu0 0.0
  %1221 = vmatpush1.msra.mxu0 0.0
  %1222 = vmatprep.subr.mxu0 0.0
  %1223 = vmatpush1.msra.mxu0 0.0
  %1224 = vmatprep.subr.mxu0 0.0
  %1225 = vmatpush1.msra.mxu0 0.0
  %1226 = vmatprep.subr.mxu0 0.0
  %1227 = vmatpush1.msra.mxu0 0.0
  %1228 = vmatprep.subr.mxu0 0.0
  %1229 = vmatpush1.msra.mxu0 0.0
  %1230 = vmatprep.subr.mxu0 0.0
  %1231 = vmatpush1.msra.mxu0 0.0
  %1232 = vmatprep.subr.mxu0 0.0
  %1233 = vmatpush1.msra.mxu0 0.0
  %1234 = vmatprep.subr.mxu0 0.0
  %1235 = vmatpush1.msra.mxu0 0.0
  %1236 = vmatprep.subr.mxu0 0.0
  %1237 = vmatpush1.msra.mxu0 0.0
  %1238 = vmatprep.subr.mxu0 0.0
  %1239 = vmatpush1.msra.mxu0 0.0
  %1240 = vmatprep.subr.mxu0 0.0
  %1241 = vmatpush1.msra.mxu0 0.0
  %1242 = vmatprep.mubr.f32.mxu0 0.0
  %1243 = vmatmul.mubr.f32.gmra.mrb[0].mxu0 %v1105
  %v1244 = vpop.f32.mrb[0].mxu0
  %v1245 = vadd.f32 0.0, %v1244
  %v1246 = vpop.f32.mrb[0].mxu0
  %v1247 = vadd.f32 0.0, %v1246
  %1248 = vdwg.mxu0
  %v1249 = vadd.f32 %v1100, %v1174
  %v1250 = vadd.f32 %v1101, %v1176
  %v1251 = vadd.f32 %v1102, %v1245
  %v1252 = vadd.f32 %v1103, %v1247
  %v1253 = vmul.f32 %v1249, 0.5
  %v1254 = vtanh.pop %v1253
  %v1255 = vmul.f32 %v1254, 0.5
  %v1256 = vadd.f32 %v1255, 0.5
  %v1257 = vmul.f32 %v1250, 0.5
  %v1258 = vtanh.pop %v1257
  %v1259 = vmul.f32 %v1258, 0.5
  %v1260 = vadd.f32 %v1259, 0.5
  %v1261 = vtanh.pop %v1251
  %v1262 = vmul.f32 %v1252, 0.5
  %v1263 = vtanh.pop %v1262
  %v1264 = vmul.f32 %v1263, 0.5
  %v1265 = vadd.f32 %v1264, 0.5
  %v1266 = vmul.f32 %v1260, %v1094
  %v1267 = vmul.f32 %v1256, %v1261
  %v1268 = vadd.f32 %v1266, %v1267
  %v1269 = vtanh.pop %v1268
  %v1270 = vmul.f32 %v1265, %v1269
  %s1271 = smul.u32 5, 4
  %s1272 = smul.addr %s1271, 8
  %s1273 = scalar_lea.vmem [#allocation2], %s1272
  %v1274 = vld [vmem:[%s1273] sm:$0xff]
  %v1275 = vld [vmem:[%s1273 + $0x8] sm:$0xff]
  %v1276 = vld [vmem:[%s1273 + $0x10] sm:$0xff]
  %v1277 = vld [vmem:[%s1273 + $0x18] sm:$0xff]
  %v1279 = vsel %vm407, %v1270, 0
  %1281 = vmatprep.subr.mxu0 %v41
  %1282 = vmatpush1.msra.mxu0 %v40
  %1283 = vmatprep.subr.mxu0 %v45
  %1284 = vmatpush1.msra.mxu0 %v44
  %1285 = vmatprep.subr.mxu0 %v49
  %1286 = vmatpush1.msra.mxu0 %v48
  %1287 = vmatprep.subr.mxu0 %v53
  %1288 = vmatpush1.msra.mxu0 %v52
  %1289 = vmatprep.subr.mxu0 0.0
  %1290 = vmatpush1.msra.mxu0 0.0
  %1291 = vmatprep.subr.mxu0 0.0
  %1292 = vmatpush1.msra.mxu0 0.0
  %1293 = vmatprep.subr.mxu0 0.0
  %1294 = vmatpush1.msra.mxu0 0.0
  %1295 = vmatprep.subr.mxu0 0.0
  %1296 = vmatpush1.msra.mxu0 0.0
  %1297 = vmatprep.subr.mxu0 0.0
  %1298 = vmatpush1.msra.mxu0 0.0
  %1299 = vmatprep.subr.mxu0 0.0
  %1300 = vmatpush1.msra.mxu0 0.0
  %1301 = vmatprep.subr.mxu0 0.0
  %1302 = vmatpush1.msra.mxu0 0.0
  %1303 = vmatprep.subr.mxu0 0.0
  %1304 = vmatpush1.msra.mxu0 0.0
  %1305 = vmatprep.subr.mxu0 0.0
  %1306 = vmatpush1.msra.mxu0 0.0
  %1307 = vmatprep.subr.mxu0 0.0
  %1308 = vmatpush1.msra.mxu0 0.0
  %1309 = vmatprep.subr.mxu0 0.0
  %1310 = vmatpush1.msra.mxu0 0.0
  %1311 = vmatprep.subr.mxu0 0.0
  %1312 = vmatpush1.msra.mxu0 0.0
  %1313 = vmatprep.subr.mxu0 0.0
  %1314 = vmatpush1.msra.mxu0 0.0
  %1315 = vmatprep.subr.mxu0 0.0
  %1316 = vmatpush1.msra.mxu0 0.0
  %1317 = vmatprep.subr.mxu0 0.0
  %1318 = vmatpush1.msra.mxu0 0.0
  %1319 = vmatprep.subr.mxu0 0.0
  %1320 = vmatpush1.msra.mxu0 0.0
  %1321 = vmatprep.subr.mxu0 0.0
  %1322 = vmatpush1.msra.mxu0 0.0
  %1323 = vmatprep.subr.mxu0 0.0
  %1324 = vmatpush1.msra.mxu0 0.0
  %1325 = vmatprep.subr.mxu0 0.0
  %1326 = vmatpush1.msra.mxu0 0.0
  %1327 = vmatprep.subr.mxu0 0.0
  %1328 = vmatpush1.msra.mxu0 0.0
  %1329 = vmatprep.subr.mxu0 0.0
  %1330 = vmatpush1.msra.mxu0 0.0
  %1331 = vmatprep.subr.mxu0 0.0
  %1332 = vmatpush1.msra.mxu0 0.0
  %1333 = vmatprep.subr.mxu0 0.0
  %1334 = vmatpush1.msra.mxu0 0.0
  %1335 = vmatprep.subr.mxu0 0.0
  %1336 = vmatpush1.msra.mxu0 0.0
  %1337 = vmatprep.subr.mxu0 0.0
  %1338 = vmatpush1.msra.mxu0 0.0
  %1339 = vmatprep.subr.mxu0 0.0
  %1340 = vmatpush1.msra.mxu0 0.0
  %1341 = vmatprep.subr.mxu0 0.0
  %1342 = vmatpush1.msra.mxu0 0.0
  %1343 = vmatprep.subr.mxu0 0.0
  %1344 = vmatpush1.msra.mxu0 0.0
  %1345 = vmatprep.mubr.f32.mxu0 0.0
  %1346 = vmatmul.mubr.f32.gmra.mrb[0].mxu0 %v1279
  %v1347 = vpop.f32.mrb[0].mxu0
  %v1348 = vadd.f32 0.0, %v1347
  %v1349 = vpop.f32.mrb[0].mxu0
  %v1350 = vadd.f32 0.0, %v1349
  %1351 = vdwg.mxu0
  %1352 = vmatprep.subr.mxu0 %v43
  %1353 = vmatpush1.msra.mxu0 %v42
  %1354 = vmatprep.subr.mxu0 %v47
  %1355 = vmatpush1.msra.mxu0 %v46
  %1356 = vmatprep.subr.mxu0 %v51
  %1357 = vmatpush1.msra.mxu0 %v50
  %1358 = vmatprep.subr.mxu0 %v55
  %1359 = vmatpush1.msra.mxu0 %v54
  %1360 = vmatprep.subr.mxu0 0.0
  %1361 = vmatpush1.msra.mxu0 0.0
  %1362 = vmatprep.subr.mxu0 0.0
  %1363 = vmatpush1.msra.mxu0 0.0
  %1364 = vmatprep.subr.mxu0 0.0
  %1365 = vmatpush1.msra.mxu0 0.0
  %1366 = vmatprep.subr.mxu0 0.0
  %1367 = vmatpush1.msra.mxu0 0.0
  %1368 = vmatprep.subr.mxu0 0.0
  %1369 = vmatpush1.msra.mxu0 0.0
  %1370 = vmatprep.subr.mxu0 0.0
  %1371 = vmatpush1.msra.mxu0 0.0
  %1372 = vmatprep.subr.mxu0 0.0
  %1373 = vmatpush1.msra.mxu0 0.0
  %1374 = vmatprep.subr.mxu0 0.0
  %1375 = vmatpush1.msra.mxu0 0.0
  %1376 = vmatprep.subr.mxu0 0.0
  %1377 = vmatpush1.msra.mxu0 0.0
  %1378 = vmatprep.subr.mxu0 0.0
  %1379 = vmatpush1.msra.mxu0 0.0
  %1380 = vmatprep.subr.mxu0 0.0
  %1381 = vmatpush1.msra.mxu0 0.0
  %1382 = vmatprep.subr.mxu0 0.0
  %1383 = vmatpush1.msra.mxu0 0.0
  %1384 = vmatprep.subr.mxu0 0.0
  %1385 = vmatpush1.msra.mxu0 0.0
  %1386 = vmatprep.subr.mxu0 0.0
  %1387 = vmatpush1.msra.mxu0 0.0
  %1388 = vmatprep.subr.mxu0 0.0
  %1389 = vmatpush1.msra.mxu0 0.0
  %1390 = vmatprep.subr.mxu0 0.0
  %1391 = vmatpush1.msra.mxu0 0.0
  %1392 = vmatprep.subr.mxu0 0.0
  %1393 = vmatpush1.msra.mxu0 0.0
  %1394 = vmatprep.subr.mxu0 0.0
  %1395 = vmatpush1.msra.mxu0 0.0
  %1396 = vmatprep.subr.mxu0 0.0
  %1397 = vmatpush1.msra.mxu0 0.0
  %1398 = vmatprep.subr.mxu0 0.0
  %1399 = vmatpush1.msra.mxu0 0.0
  %1400 = vmatprep.subr.mxu0 0.0
  %1401 = vmatpush1.msra.mxu0 0.0
  %1402 = vmatprep.subr.mxu0 0.0
  %1403 = vmatpush1.msra.mxu0 0.0
  %1404 = vmatprep.subr.mxu0 0.0
  %1405 = vmatpush1.msra.mxu0 0.0
  %1406 = vmatprep.subr.mxu0 0.0
  %1407 = vmatpush1.msra.mxu0 0.0
  %1408 = vmatprep.subr.mxu0 0.0
  %1409 = vmatpush1.msra.mxu0 0.0
  %1410 = vmatprep.subr.mxu0 0.0
  %1411 = vmatpush1.msra.mxu0 0.0
  %1412 = vmatprep.subr.mxu0 0.0
  %1413 = vmatpush1.msra.mxu0 0.0
  %1414 = vmatprep.subr.mxu0 0.0
  %1415 = vmatpush1.msra.mxu0 0.0
  %1416 = vmatprep.mubr.f32.mxu0 0.0
  %1417 = vmatmul.mubr.f32.gmra.mrb[0].mxu0 %v1279
  %v1418 = vpop.f32.mrb[0].mxu0
  %v1419 = vadd.f32 0.0, %v1418
  %v1420 = vpop.f32.mrb[0].mxu0
  %v1421 = vadd.f32 0.0, %v1420
  %1422 = vdwg.mxu0
  %v1423 = vadd.f32 %v1274, %v1348
  %v1424 = vadd.f32 %v1275, %v1350
  %v1425 = vadd.f32 %v1276, %v1419
  %v1426 = vadd.f32 %v1277, %v1421
  %v1427 = vmul.f32 %v1423, 0.5
  %v1428 = vtanh.pop %v1427
  %v1429 = vmul.f32 %v1428, 0.5
  %v1430 = vadd.f32 %v1429, 0.5
  %v1431 = vmul.f32 %v1424, 0.5
  %v1432 = vtanh.pop %v1431
  %v1433 = vmul.f32 %v1432, 0.5
  %v1434 = vadd.f32 %v1433, 0.5
  %v1435 = vtanh.pop %v1425
  %v1436 = vmul.f32 %v1426, 0.5
  %v1437 = vtanh.pop %v1436
  %v1438 = vmul.f32 %v1437, 0.5
  %v1439 = vadd.f32 %v1438, 0.5
  %v1440 = vmul.f32 %v1434, %v1268
  %v1441 = vmul.f32 %v1430, %v1435
  %v1442 = vadd.f32 %v1440, %v1441
  %v1443 = vtanh.pop %v1442
  %v1444 = vmul.f32 %v1439, %v1443
  %s1445 = smul.u32 6, 4
  %s1446 = smul.addr %s1445, 8
  %s1447 = scalar_lea.vmem [#allocation2], %s1446
  %v1448 = vld [vmem:[%s1447] sm:$0xff]
  %v1449 = vld [vmem:[%s1447 + $0x8] sm:$0xff]
  %v1450 = vld [vmem:[%s1447 + $0x10] sm:$0xff]
  %v1451 = vld [vmem:[%s1447 + $0x18] sm:$0xff]
  %v1453 = vsel %vm407, %v1444, 0
  %1455 = vmatprep.subr.mxu0 %v41
  %1456 = vmatpush1.msra.mxu0 %v40
  %1457 = vmatprep.subr.mxu0 %v45
  %1458 = vmatpush1.msra.mxu0 %v44
  %1459 = vmatprep.subr.mxu0 %v49
  %1460 = vmatpush1.msra.mxu0 %v48
  %1461 = vmatprep.subr.mxu0 %v53
  %1462 = vmatpush1.msra.mxu0 %v52
  %1463 = vmatprep.subr.mxu0 0.0
  %1464 = vmatpush1.msra.mxu0 0.0
  %1465 = vmatprep.subr.mxu0 0.0
  %1466 = vmatpush1.msra.mxu0 0.0
  %1467 = vmatprep.subr.mxu0 0.0
  %1468 = vmatpush1.msra.mxu0 0.0
  %1469 = vmatprep.subr.mxu0 0.0
  %1470 = vmatpush1.msra.mxu0 0.0
  %1471 = vmatprep.subr.mxu0 0.0
  %1472 = vmatpush1.msra.mxu0 0.0
  %1473 = vmatprep.subr.mxu0 0.0
  %1474 = vmatpush1.msra.mxu0 0.0
  %1475 = vmatprep.subr.mxu0 0.0
  %1476 = vmatpush1.msra.mxu0 0.0
  %1477 = vmatprep.subr.mxu0 0.0
  %1478 = vmatpush1.msra.mxu0 0.0
  %1479 = vmatprep.subr.mxu0 0.0
  %1480 = vmatpush1.msra.mxu0 0.0
  %1481 = vmatprep.subr.mxu0 0.0
  %1482 = vmatpush1.msra.mxu0 0.0
  %1483 = vmatprep.subr.mxu0 0.0
  %1484 = vmatpush1.msra.mxu0 0.0
  %1485 = vmatprep.subr.mxu0 0.0
  %1486 = vmatpush1.msra.mxu0 0.0
  %1487 = vmatprep.subr.mxu0 0.0
  %1488 = vmatpush1.msra.mxu0 0.0
  %1489 = vmatprep.subr.mxu0 0.0
  %1490 = vmatpush1.msra.mxu0 0.0
  %1491 = vmatprep.subr.mxu0 0.0
  %1492 = vmatpush1.msra.mxu0 0.0
  %1493 = vmatprep.subr.mxu0 0.0
  %1494 = vmatpush1.msra.mxu0 0.0
  %1495 = vmatprep.subr.mxu0 0.0
  %1496 = vmatpush1.msra.mxu0 0.0
  %1497 = vmatprep.subr.mxu0 0.0
  %1498 = vmatpush1.msra.mxu0 0.0
  %1499 = vmatprep.subr.mxu0 0.0
  %1500 = vmatpush1.msra.mxu0 0.0
  %1501 = vmatprep.subr.mxu0 0.0
  %1502 = vmatpush1.msra.mxu0 0.0
  %1503 = vmatprep.subr.mxu0 0.0
  %1504 = vmatpush1.msra.mxu0 0.0
  %1505 = vmatprep.subr.mxu0 0.0
  %1506 = vmatpush1.msra.mxu0 0.0
  %1507 = vmatprep.subr.mxu0 0.0
  %1508 = vmatpush1.msra.mxu0 0.0
  %1509 = vmatprep.subr.mxu0 0.0
  %1510 = vmatpush1.msra.mxu0 0.0
  %1511 = vmatprep.subr.mxu0 0.0
  %1512 = vmatpush1.msra.mxu0 0.0
  %1513 = vmatprep.subr.mxu0 0.0
  %1514 = vmatpush1.msra.mxu0 0.0
  %1515 = vmatprep.subr.mxu0 0.0
  %1516 = vmatpush1.msra.mxu0 0.0
  %1517 = vmatprep.subr.mxu0 0.0
  %1518 = vmatpush1.msra.mxu0 0.0
  %1519 = vmatprep.mubr.f32.mxu0 0.0
  %1520 = vmatmul.mubr.f32.gmra.mrb[0].mxu0 %v1453
  %v1521 = vpop.f32.mrb[0].mxu0
  %v1522 = vadd.f32 0.0, %v1521
  %v1523 = vpop.f32.mrb[0].mxu0
  %v1524 = vadd.f32 0.0, %v1523
  %1525 = vdwg.mxu0
  %1526 = vmatprep.subr.mxu0 %v43
  %1527 = vmatpush1.msra.mxu0 %v42
  %1528 = vmatprep.subr.mxu0 %v47
  %1529 = vmatpush1.msra.mxu0 %v46
  %1530 = vmatprep.subr.mxu0 %v51
  %1531 = vmatpush1.msra.mxu0 %v50
  %1532 = vmatprep.subr.mxu0 %v55
  %1533 = vmatpush1.msra.mxu0 %v54
  %1534 = vmatprep.subr.mxu0 0.0
  %1535 = vmatpush1.msra.mxu0 0.0
  %1536 = vmatprep.subr.mxu0 0.0
  %1537 = vmatpush1.msra.mxu0 0.0
  %1538 = vmatprep.subr.mxu0 0.0
  %1539 = vmatpush1.msra.mxu0 0.0
  %1540 = vmatprep.subr.mxu0 0.0
  %1541 = vmatpush1.msra.mxu0 0.0
  %1542 = vmatprep.subr.mxu0 0.0
  %1543 = vmatpush1.msra.mxu0 0.0
  %1544 = vmatprep.subr.mxu0 0.0
  %1545 = vmatpush1.msra.mxu0 0.0
  %1546 = vmatprep.subr.mxu0 0.0
  %1547 = vmatpush1.msra.mxu0 0.0
  %1548 = vmatprep.subr.mxu0 0.0
  %1549 = vmatpush1.msra.mxu0 0.0
  %1550 = vmatprep.subr.mxu0 0.0
  %1551 = vmatpush1.msra.mxu0 0.0
  %1552 = vmatprep.subr.mxu0 0.0
  %1553 = vmatpush1.msra.mxu0 0.0
  %1554 = vmatprep.subr.mxu0 0.0
  %1555 = vmatpush1.msra.mxu0 0.0
  %1556 = vmatprep.subr.mxu0 0.0
  %1557 = vmatpush1.msra.mxu0 0.0
  %1558 = vmatprep.subr.mxu0 0.0
  %1559 = vmatpush1.msra.mxu0 0.0
  %1560 = vmatprep.subr.mxu0 0.0
  %1561 = vmatpush1.msra.mxu0 0.0
  %1562 = vmatprep.subr.mxu0 0.0
  %1563 = vmatpush1.msra.mxu0 0.0
  %1564 = vmatprep.subr.mxu0 0.0
  %1565 = vmatpush1.msra.mxu0 0.0
  %1566 = vmatprep.subr.mxu0 0.0
  %1567 = vmatpush1.msra.mxu0 0.0
  %1568 = vmatprep.subr.mxu0 0.0
  %1569 = vmatpush1.msra.mxu0 0.0
  %1570 = vmatprep.subr.mxu0 0.0
  %1571 = vmatpush1.msra.mxu0 0.0
  %1572 = vmatprep.subr.mxu0 0.0
  %1573 = vmatpush1.msra.mxu0 0.0
  %1574 = vmatprep.subr.mxu0 0.0
  %1575 = vmatpush1.msra.mxu0 0.0
  %1576 = vmatprep.subr.mxu0 0.0
  %1577 = vmatpush1.msra.mxu0 0.0
  %1578 = vmatprep.subr.mxu0 0.0
  %1579 = vmatpush1.msra.mxu0 0.0
  %1580 = vmatprep.subr.mxu0 0.0
  %1581 = vmatpush1.msra.mxu0 0.0
  %1582 = vmatprep.subr.mxu0 0.0
  %1583 = vmatpush1.msra.mxu0 0.0
  %1584 = vmatprep.subr.mxu0 0.0
  %1585 = vmatpush1.msra.mxu0 0.0
  %1586 = vmatprep.subr.mxu0 0.0
  %1587 = vmatpush1.msra.mxu0 0.0
  %1588 = vmatprep.subr.mxu0 0.0
  %1589 = vmatpush1.msra.mxu0 0.0
  %1590 = vmatprep.mubr.f32.mxu0 0.0
  %1591 = vmatmul.mubr.f32.gmra.mrb[0].mxu0 %v1453
  %v1592 = vpop.f32.mrb[0].mxu0
  %v1593 = vadd.f32 0.0, %v1592
  %v1594 = vpop.f32.mrb[0].mxu0
  %v1595 = vadd.f32 0.0, %v1594
  %1596 = vdwg.mxu0
  %v1597 = vadd.f32 %v1448, %v1522
  %v1598 = vadd.f32 %v1449, %v1524
  %v1599 = vadd.f32 %v1450, %v1593
  %v1600 = vadd.f32 %v1451, %v1595
  %v1601 = vmul.f32 %v1597, 0.5
  %v1602 = vtanh.pop %v1601
  %v1603 = vmul.f32 %v1602, 0.5
  %v1604 = vadd.f32 %v1603, 0.5
  %v1605 = vmul.f32 %v1598, 0.5
  %v1606 = vtanh.pop %v1605
  %v1607 = vmul.f32 %v1606, 0.5
  %v1608 = vadd.f32 %v1607, 0.5
  %v1609 = vtanh.pop %v1599
  %v1610 = vmul.f32 %v1600, 0.5
  %v1611 = vtanh.pop %v1610
  %v1612 = vmul.f32 %v1611, 0.5
  %v1613 = vadd.f32 %v1612, 0.5
  %v1614 = vmul.f32 %v1608, %v1442
  %v1615 = vmul.f32 %v1604, %v1609
  %v1616 = vadd.f32 %v1614, %v1615
  %v1617 = vtanh.pop %v1616
  %v1618 = vmul.f32 %v1613, %v1617
  %s1619 = smul.u32 7, 4
  %s1620 = smul.addr %s1619, 8
  %s1621 = scalar_lea.vmem [#allocation2], %s1620
  %v1622 = vld [vmem:[%s1621] sm:$0xff]
  %v1623 = vld [vmem:[%s1621 + $0x8] sm:$0xff]
  %v1624 = vld [vmem:[%s1621 + $0x10] sm:$0xff]
  %v1625 = vld [vmem:[%s1621 + $0x18] sm:$0xff]
  %v1627 = vsel %vm407, %v1618, 0
  %1629 = vmatprep.subr.mxu0 %v41
  %1630 = vmatpush1.msra.mxu0 %v40
  %1631 = vmatprep.subr.mxu0 %v45
  %1632 = vmatpush1.msra.mxu0 %v44
  %1633 = vmatprep.subr.mxu0 %v49
  %1634 = vmatpush1.msra.mxu0 %v48
  %1635 = vmatprep.subr.mxu0 %v53
  %1636 = vmatpush1.msra.mxu0 %v52
  %1637 = vmatprep.subr.mxu0 0.0
  %1638 = vmatpush1.msra.mxu0 0.0
  %1639 = vmatprep.subr.mxu0 0.0
  %1640 = vmatpush1.msra.mxu0 0.0
  %1641 = vmatprep.subr.mxu0 0.0
  %1642 = vmatpush1.msra.mxu0 0.0
  %1643 = vmatprep.subr.mxu0 0.0
  %1644 = vmatpush1.msra.mxu0 0.0
  %1645 = vmatprep.subr.mxu0 0.0
  %1646 = vmatpush1.msra.mxu0 0.0
  %1647 = vmatprep.subr.mxu0 0.0
  %1648 = vmatpush1.msra.mxu0 0.0
  %1649 = vmatprep.subr.mxu0 0.0
  %1650 = vmatpush1.msra.mxu0 0.0
  %1651 = vmatprep.subr.mxu0 0.0
  %1652 = vmatpush1.msra.mxu0 0.0
  %1653 = vmatprep.subr.mxu0 0.0
  %1654 = vmatpush1.msra.mxu0 0.0
  %1655 = vmatprep.subr.mxu0 0.0
  %1656 = vmatpush1.msra.mxu0 0.0
  %1657 = vmatprep.subr.mxu0 0.0
  %1658 = vmatpush1.msra.mxu0 0.0
  %1659 = vmatprep.subr.mxu0 0.0
  %1660 = vmatpush1.msra.mxu0 0.0
  %1661 = vmatprep.subr.mxu0 0.0
  %1662 = vmatpush1.msra.mxu0 0.0
  %1663 = vmatprep.subr.mxu0 0.0
  %1664 = vmatpush1.msra.mxu0 0.0
  %1665 = vmatprep.subr.mxu0 0.0
  %1666 = vmatpush1.msra.mxu0 0.0
  %1667 = vmatprep.subr.mxu0 0.0
  %1668 = vmatpush1.msra.mxu0 0.0
  %1669 = vmatprep.subr.mxu0 0.0
  %1670 = vmatpush1.msra.mxu0 0.0
  %1671 = vmatprep.subr.mxu0 0.0
  %1672 = vmatpush1.msra.mxu0 0.0
  %1673 = vmatprep.subr.mxu0 0.0
  %1674 = vmatpush1.msra.mxu0 0.0
  %1675 = vmatprep.subr.mxu0 0.0
  %1676 = vmatpush1.msra.mxu0 0.0
  %1677 = vmatprep.subr.mxu0 0.0
  %1678 = vmatpush1.msra.mxu0 0.0
  %1679 = vmatprep.subr.mxu0 0.0
  %1680 = vmatpush1.msra.mxu0 0.0
  %1681 = vmatprep.subr.mxu0 0.0
  %1682 = vmatpush1.msra.mxu0 0.0
  %1683 = vmatprep.subr.mxu0 0.0
  %1684 = vmatpush1.msra.mxu0 0.0
  %1685 = vmatprep.subr.mxu0 0.0
  %1686 = vmatpush1.msra.mxu0 0.0
  %1687 = vmatprep.subr.mxu0 0.0
  %1688 = vmatpush1.msra.mxu0 0.0
  %1689 = vmatprep.subr.mxu0 0.0
  %1690 = vmatpush1.msra.mxu0 0.0
  %1691 = vmatprep.subr.mxu0 0.0
  %1692 = vmatpush1.msra.mxu0 0.0
  %1693 = vmatprep.mubr.f32.mxu0 0.0
  %1694 = vmatmul.mubr.f32.gmra.mrb[0].mxu0 %v1627
  %v1695 = vpop.f32.mrb[0].mxu0
  %v1696 = vadd.f32 0.0, %v1695
  %v1697 = vpop.f32.mrb[0].mxu0
  %v1698 = vadd.f32 0.0, %v1697
  %1699 = vdwg.mxu0
  %1700 = vmatprep.subr.mxu0 %v43
  %1701 = vmatpush1.msra.mxu0 %v42
  %1702 = vmatprep.subr.mxu0 %v47
  %1703 = vmatpush1.msra.mxu0 %v46
  %1704 = vmatprep.subr.mxu0 %v51
  %1705 = vmatpush1.msra.mxu0 %v50
  %1706 = vmatprep.subr.mxu0 %v55
  %1707 = vmatpush1.msra.mxu0 %v54
  %1708 = vmatprep.subr.mxu0 0.0
  %1709 = vmatpush1.msra.mxu0 0.0
  %1710 = vmatprep.subr.mxu0 0.0
  %1711 = vmatpush1.msra.mxu0 0.0
  %1712 = vmatprep.subr.mxu0 0.0
  %1713 = vmatpush1.msra.mxu0 0.0
  %1714 = vmatprep.subr.mxu0 0.0
  %1715 = vmatpush1.msra.mxu0 0.0
  %1716 = vmatprep.subr.mxu0 0.0
  %1717 = vmatpush1.msra.mxu0 0.0
  %1718 = vmatprep.subr.mxu0 0.0
  %1719 = vmatpush1.msra.mxu0 0.0
  %1720 = vmatprep.subr.mxu0 0.0
  %1721 = vmatpush1.msra.mxu0 0.0
  %1722 = vmatprep.subr.mxu0 0.0
  %1723 = vmatpush1.msra.mxu0 0.0
  %1724 = vmatprep.subr.mxu0 0.0
  %1725 = vmatpush1.msra.mxu0 0.0
  %1726 = vmatprep.subr.mxu0 0.0
  %1727 = vmatpush1.msra.mxu0 0.0
  %1728 = vmatprep.subr.mxu0 0.0
  %1729 = vmatpush1.msra.mxu0 0.0
  %1730 = vmatprep.subr.mxu0 0.0
  %1731 = vmatpush1.msra.mxu0 0.0
  %1732 = vmatprep.subr.mxu0 0.0
  %1733 = vmatpush1.msra.mxu0 0.0
  %1734 = vmatprep.subr.mxu0 0.0
  %1735 = vmatpush1.msra.mxu0 0.0
  %1736 = vmatprep.subr.mxu0 0.0
  %1737 = vmatpush1.msra.mxu0 0.0
  %1738 = vmatprep.subr.mxu0 0.0
  %1739 = vmatpush1.msra.mxu0 0.0
  %1740 = vmatprep.subr.mxu0 0.0
  %1741 = vmatpush1.msra.mxu0 0.0
  %1742 = vmatprep.subr.mxu0 0.0
  %1743 = vmatpush1.msra.mxu0 0.0
  %1744 = vmatprep.subr.mxu0 0.0
  %1745 = vmatpush1.msra.mxu0 0.0
  %1746 = vmatprep.subr.mxu0 0.0
  %1747 = vmatpush1.msra.mxu0 0.0
  %1748 = vmatprep.subr.mxu0 0.0
  %1749 = vmatpush1.msra.mxu0 0.0
  %1750 = vmatprep.subr.mxu0 0.0
  %1751 = vmatpush1.msra.mxu0 0.0
  %1752 = vmatprep.subr.mxu0 0.0
  %1753 = vmatpush1.msra.mxu0 0.0
  %1754 = vmatprep.subr.mxu0 0.0
  %1755 = vmatpush1.msra.mxu0 0.0
  %1756 = vmatprep.subr.mxu0 0.0
  %1757 = vmatpush1.msra.mxu0 0.0
  %1758 = vmatprep.subr.mxu0 0.0
  %1759 = vmatpush1.msra.mxu0 0.0
  %1760 = vmatprep.subr.mxu0 0.0
  %1761 = vmatpush1.msra.mxu0 0.0
  %1762 = vmatprep.subr.mxu0 0.0
  %1763 = vmatpush1.msra.mxu0 0.0
  %1764 = vmatprep.mubr.f32.mxu0 0.0
  %1765 = vmatmul.mubr.f32.gmra.mrb[0].mxu0 %v1627
  %v1766 = vpop.f32.mrb[0].mxu0
  %v1767 = vadd.f32 0.0, %v1766
  %v1768 = vpop.f32.mrb[0].mxu0
  %v1769 = vadd.f32 0.0, %v1768
  %1770 = vdwg.mxu0
  %v1771 = vadd.f32 %v1622, %v1696
  %v1772 = vadd.f32 %v1623, %v1698
  %v1773 = vadd.f32 %v1624, %v1767
  %v1774 = vadd.f32 %v1625, %v1769
  %v1775 = vmul.f32 %v1771, 0.5
  %v1776 = vtanh.pop %v1775
  %v1777 = vmul.f32 %v1776, 0.5
  %v1778 = vadd.f32 %v1777, 0.5
  %v1779 = vmul.f32 %v1772, 0.5
  %v1780 = vtanh.pop %v1779
  %v1781 = vmul.f32 %v1780, 0.5
  %v1782 = vadd.f32 %v1781, 0.5
  %v1783 = vtanh.pop %v1773
  %v1784 = vmul.f32 %v1774, 0.5
  %v1785 = vtanh.pop %v1784
  %v1786 = vmul.f32 %v1785, 0.5
  %v1787 = vadd.f32 %v1786, 0.5
  %v1788 = vmul.f32 %v1782, %v1616
  %v1789 = vmul.f32 %v1778, %v1783
  %v1790 = vadd.f32 %v1788, %v1789
  %v1791 = vtanh.pop %v1790
  %v1792 = vmul.f32 %v1787, %v1791
  %1793 = vst.msk [vmem:[%s12] sm:$0xff] %vm407, %v1792
  %v1794 = vld [vmem:[%s4] sm:$0xff]
  %v1795 = vld [vmem:[%s4 + $0x8] sm:$0xff]
  %v1796 = vld [vmem:[%s4 + $0x10] sm:$0xff]
  %v1797 = vld [vmem:[%s4 + $0x18] sm:$0xff]
  %v1798 = vld [vmem:[%s4 + $0x20] sm:$0xff]
  %v1799 = vld [vmem:[%s4 + $0x28] sm:$0xff]
  %v1800 = vld [vmem:[%s4 + $0x30] sm:$0xff]
  %v1801 = vld [vmem:[%s4 + $0x38] sm:$0xff]
  %v1802 = vld [vmem:[%s4 + $0x40] sm:$0xff]
  %v1803 = vld [vmem:[%s4 + $0x48] sm:$0xff]
  %v1804 = vld [vmem:[%s4 + $0x50] sm:$0xff]
  %v1805 = vld [vmem:[%s4 + $0x58] sm:$0xff]
  %v1806 = vld [vmem:[%s4 + $0x60] sm:$0xff]
  %v1807 = vld [vmem:[%s4 + $0x68] sm:$0xff]
  %v1808 = vld [vmem:[%s4 + $0x70] sm:$0xff]
  %v1809 = vld [vmem:[%s4 + $0x78] sm:$0xff]
  %v1810 = vld [vmem:[%s6] sm:$0xf]
  %v1812 = vlaneseq
  %v1813 = vshrl.u32 %v1812, 7
  %v1814 = vsub.s32 0, %v1813
  %v1815 = vrot.slane %v1810, %v1814
  %v1816 = vlaneseq
  %v1817 = vshrl.u32 %v1816, 7
  %v1818 = vsub.s32 1, %v1817
  %v1819 = vrot.slane %v1810, %v1818
  %v1820 = vlaneseq
  %v1821 = vshrl.u32 %v1820, 7
  %v1822 = vsub.s32 2, %v1821
  %v1823 = vrot.slane %v1810, %v1822
  %v1824 = vlaneseq
  %v1825 = vshrl.u32 %v1824, 7
  %v1826 = vsub.s32 3, %v1825
  %v1827 = vrot.slane %v1810, %v1826
  %v1833 = vsel %vm407, %v1792, 0
  %1835 = vmatprep.subr.mxu0 %v1795
  %1836 = vmatpush1.msra.mxu0 %v1794
  %1837 = vmatprep.subr.mxu0 %v1799
  %1838 = vmatpush1.msra.mxu0 %v1798
  %1839 = vmatprep.subr.mxu0 %v1803
  %1840 = vmatpush1.msra.mxu0 %v1802
  %1841 = vmatprep.subr.mxu0 %v1807
  %1842 = vmatpush1.msra.mxu0 %v1806
  %1843 = vmatprep.subr.mxu0 0.0
  %1844 = vmatpush1.msra.mxu0 0.0
  %1845 = vmatprep.subr.mxu0 0.0
  %1846 = vmatpush1.msra.mxu0 0.0
  %1847 = vmatprep.subr.mxu0 0.0
  %1848 = vmatpush1.msra.mxu0 0.0
  %1849 = vmatprep.subr.mxu0 0.0
  %1850 = vmatpush1.msra.mxu0 0.0
  %1851 = vmatprep.subr.mxu0 0.0
  %1852 = vmatpush1.msra.mxu0 0.0
  %1853 = vmatprep.subr.mxu0 0.0
  %1854 = vmatpush1.msra.mxu0 0.0
  %1855 = vmatprep.subr.mxu0 0.0
  %1856 = vmatpush1.msra.mxu0 0.0
  %1857 = vmatprep.subr.mxu0 0.0
  %1858 = vmatpush1.msra.mxu0 0.0
  %1859 = vmatprep.subr.mxu0 0.0
  %1860 = vmatpush1.msra.mxu0 0.0
  %1861 = vmatprep.subr.mxu0 0.0
  %1862 = vmatpush1.msra.mxu0 0.0
  %1863 = vmatprep.subr.mxu0 0.0
  %1864 = vmatpush1.msra.mxu0 0.0
  %1865 = vmatprep.subr.mxu0 0.0
  %1866 = vmatpush1.msra.mxu0 0.0
  %1867 = vmatprep.subr.mxu0 0.0
  %1868 = vmatpush1.msra.mxu0 0.0
  %1869 = vmatprep.subr.mxu0 0.0
  %1870 = vmatpush1.msra.mxu0 0.0
  %1871 = vmatprep.subr.mxu0 0.0
  %1872 = vmatpush1.msra.mxu0 0.0
  %1873 = vmatprep.subr.mxu0 0.0
  %1874 = vmatpush1.msra.mxu0 0.0
  %1875 = vmatprep.subr.mxu0 0.0
  %1876 = vmatpush1.msra.mxu0 0.0
  %1877 = vmatprep.subr.mxu0 0.0
  %1878 = vmatpush1.msra.mxu0 0.0
  %1879 = vmatprep.subr.mxu0 0.0
  %1880 = vmatpush1.msra.mxu0 0.0
  %1881 = vmatprep.subr.mxu0 0.0
  %1882 = vmatpush1.msra.mxu0 0.0
  %1883 = vmatprep.subr.mxu0 0.0
  %1884 = vmatpush1.msra.mxu0 0.0
  %1885 = vmatprep.subr.mxu0 0.0
  %1886 = vmatpush1.msra.mxu0 0.0
  %1887 = vmatprep.subr.mxu0 0.0
  %1888 = vmatpush1.msra.mxu0 0.0
  %1889 = vmatprep.subr.mxu0 0.0
  %1890 = vmatpush1.msra.mxu0 0.0
  %1891 = vmatprep.subr.mxu0 0.0
  %1892 = vmatpush1.msra.mxu0 0.0
  %1893 = vmatprep.subr.mxu0 0.0
  %1894 = vmatpush1.msra.mxu0 0.0
  %1895 = vmatprep.subr.mxu0 0.0
  %1896 = vmatpush1.msra.mxu0 0.0
  %1897 = vmatprep.subr.mxu0 0.0
  %1898 = vmatpush1.msra.mxu0 0.0
  %1899 = vmatprep.mubr.f32.mxu0 0.0
  %1900 = vmatmul.mubr.f32.gmra.mrb[0].mxu0 %v1833
  %v1901 = vpop.f32.mrb[0].mxu0
  %v1902 = vadd.f32 %v1815, %v1901
  %v1903 = vpop.f32.mrb[0].mxu0
  %v1904 = vadd.f32 %v1819, %v1903
  %1905 = vdwg.mxu0
  %1906 = vmatprep.subr.mxu0 %v1797
  %1907 = vmatpush1.msra.mxu0 %v1796
  %1908 = vmatprep.subr.mxu0 %v1801
  %1909 = vmatpush1.msra.mxu0 %v1800
  %1910 = vmatprep.subr.mxu0 %v1805
  %1911 = vmatpush1.msra.mxu0 %v1804
  %1912 = vmatprep.subr.mxu0 %v1809
  %1913 = vmatpush1.msra.mxu0 %v1808
  %1914 = vmatprep.subr.mxu0 0.0
  %1915 = vmatpush1.msra.mxu0 0.0
  %1916 = vmatprep.subr.mxu0 0.0
  %1917 = vmatpush1.msra.mxu0 0.0
  %1918 = vmatprep.subr.mxu0 0.0
  %1919 = vmatpush1.msra.mxu0 0.0
  %1920 = vmatprep.subr.mxu0 0.0
  %1921 = vmatpush1.msra.mxu0 0.0
  %1922 = vmatprep.subr.mxu0 0.0
  %1923 = vmatpush1.msra.mxu0 0.0
  %1924 = vmatprep.subr.mxu0 0.0
  %1925 = vmatpush1.msra.mxu0 0.0
  %1926 = vmatprep.subr.mxu0 0.0
  %1927 = vmatpush1.msra.mxu0 0.0
  %1928 = vmatprep.subr.mxu0 0.0
  %1929 = vmatpush1.msra.mxu0 0.0
  %1930 = vmatprep.subr.mxu0 0.0
  %1931 = vmatpush1.msra.mxu0 0.0
  %1932 = vmatprep.subr.mxu0 0.0
  %1933 = vmatpush1.msra.mxu0 0.0
  %1934 = vmatprep.subr.mxu0 0.0
  %1935 = vmatpush1.msra.mxu0 0.0
  %1936 = vmatprep.subr.mxu0 0.0
  %1937 = vmatpush1.msra.mxu0 0.0
  %1938 = vmatprep.subr.mxu0 0.0
  %1939 = vmatpush1.msra.mxu0 0.0
  %1940 = vmatprep.subr.mxu0 0.0
  %1941 = vmatpush1.msra.mxu0 0.0
  %1942 = vmatprep.subr.mxu0 0.0
  %1943 = vmatpush1.msra.mxu0 0.0
  %1944 = vmatprep.subr.mxu0 0.0
  %1945 = vmatpush1.msra.mxu0 0.0
  %1946 = vmatprep.subr.mxu0 0.0
  %1947 = vmatpush1.msra.mxu0 0.0
  %1948 = vmatprep.subr.mxu0 0.0
  %1949 = vmatpush1.msra.mxu0 0.0
  %1950 = vmatprep.subr.mxu0 0.0
  %1951 = vmatpush1.msra.mxu0 0.0
  %1952 = vmatprep.subr.mxu0 0.0
  %1953 = vmatpush1.msra.mxu0 0.0
  %1954 = vmatprep.subr.mxu0 0.0
  %1955 = vmatpush1.msra.mxu0 0.0
  %1956 = vmatprep.subr.mxu0 0.0
  %1957 = vmatpush1.msra.mxu0 0.0
  %1958 = vmatprep.subr.mxu0 0.0
  %1959 = vmatpush1.msra.mxu0 0.0
  %1960 = vmatprep.subr.mxu0 0.0
  %1961 = vmatpush1.msra.mxu0 0.0
  %1962 = vmatprep.subr.mxu0 0.0
  %1963 = vmatpush1.msra.mxu0 0.0
  %1964 = vmatprep.subr.mxu0 0.0
  %1965 = vmatpush1.msra.mxu0 0.0
  %1966 = vmatprep.subr.mxu0 0.0
  %1967 = vmatpush1.msra.mxu0 0.0
  %1968 = vmatprep.subr.mxu0 0.0
  %1969 = vmatpush1.msra.mxu0 0.0
  %1970 = vmatprep.mubr.f32.mxu0 0.0
  %1971 = vmatmul.mubr.f32.gmra.mrb[0].mxu0 %v1833
  %v1972 = vpop.f32.mrb[0].mxu0
  %v1973 = vadd.f32 %v1823, %v1972
  %v1974 = vpop.f32.mrb[0].mxu0
  %v1975 = vadd.f32 %v1827, %v1974
  %1976 = vdwg.mxu0
  %1977 = vmatprep.subr.mxu0 %v57
  %1978 = vmatpush1.msra.mxu0 %v56
  %1979 = vmatprep.subr.mxu0 %v61
  %1980 = vmatpush1.msra.mxu0 %v60
  %1981 = vmatprep.subr.mxu0 %v65
  %1982 = vmatpush1.msra.mxu0 %v64
  %1983 = vmatprep.subr.mxu0 %v69
  %1984 = vmatpush1.msra.mxu0 %v68
  %1985 = vmatprep.subr.mxu0 0.0
  %1986 = vmatpush1.msra.mxu0 0.0
  %1987 = vmatprep.subr.mxu0 0.0
  %1988 = vmatpush1.msra.mxu0 0.0
  %1989 = vmatprep.subr.mxu0 0.0
  %1990 = vmatpush1.msra.mxu0 0.0
  %1991 = vmatprep.subr.mxu0 0.0
  %1992 = vmatpush1.msra.mxu0 0.0
  %1993 = vmatprep.subr.mxu0 0.0
  %1994 = vmatpush1.msra.mxu0 0.0
  %1995 = vmatprep.subr.mxu0 0.0
  %1996 = vmatpush1.msra.mxu0 0.0
  %1997 = vmatprep.subr.mxu0 0.0
  %1998 = vmatpush1.msra.mxu0 0.0
  %1999 = vmatprep.subr.mxu0 0.0
  %2000 = vmatpush1.msra.mxu0 0.0
  %2001 = vmatprep.subr.mxu0 0.0
  %2002 = vmatpush1.msra.mxu0 0.0
  %2003 = vmatprep.subr.mxu0 0.0
  %2004 = vmatpush1.msra.mxu0 0.0
  %2005 = vmatprep.subr.mxu0 0.0
  %2006 = vmatpush1.msra.mxu0 0.0
  %2007 = vmatprep.subr.mxu0 0.0
  %2008 = vmatpush1.msra.mxu0 0.0
  %2009 = vmatprep.subr.mxu0 0.0
  %2010 = vmatpush1.msra.mxu0 0.0
  %2011 = vmatprep.subr.mxu0 0.0
  %2012 = vmatpush1.msra.mxu0 0.0
  %2013 = vmatprep.subr.mxu0 0.0
  %2014 = vmatpush1.msra.mxu0 0.0
  %2015 = vmatprep.subr.mxu0 0.0
  %2016 = vmatpush1.msra.mxu0 0.0
  %2017 = vmatprep.subr.mxu0 0.0
  %2018 = vmatpush1.msra.mxu0 0.0
  %2019 = vmatprep.subr.mxu0 0.0
  %2020 = vmatpush1.msra.mxu0 0.0
  %2021 = vmatprep.subr.mxu0 0.0
  %2022 = vmatpush1.msra.mxu0 0.0
  %2023 = vmatprep.subr.mxu0 0.0
  %2024 = vmatpush1.msra.mxu0 0.0
  %2025 = vmatprep.subr.mxu0 0.0
  %2026 = vmatpush1.msra.mxu0 0.0
  %2027 = vmatprep.subr.mxu0 0.0
  %2028 = vmatpush1.msra.mxu0 0.0
  %2029 = vmatprep.subr.mxu0 0.0
  %2030 = vmatpush1.msra.mxu0 0.0
  %2031 = vmatprep.subr.mxu0 0.0
  %2032 = vmatpush1.msra.mxu0 0.0
  %2033 = vmatprep.subr.mxu0 0.0
  %2034 = vmatpush1.msra.mxu0 0.0
  %2035 = vmatprep.subr.mxu0 0.0
  %2036 = vmatpush1.msra.mxu0 0.0
  %2037 = vmatprep.subr.mxu0 0.0
  %2038 = vmatpush1.msra.mxu0 0.0
  %2039 = vmatprep.subr.mxu0 0.0
  %2040 = vmatpush1.msra.mxu0 0.0
  %2041 = vmatprep.mubr.f32.mxu0 0.0
  %2042 = vmatmul.mubr.f32.gmra.mrb[0].mxu0 %v409
  %v2043 = vpop.f32.mrb[0].mxu0
  %v2044 = vadd.f32 0.0, %v2043
  %v2045 = vpop.f32.mrb[0].mxu0
  %v2046 = vadd.f32 0.0, %v2045
  %2047 = vdwg.mxu0
  %2048 = vmatprep.subr.mxu0 %v59
  %2049 = vmatpush1.msra.mxu0 %v58
  %2050 = vmatprep.subr.mxu0 %v63
  %2051 = vmatpush1.msra.mxu0 %v62
  %2052 = vmatprep.subr.mxu0 %v67
  %2053 = vmatpush1.msra.mxu0 %v66
  %2054 = vmatprep.subr.mxu0 %v71
  %2055 = vmatpush1.msra.mxu0 %v70
  %2056 = vmatprep.subr.mxu0 0.0
  %2057 = vmatpush1.msra.mxu0 0.0
  %2058 = vmatprep.subr.mxu0 0.0
  %2059 = vmatpush1.msra.mxu0 0.0
  %2060 = vmatprep.subr.mxu0 0.0
  %2061 = vmatpush1.msra.mxu0 0.0
  %2062 = vmatprep.subr.mxu0 0.0
  %2063 = vmatpush1.msra.mxu0 0.0
  %2064 = vmatprep.subr.mxu0 0.0
  %2065 = vmatpush1.msra.mxu0 0.0
  %2066 = vmatprep.subr.mxu0 0.0
  %2067 = vmatpush1.msra.mxu0 0.0
  %2068 = vmatprep.subr.mxu0 0.0
  %2069 = vmatpush1.msra.mxu0 0.0
  %2070 = vmatprep.subr.mxu0 0.0
  %2071 = vmatpush1.msra.mxu0 0.0
  %2072 = vmatprep.subr.mxu0 0.0
  %2073 = vmatpush1.msra.mxu0 0.0
  %2074 = vmatprep.subr.mxu0 0.0
  %2075 = vmatpush1.msra.mxu0 0.0
  %2076 = vmatprep.subr.mxu0 0.0
  %2077 = vmatpush1.msra.mxu0 0.0
  %2078 = vmatprep.subr.mxu0 0.0
  %2079 = vmatpush1.msra.mxu0 0.0
  %2080 = vmatprep.subr.mxu0 0.0
  %2081 = vmatpush1.msra.mxu0 0.0
  %2082 = vmatprep.subr.mxu0 0.0
  %2083 = vmatpush1.msra.mxu0 0.0
  %2084 = vmatprep.subr.mxu0 0.0
  %2085 = vmatpush1.msra.mxu0 0.0
  %2086 = vmatprep.subr.mxu0 0.0
  %2087 = vmatpush1.msra.mxu0 0.0
  %2088 = vmatprep.subr.mxu0 0.0
  %2089 = vmatpush1.msra.mxu0 0.0
  %2090 = vmatprep.subr.mxu0 0.0
  %2091 = vmatpush1.msra.mxu0 0.0
  %2092 = vmatprep.subr.mxu0 0.0
  %2093 = vmatpush1.msra.mxu0 0.0
  %2094 = vmatprep.subr.mxu0 0.0
  %2095 = vmatpush1.msra.mxu0 0.0
  %2096 = vmatprep.subr.mxu0 0.0
  %2097 = vmatpush1.msra.mxu0 0.0
  %2098 = vmatprep.subr.mxu0 0.0
  %2099 = vmatpush1.msra.mxu0 0.0
  %2100 = vmatprep.subr.mxu0 0.0
  %2101 = vmatpush1.msra.mxu0 0.0
  %2102 = vmatprep.subr.mxu0 0.0
  %2103 = vmatpush1.msra.mxu0 0.0
  %2104 = vmatprep.subr.mxu0 0.0
  %2105 = vmatpush1.msra.mxu0 0.0
  %2106 = vmatprep.subr.mxu0 0.0
  %2107 = vmatpush1.msra.mxu0 0.0
  %2108 = vmatprep.subr.mxu0 0.0
  %2109 = vmatpush1.msra.mxu0 0.0
  %2110 = vmatprep.subr.mxu0 0.0
  %2111 = vmatpush1.msra.mxu0 0.0
  %2112 = vmatprep.mubr.f32.mxu0 0.0
  %2113 = vmatmul.mubr.f32.gmra.mrb[0].mxu0 %v409
  %v2114 = vpop.f32.mrb[0].mxu0
  %v2115 = vadd.f32 0.0, %v2114
  %v2116 = vpop.f32.mrb[0].mxu0
  %v2117 = vadd.f32 0.0, %v2116
  %2118 = vdwg.mxu0
  %v2119 = vadd.f32 %v1902, %v2044
  %v2120 = vadd.f32 %v1904, %v2046
  %v2121 = vadd.f32 %v1973, %v2115
  %v2122 = vadd.f32 %v1975, %v2117
  %v2123 = vmul.f32 %v2119, 0.5
  %v2124 = vtanh.pop %v2123
  %v2125 = vmul.f32 %v2124, 0.5
  %v2126 = vadd.f32 %v2125, 0.5
  %v2127 = vmul.f32 %v2120, 0.5
  %v2128 = vtanh.pop %v2127
  %v2129 = vmul.f32 %v2128, 0.5
  %v2130 = vadd.f32 %v2129, 0.5
  %v2131 = vtanh.pop %v2121
  %v2132 = vmul.f32 %v2122, 0.5
  %v2133 = vtanh.pop %v2132
  %v2134 = vmul.f32 %v2133, 0.5
  %v2135 = vadd.f32 %v2134, 0.5
  %v2136 = vmul.f32 %v2130, 0.0
  %v2137 = vmul.f32 %v2126, %v2131
  %v2138 = vadd.f32 %v2136, %v2137
  %v2139 = vtanh.pop %v2138
  %v2140 = vmul.f32 %v2135, %v2139
  %2141 = vst.msk [vmem:[#allocation3] sm:$0xff] %vm407, %v2140
  %v2143 = vsel %vm407, %v2140, 0
  %2145 = vmatprep.subr.mxu0 %v57
  %2146 = vmatpush1.msra.mxu0 %v56
  %2147 = vmatprep.subr.mxu0 %v61
  %2148 = vmatpush1.msra.mxu0 %v60
  %2149 = vmatprep.subr.mxu0 %v65
  %2150 = vmatpush1.msra.mxu0 %v64
  %2151 = vmatprep.subr.mxu0 %v69
  %2152 = vmatpush1.msra.mxu0 %v68
  %2153 = vmatprep.subr.mxu0 0.0
  %2154 = vmatpush1.msra.mxu0 0.0
  %2155 = vmatprep.subr.mxu0 0.0
  %2156 = vmatpush1.msra.mxu0 0.0
  %2157 = vmatprep.subr.mxu0 0.0
  %2158 = vmatpush1.msra.mxu0 0.0
  %2159 = vmatprep.subr.mxu0 0.0
  %2160 = vmatpush1.msra.mxu0 0.0
  %2161 = vmatprep.subr.mxu0 0.0
  %2162 = vmatpush1.msra.mxu0 0.0
  %2163 = vmatprep.subr.mxu0 0.0
  %2164 = vmatpush1.msra.mxu0 0.0
  %2165 = vmatprep.subr.mxu0 0.0
  %2166 = vmatpush1.msra.mxu0 0.0
  %2167 = vmatprep.subr.mxu0 0.0
  %2168 = vmatpush1.msra.mxu0 0.0
  %2169 = vmatprep.subr.mxu0 0.0
  %2170 = vmatpush1.msra.mxu0 0.0
  %2171 = vmatprep.subr.mxu0 0.0
  %2172 = vmatpush1.msra.mxu0 0.0
  %2173 = vmatprep.subr.mxu0 0.0
  %2174 = vmatpush1.msra.mxu0 0.0
  %2175 = vmatprep.subr.mxu0 0.0
  %2176 = vmatpush1.msra.mxu0 0.0
  %2177 = vmatprep.subr.mxu0 0.0
  %2178 = vmatpush1.msra.mxu0 0.0
  %2179 = vmatprep.subr.mxu0 0.0
  %2180 = vmatpush1.msra.mxu0 0.0
  %2181 = vmatprep.subr.mxu0 0.0
  %2182 = vmatpush1.msra.mxu0 0.0
  %2183 = vmatprep.subr.mxu0 0.0
  %2184 = vmatpush1.msra.mxu0 0.0
  %2185 = vmatprep.subr.mxu0 0.0
  %2186 = vmatpush1.msra.mxu0 0.0
  %2187 = vmatprep.subr.mxu0 0.0
  %2188 = vmatpush1.msra.mxu0 0.0
  %2189 = vmatprep.subr.mxu0 0.0
  %2190 = vmatpush1.msra.mxu0 0.0
  %2191 = vmatprep.subr.mxu0 0.0
  %2192 = vmatpush1.msra.mxu0 0.0
  %2193 = vmatprep.subr.mxu0 0.0
  %2194 = vmatpush1.msra.mxu0 0.0
  %2195 = vmatprep.subr.mxu0 0.0
  %2196 = vmatpush1.msra.mxu0 0.0
  %2197 = vmatprep.subr.mxu0 0.0
  %2198 = vmatpush1.msra.mxu0 0.0
  %2199 = vmatprep.subr.mxu0 0.0
  %2200 = vmatpush1.msra.mxu0 0.0
  %2201 = vmatprep.subr.mxu0 0.0
  %2202 = vmatpush1.msra.mxu0 0.0
  %2203 = vmatprep.subr.mxu0 0.0
  %2204 = vmatpush1.msra.mxu0 0.0
  %2205 = vmatprep.subr.mxu0 0.0
  %2206 = vmatpush1.msra.mxu0 0.0
  %2207 = vmatprep.subr.mxu0 0.0
  %2208 = vmatpush1.msra.mxu0 0.0
  %2209 = vmatprep.mubr.f32.mxu0 0.0
  %2210 = vmatmul.mubr.f32.gmra.mrb[0].mxu0 %v2143
  %v2211 = vpop.f32.mrb[0].mxu0
  %v2212 = vadd.f32 0.0, %v2211
  %v2213 = vpop.f32.mrb[0].mxu0
  %v2214 = vadd.f32 0.0, %v2213
  %2215 = vdwg.mxu0
  %2216 = vmatprep.subr.mxu0 %v59
  %2217 = vmatpush1.msra.mxu0 %v58
  %2218 = vmatprep.subr.mxu0 %v63
  %2219 = vmatpush1.msra.mxu0 %v62
  %2220 = vmatprep.subr.mxu0 %v67
  %2221 = vmatpush1.msra.mxu0 %v66
  %2222 = vmatprep.subr.mxu0 %v71
  %2223 = vmatpush1.msra.mxu0 %v70
  %2224 = vmatprep.subr.mxu0 0.0
  %2225 = vmatpush1.msra.mxu0 0.0
  %2226 = vmatprep.subr.mxu0 0.0
  %2227 = vmatpush1.msra.mxu0 0.0
  %2228 = vmatprep.subr.mxu0 0.0
  %2229 = vmatpush1.msra.mxu0 0.0
  %2230 = vmatprep.subr.mxu0 0.0
  %2231 = vmatpush1.msra.mxu0 0.0
  %2232 = vmatprep.subr.mxu0 0.0
  %2233 = vmatpush1.msra.mxu0 0.0
  %2234 = vmatprep.subr.mxu0 0.0
  %2235 = vmatpush1.msra.mxu0 0.0
  %2236 = vmatprep.subr.mxu0 0.0
  %2237 = vmatpush1.msra.mxu0 0.0
  %2238 = vmatprep.subr.mxu0 0.0
  %2239 = vmatpush1.msra.mxu0 0.0
  %2240 = vmatprep.subr.mxu0 0.0
  %2241 = vmatpush1.msra.mxu0 0.0
  %2242 = vmatprep.subr.mxu0 0.0
  %2243 = vmatpush1.msra.mxu0 0.0
  %2244 = vmatprep.subr.mxu0 0.0
  %2245 = vmatpush1.msra.mxu0 0.0
  %2246 = vmatprep.subr.mxu0 0.0
  %2247 = vmatpush1.msra.mxu0 0.0
  %2248 = vmatprep.subr.mxu0 0.0
  %2249 = vmatpush1.msra.mxu0 0.0
  %2250 = vmatprep.subr.mxu0 0.0
  %2251 = vmatpush1.msra.mxu0 0.0
  %2252 = vmatprep.subr.mxu0 0.0
  %2253 = vmatpush1.msra.mxu0 0.0
  %2254 = vmatprep.subr.mxu0 0.0
  %2255 = vmatpush1.msra.mxu0 0.0
  %2256 = vmatprep.subr.mxu0 0.0
  %2257 = vmatpush1.msra.mxu0 0.0
  %2258 = vmatprep.subr.mxu0 0.0
  %2259 = vmatpush1.msra.mxu0 0.0
  %2260 = vmatprep.subr.mxu0 0.0
  %2261 = vmatpush1.msra.mxu0 0.0
  %2262 = vmatprep.subr.mxu0 0.0
  %2263 = vmatpush1.msra.mxu0 0.0
  %2264 = vmatprep.subr.mxu0 0.0
  %2265 = vmatpush1.msra.mxu0 0.0
  %2266 = vmatprep.subr.mxu0 0.0
  %2267 = vmatpush1.msra.mxu0 0.0
  %2268 = vmatprep.subr.mxu0 0.0
  %2269 = vmatpush1.msra.mxu0 0.0
  %2270 = vmatprep.subr.mxu0 0.0
  %2271 = vmatpush1.msra.mxu0 0.0
  %2272 = vmatprep.subr.mxu0 0.0
  %2273 = vmatpush1.msra.mxu0 0.0
  %2274 = vmatprep.subr.mxu0 0.0
  %2275 = vmatpush1.msra.mxu0 0.0
  %2276 = vmatprep.subr.mxu0 0.0
  %2277 = vmatpush1.msra.mxu0 0.0
  %2278 = vmatprep.subr.mxu0 0.0
  %2279 = vmatpush1.msra.mxu0 0.0
  %2280 = vmatprep.mubr.f32.mxu0 0.0
  %2281 = vmatmul.mubr.f32.gmra.mrb[0].mxu0 %v2143
  %v2282 = vpop.f32.mrb[0].mxu0
  %v2283 = vadd.f32 0.0, %v2282
  %v2284 = vpop.f32.mrb[0].mxu0
  %v2285 = vadd.f32 0.0, %v2284
  %2286 = vdwg.mxu0
  %v2287 = vadd.f32 %v1902, %v2212
  %v2288 = vadd.f32 %v1904, %v2214
  %v2289 = vadd.f32 %v1973, %v2283
  %v2290 = vadd.f32 %v1975, %v2285
  %v2291 = vmul.f32 %v2287, 0.5
  %v2292 = vtanh.pop %v2291
  %v2293 = vmul.f32 %v2292, 0.5
  %v2294 = vadd.f32 %v2293, 0.5
  %v2295 = vmul.f32 %v2288, 0.5
  %v2296 = vtanh.pop %v2295
  %v2297 = vmul.f32 %v2296, 0.5
  %v2298 = vadd.f32 %v2297, 0.5
  %v2299 = vtanh.pop %v2289
  %v2300 = vmul.f32 %v2290, 0.5
  %v2301 = vtanh.pop %v2300
  %v2302 = vmul.f32 %v2301, 0.5
  %v2303 = vadd.f32 %v2302, 0.5
  %v2304 = vmul.f32 %v2298, %v2138
  %v2305 = vmul.f32 %v2294, %v2299
  %v2306 = vadd.f32 %v2304, %v2305
  %v2307 = vtanh.pop %v2306
  %v2308 = vmul.f32 %v2303, %v2307
  %s2309 = scalar_lea.vmem [#allocation3], 8
  %2310 = vst.msk [vmem:[%s2309] sm:$0xff] %vm407, %v2308
  %v2312 = vsel %vm407, %v2308, 0
  %2314 = vmatprep.subr.mxu0 %v57
  %2315 = vmatpush1.msra.mxu0 %v56
  %2316 = vmatprep.subr.mxu0 %v61
  %2317 = vmatpush1.msra.mxu0 %v60
  %2318 = vmatprep.subr.mxu0 %v65
  %2319 = vmatpush1.msra.mxu0 %v64
  %2320 = vmatprep.subr.mxu0 %v69
  %2321 = vmatpush1.msra.mxu0 %v68
  %2322 = vmatprep.subr.mxu0 0.0
  %2323 = vmatpush1.msra.mxu0 0.0
  %2324 = vmatprep.subr.mxu0 0.0
  %2325 = vmatpush1.msra.mxu0 0.0
  %2326 = vmatprep.subr.mxu0 0.0
  %2327 = vmatpush1.msra.mxu0 0.0
  %2328 = vmatprep.subr.mxu0 0.0
  %2329 = vmatpush1.msra.mxu0 0.0
  %2330 = vmatprep.subr.mxu0 0.0
  %2331 = vmatpush1.msra.mxu0 0.0
  %2332 = vmatprep.subr.mxu0 0.0
  %2333 = vmatpush1.msra.mxu0 0.0
  %2334 = vmatprep.subr.mxu0 0.0
  %2335 = vmatpush1.msra.mxu0 0.0
  %2336 = vmatprep.subr.mxu0 0.0
  %2337 = vmatpush1.msra.mxu0 0.0
  %2338 = vmatprep.subr.mxu0 0.0
  %2339 = vmatpush1.msra.mxu0 0.0
  %2340 = vmatprep.subr.mxu0 0.0
  %2341 = vmatpush1.msra.mxu0 0.0
  %2342 = vmatprep.subr.mxu0 0.0
  %2343 = vmatpush1.msra.mxu0 0.0
  %2344 = vmatprep.subr.mxu0 0.0
  %2345 = vmatpush1.msra.mxu0 0.0
  %2346 = vmatprep.subr.mxu0 0.0
  %2347 = vmatpush1.msra.mxu0 0.0
  %2348 = vmatprep.subr.mxu0 0.0
  %2349 = vmatpush1.msra.mxu0 0.0
  %2350 = vmatprep.subr.mxu0 0.0
  %2351 = vmatpush1.msra.mxu0 0.0
  %2352 = vmatprep.subr.mxu0 0.0
  %2353 = vmatpush1.msra.mxu0 0.0
  %2354 = vmatprep.subr.mxu0 0.0
  %2355 = vmatpush1.msra.mxu0 0.0
  %2356 = vmatprep.subr.mxu0 0.0
  %2357 = vmatpush1.msra.mxu0 0.0
  %2358 = vmatprep.subr.mxu0 0.0
  %2359 = vmatpush1.msra.mxu0 0.0
  %2360 = vmatprep.subr.mxu0 0.0
  %2361 = vmatpush1.msra.mxu0 0.0
  %2362 = vmatprep.subr.mxu0 0.0
  %2363 = vmatpush1.msra.mxu0 0.0
  %2364 = vmatprep.subr.mxu0 0.0
  %2365 = vmatpush1.msra.mxu0 0.0
  %2366 = vmatprep.subr.mxu0 0.0
  %2367 = vmatpush1.msra.mxu0 0.0
  %2368 = vmatprep.subr.mxu0 0.0
  %2369 = vmatpush1.msra.mxu0 0.0
  %2370 = vmatprep.subr.mxu0 0.0
  %2371 = vmatpush1.msra.mxu0 0.0
  %2372 = vmatprep.subr.mxu0 0.0
  %2373 = vmatpush1.msra.mxu0 0.0
  %2374 = vmatprep.subr.mxu0 0.0
  %2375 = vmatpush1.msra.mxu0 0.0
  %2376 = vmatprep.subr.mxu0 0.0
  %2377 = vmatpush1.msra.mxu0 0.0
  %2378 = vmatprep.mubr.f32.mxu0 0.0
  %2379 = vmatmul.mubr.f32.gmra.mrb[0].mxu0 %v2312
  %v2380 = vpop.f32.mrb[0].mxu0
  %v2381 = vadd.f32 0.0, %v2380
  %v2382 = vpop.f32.mrb[0].mxu0
  %v2383 = vadd.f32 0.0, %v2382
  %2384 = vdwg.mxu0
  %2385 = vmatprep.subr.mxu0 %v59
  %2386 = vmatpush1.msra.mxu0 %v58
  %2387 = vmatprep.subr.mxu0 %v63
  %2388 = vmatpush1.msra.mxu0 %v62
  %2389 = vmatprep.subr.mxu0 %v67
  %2390 = vmatpush1.msra.mxu0 %v66
  %2391 = vmatprep.subr.mxu0 %v71
  %2392 = vmatpush1.msra.mxu0 %v70
  %2393 = vmatprep.subr.mxu0 0.0
  %2394 = vmatpush1.msra.mxu0 0.0
  %2395 = vmatprep.subr.mxu0 0.0
  %2396 = vmatpush1.msra.mxu0 0.0
  %2397 = vmatprep.subr.mxu0 0.0
  %2398 = vmatpush1.msra.mxu0 0.0
  %2399 = vmatprep.subr.mxu0 0.0
  %2400 = vmatpush1.msra.mxu0 0.0
  %2401 = vmatprep.subr.mxu0 0.0
  %2402 = vmatpush1.msra.mxu0 0.0
  %2403 = vmatprep.subr.mxu0 0.0
  %2404 = vmatpush1.msra.mxu0 0.0
  %2405 = vmatprep.subr.mxu0 0.0
  %2406 = vmatpush1.msra.mxu0 0.0
  %2407 = vmatprep.subr.mxu0 0.0
  %2408 = vmatpush1.msra.mxu0 0.0
  %2409 = vmatprep.subr.mxu0 0.0
  %2410 = vmatpush1.msra.mxu0 0.0
  %2411 = vmatprep.subr.mxu0 0.0
  %2412 = vmatpush1.msra.mxu0 0.0
  %2413 = vmatprep.subr.mxu0 0.0
  %2414 = vmatpush1.msra.mxu0 0.0
  %2415 = vmatprep.subr.mxu0 0.0
  %2416 = vmatpush1.msra.mxu0 0.0
  %2417 = vmatprep.subr.mxu0 0.0
  %2418 = vmatpush1.msra.mxu0 0.0
  %2419 = vmatprep.subr.mxu0 0.0
  %2420 = vmatpush1.msra.mxu0 0.0
  %2421 = vmatprep.subr.mxu0 0.0
  %2422 = vmatpush1.msra.mxu0 0.0
  %2423 = vmatprep.subr.mxu0 0.0
  %2424 = vmatpush1.msra.mxu0 0.0
  %2425 = vmatprep.subr.mxu0 0.0
  %2426 = vmatpush1.msra.mxu0 0.0
  %2427 = vmatprep.subr.mxu0 0.0
  %2428 = vmatpush1.msra.mxu0 0.0
  %2429 = vmatprep.subr.mxu0 0.0
  %2430 = vmatpush1.msra.mxu0 0.0
  %2431 = vmatprep.subr.mxu0 0.0
  %2432 = vmatpush1.msra.mxu0 0.0
  %2433 = vmatprep.subr.mxu0 0.0
  %2434 = vmatpush1.msra.mxu0 0.0
  %2435 = vmatprep.subr.mxu0 0.0
  %2436 = vmatpush1.msra.mxu0 0.0
  %2437 = vmatprep.subr.mxu0 0.0
  %2438 = vmatpush1.msra.mxu0 0.0
  %2439 = vmatprep.subr.mxu0 0.0
  %2440 = vmatpush1.msra.mxu0 0.0
  %2441 = vmatprep.subr.mxu0 0.0
  %2442 = vmatpush1.msra.mxu0 0.0
  %2443 = vmatprep.subr.mxu0 0.0
  %2444 = vmatpush1.msra.mxu0 0.0
  %2445 = vmatprep.subr.mxu0 0.0
  %2446 = vmatpush1.msra.mxu0 0.0
  %2447 = vmatprep.subr.mxu0 0.0
  %2448 = vmatpush1.msra.mxu0 0.0
  %2449 = vmatprep.mubr.f32.mxu0 0.0
  %2450 = vmatmul.mubr.f32.gmra.mrb[0].mxu0 %v2312
  %v2451 = vpop.f32.mrb[0].mxu0
  %v2452 = vadd.f32 0.0, %v2451
  %v2453 = vpop.f32.mrb[0].mxu0
  %v2454 = vadd.f32 0.0, %v2453
  %2455 = vdwg.mxu0
  %v2456 = vadd.f32 %v1902, %v2381
  %v2457 = vadd.f32 %v1904, %v2383
  %v2458 = vadd.f32 %v1973, %v2452
  %v2459 = vadd.f32 %v1975, %v2454
  %v2460 = vmul.f32 %v2456, 0.5
  %v2461 = vtanh.pop %v2460
  %v2462 = vmul.f32 %v2461, 0.5
  %v2463 = vadd.f32 %v2462, 0.5
  %v2464 = vmul.f32 %v2457, 0.5
  %v2465 = vtanh.pop %v2464
  %v2466 = vmul.f32 %v2465, 0.5
  %v2467 = vadd.f32 %v2466, 0.5
  %v2468 = vtanh.pop %v2458
  %v2469 = vmul.f32 %v2459, 0.5
  %v2470 = vtanh.pop %v2469
  %v2471 = vmul.f32 %v2470, 0.5
  %v2472 = vadd.f32 %v2471, 0.5
  %v2473 = vmul.f32 %v2467, %v2306
  %v2474 = vmul.f32 %v2463, %v2468
  %v2475 = vadd.f32 %v2473, %v2474
  %v2476 = vtanh.pop %v2475
  %v2477 = vmul.f32 %v2472, %v2476
  %s2478 = scalar_lea.vmem [#allocation3], 16
  %2479 = vst.msk [vmem:[%s2478] sm:$0xff] %vm407, %v2477
  %v2481 = vsel %vm407, %v2477, 0
  %2483 = vmatprep.subr.mxu0 %v57
  %2484 = vmatpush1.msra.mxu0 %v56
  %2485 = vmatprep.subr.mxu0 %v61
  %2486 = vmatpush1.msra.mxu0 %v60
  %2487 = vmatprep.subr.mxu0 %v65
  %2488 = vmatpush1.msra.mxu0 %v64
  %2489 = vmatprep.subr.mxu0 %v69
  %2490 = vmatpush1.msra.mxu0 %v68
  %2491 = vmatprep.subr.mxu0 0.0
  %2492 = vmatpush1.msra.mxu0 0.0
  %2493 = vmatprep.subr.mxu0 0.0
  %2494 = vmatpush1.msra.mxu0 0.0
  %2495 = vmatprep.subr.mxu0 0.0
  %2496 = vmatpush1.msra.mxu0 0.0
  %2497 = vmatprep.subr.mxu0 0.0
  %2498 = vmatpush1.msra.mxu0 0.0
  %2499 = vmatprep.subr.mxu0 0.0
  %2500 = vmatpush1.msra.mxu0 0.0
  %2501 = vmatprep.subr.mxu0 0.0
  %2502 = vmatpush1.msra.mxu0 0.0
  %2503 = vmatprep.subr.mxu0 0.0
  %2504 = vmatpush1.msra.mxu0 0.0
  %2505 = vmatprep.subr.mxu0 0.0
  %2506 = vmatpush1.msra.mxu0 0.0
  %2507 = vmatprep.subr.mxu0 0.0
  %2508 = vmatpush1.msra.mxu0 0.0
  %2509 = vmatprep.subr.mxu0 0.0
  %2510 = vmatpush1.msra.mxu0 0.0
  %2511 = vmatprep.subr.mxu0 0.0
  %2512 = vmatpush1.msra.mxu0 0.0
  %2513 = vmatprep.subr.mxu0 0.0
  %2514 = vmatpush1.msra.mxu0 0.0
  %2515 = vmatprep.subr.mxu0 0.0
  %2516 = vmatpush1.msra.mxu0 0.0
  %2517 = vmatprep.subr.mxu0 0.0
  %2518 = vmatpush1.msra.mxu0 0.0
  %2519 = vmatprep.subr.mxu0 0.0
  %2520 = vmatpush1.msra.mxu0 0.0
  %2521 = vmatprep.subr.mxu0 0.0
  %2522 = vmatpush1.msra.mxu0 0.0
  %2523 = vmatprep.subr.mxu0 0.0
  %2524 = vmatpush1.msra.mxu0 0.0
  %2525 = vmatprep.subr.mxu0 0.0
  %2526 = vmatpush1.msra.mxu0 0.0
  %2527 = vmatprep.subr.mxu0 0.0
  %2528 = vmatpush1.msra.mxu0 0.0
  %2529 = vmatprep.subr.mxu0 0.0
  %2530 = vmatpush1.msra.mxu0 0.0
  %2531 = vmatprep.subr.mxu0 0.0
  %2532 = vmatpush1.msra.mxu0 0.0
  %2533 = vmatprep.subr.mxu0 0.0
  %2534 = vmatpush1.msra.mxu0 0.0
  %2535 = vmatprep.subr.mxu0 0.0
  %2536 = vmatpush1.msra.mxu0 0.0
  %2537 = vmatprep.subr.mxu0 0.0
  %2538 = vmatpush1.msra.mxu0 0.0
  %2539 = vmatprep.subr.mxu0 0.0
  %2540 = vmatpush1.msra.mxu0 0.0
  %2541 = vmatprep.subr.mxu0 0.0
  %2542 = vmatpush1.msra.mxu0 0.0
  %2543 = vmatprep.subr.mxu0 0.0
  %2544 = vmatpush1.msra.mxu0 0.0
  %2545 = vmatprep.subr.mxu0 0.0
  %2546 = vmatpush1.msra.mxu0 0.0
  %2547 = vmatprep.mubr.f32.mxu0 0.0
  %2548 = vmatmul.mubr.f32.gmra.mrb[0].mxu0 %v2481
  %v2549 = vpop.f32.mrb[0].mxu0
  %v2550 = vadd.f32 0.0, %v2549
  %v2551 = vpop.f32.mrb[0].mxu0
  %v2552 = vadd.f32 0.0, %v2551
  %2553 = vdwg.mxu0
  %2554 = vmatprep.subr.mxu0 %v59
  %2555 = vmatpush1.msra.mxu0 %v58
  %2556 = vmatprep.subr.mxu0 %v63
  %2557 = vmatpush1.msra.mxu0 %v62
  %2558 = vmatprep.subr.mxu0 %v67
  %2559 = vmatpush1.msra.mxu0 %v66
  %2560 = vmatprep.subr.mxu0 %v71
  %2561 = vmatpush1.msra.mxu0 %v70
  %2562 = vmatprep.subr.mxu0 0.0
  %2563 = vmatpush1.msra.mxu0 0.0
  %2564 = vmatprep.subr.mxu0 0.0
  %2565 = vmatpush1.msra.mxu0 0.0
  %2566 = vmatprep.subr.mxu0 0.0
  %2567 = vmatpush1.msra.mxu0 0.0
  %2568 = vmatprep.subr.mxu0 0.0
  %2569 = vmatpush1.msra.mxu0 0.0
  %2570 = vmatprep.subr.mxu0 0.0
  %2571 = vmatpush1.msra.mxu0 0.0
  %2572 = vmatprep.subr.mxu0 0.0
  %2573 = vmatpush1.msra.mxu0 0.0
  %2574 = vmatprep.subr.mxu0 0.0
  %2575 = vmatpush1.msra.mxu0 0.0
  %2576 = vmatprep.subr.mxu0 0.0
  %2577 = vmatpush1.msra.mxu0 0.0
  %2578 = vmatprep.subr.mxu0 0.0
  %2579 = vmatpush1.msra.mxu0 0.0
  %2580 = vmatprep.subr.mxu0 0.0
  %2581 = vmatpush1.msra.mxu0 0.0
  %2582 = vmatprep.subr.mxu0 0.0
  %2583 = vmatpush1.msra.mxu0 0.0
  %2584 = vmatprep.subr.mxu0 0.0
  %2585 = vmatpush1.msra.mxu0 0.0
  %2586 = vmatprep.subr.mxu0 0.0
  %2587 = vmatpush1.msra.mxu0 0.0
  %2588 = vmatprep.subr.mxu0 0.0
  %2589 = vmatpush1.msra.mxu0 0.0
  %2590 = vmatprep.subr.mxu0 0.0
  %2591 = vmatpush1.msra.mxu0 0.0
  %2592 = vmatprep.subr.mxu0 0.0
  %2593 = vmatpush1.msra.mxu0 0.0
  %2594 = vmatprep.subr.mxu0 0.0
  %2595 = vmatpush1.msra.mxu0 0.0
  %2596 = vmatprep.subr.mxu0 0.0
  %2597 = vmatpush1.msra.mxu0 0.0
  %2598 = vmatprep.subr.mxu0 0.0
  %2599 = vmatpush1.msra.mxu0 0.0
  %2600 = vmatprep.subr.mxu0 0.0
  %2601 = vmatpush1.msra.mxu0 0.0
  %2602 = vmatprep.subr.mxu0 0.0
  %2603 = vmatpush1.msra.mxu0 0.0
  %2604 = vmatprep.subr.mxu0 0.0
  %2605 = vmatpush1.msra.mxu0 0.0
  %2606 = vmatprep.subr.mxu0 0.0
  %2607 = vmatpush1.msra.mxu0 0.0
  %2608 = vmatprep.subr.mxu0 0.0
  %2609 = vmatpush1.msra.mxu0 0.0
  %2610 = vmatprep.subr.mxu0 0.0
  %2611 = vmatpush1.msra.mxu0 0.0
  %2612 = vmatprep.subr.mxu0 0.0
  %2613 = vmatpush1.msra.mxu0 0.0
  %2614 = vmatprep.subr.mxu0 0.0
  %2615 = vmatpush1.msra.mxu0 0.0
  %2616 = vmatprep.subr.mxu0 0.0
  %2617 = vmatpush1.msra.mxu0 0.0
  %2618 = vmatprep.mubr.f32.mxu0 0.0
  %2619 = vmatmul.mubr.f32.gmra.mrb[0].mxu0 %v2481
  %v2620 = vpop.f32.mrb[0].mxu0
  %v2621 = vadd.f32 0.0, %v2620
  %v2622 = vpop.f32.mrb[0].mxu0
  %v2623 = vadd.f32 0.0, %v2622
  %2624 = vdwg.mxu0
  %v2625 = vadd.f32 %v1902, %v2550
  %v2626 = vadd.f32 %v1904, %v2552
  %v2627 = vadd.f32 %v1973, %v2621
  %v2628 = vadd.f32 %v1975, %v2623
  %v2629 = vmul.f32 %v2625, 0.5
  %v2630 = vtanh.pop %v2629
  %v2631 = vmul.f32 %v2630, 0.5
  %v2632 = vadd.f32 %v2631, 0.5
  %v2633 = vmul.f32 %v2626, 0.5
  %v2634 = vtanh.pop %v2633
  %v2635 = vmul.f32 %v2634, 0.5
  %v2636 = vadd.f32 %v2635, 0.5
  %v2637 = vtanh.pop %v2627
  %v2638 = vmul.f32 %v2628, 0.5
  %v2639 = vtanh.pop %v2638
  %v2640 = vmul.f32 %v2639, 0.5
  %v2641 = vadd.f32 %v2640, 0.5
  %v2642 = vmul.f32 %v2636, %v2475
  %v2643 = vmul.f32 %v2632, %v2637
  %v2644 = vadd.f32 %v2642, %v2643
  %v2645 = vtanh.pop %v2644
  %v2646 = vmul.f32 %v2641, %v2645
  %s2647 = scalar_lea.vmem [#allocation3], 24
  %2648 = vst.msk [vmem:[%s2647] sm:$0xff] %vm407, %v2646
  %v2650 = vsel %vm407, %v2646, 0
  %2652 = vmatprep.subr.mxu0 %v57
  %2653 = vmatpush1.msra.mxu0 %v56
  %2654 = vmatprep.subr.mxu0 %v61
  %2655 = vmatpush1.msra.mxu0 %v60
  %2656 = vmatprep.subr.mxu0 %v65
  %2657 = vmatpush1.msra.mxu0 %v64
  %2658 = vmatprep.subr.mxu0 %v69
  %2659 = vmatpush1.msra.mxu0 %v68
  %2660 = vmatprep.subr.mxu0 0.0
  %2661 = vmatpush1.msra.mxu0 0.0
  %2662 = vmatprep.subr.mxu0 0.0
  %2663 = vmatpush1.msra.mxu0 0.0
  %2664 = vmatprep.subr.mxu0 0.0
  %2665 = vmatpush1.msra.mxu0 0.0
  %2666 = vmatprep.subr.mxu0 0.0
  %2667 = vmatpush1.msra.mxu0 0.0
  %2668 = vmatprep.subr.mxu0 0.0
  %2669 = vmatpush1.msra.mxu0 0.0
  %2670 = vmatprep.subr.mxu0 0.0
  %2671 = vmatpush1.msra.mxu0 0.0
  %2672 = vmatprep.subr.mxu0 0.0
  %2673 = vmatpush1.msra.mxu0 0.0
  %2674 = vmatprep.subr.mxu0 0.0
  %2675 = vmatpush1.msra.mxu0 0.0
  %2676 = vmatprep.subr.mxu0 0.0
  %2677 = vmatpush1.msra.mxu0 0.0
  %2678 = vmatprep.subr.mxu0 0.0
  %2679 = vmatpush1.msra.mxu0 0.0
  %2680 = vmatprep.subr.mxu0 0.0
  %2681 = vmatpush1.msra.mxu0 0.0
  %2682 = vmatprep.subr.mxu0 0.0
  %2683 = vmatpush1.msra.mxu0 0.0
  %2684 = vmatprep.subr.mxu0 0.0
  %2685 = vmatpush1.msra.mxu0 0.0
  %2686 = vmatprep.subr.mxu0 0.0
  %2687 = vmatpush1.msra.mxu0 0.0
  %2688 = vmatprep.subr.mxu0 0.0
  %2689 = vmatpush1.msra.mxu0 0.0
  %2690 = vmatprep.subr.mxu0 0.0
  %2691 = vmatpush1.msra.mxu0 0.0
  %2692 = vmatprep.subr.mxu0 0.0
  %2693 = vmatpush1.msra.mxu0 0.0
  %2694 = vmatprep.subr.mxu0 0.0
  %2695 = vmatpush1.msra.mxu0 0.0
  %2696 = vmatprep.subr.mxu0 0.0
  %2697 = vmatpush1.msra.mxu0 0.0
  %2698 = vmatprep.subr.mxu0 0.0
  %2699 = vmatpush1.msra.mxu0 0.0
  %2700 = vmatprep.subr.mxu0 0.0
  %2701 = vmatpush1.msra.mxu0 0.0
  %2702 = vmatprep.subr.mxu0 0.0
  %2703 = vmatpush1.msra.mxu0 0.0
  %2704 = vmatprep.subr.mxu0 0.0
  %2705 = vmatpush1.msra.mxu0 0.0
  %2706 = vmatprep.subr.mxu0 0.0
  %2707 = vmatpush1.msra.mxu0 0.0
  %2708 = vmatprep.subr.mxu0 0.0
  %2709 = vmatpush1.msra.mxu0 0.0
  %2710 = vmatprep.subr.mxu0 0.0
  %2711 = vmatpush1.msra.mxu0 0.0
  %2712 = vmatprep.subr.mxu0 0.0
  %2713 = vmatpush1.msra.mxu0 0.0
  %2714 = vmatprep.subr.mxu0 0.0
  %2715 = vmatpush1.msra.mxu0 0.0
  %2716 = vmatprep.mubr.f32.mxu0 0.0
  %2717 = vmatmul.mubr.f32.gmra.mrb[0].mxu0 %v2650
  %v2718 = vpop.f32.mrb[0].mxu0
  %v2719 = vadd.f32 0.0, %v2718
  %v2720 = vpop.f32.mrb[0].mxu0
  %v2721 = vadd.f32 0.0, %v2720
  %2722 = vdwg.mxu0
  %2723 = vmatprep.subr.mxu0 %v59
  %2724 = vmatpush1.msra.mxu0 %v58
  %2725 = vmatprep.subr.mxu0 %v63
  %2726 = vmatpush1.msra.mxu0 %v62
  %2727 = vmatprep.subr.mxu0 %v67
  %2728 = vmatpush1.msra.mxu0 %v66
  %2729 = vmatprep.subr.mxu0 %v71
  %2730 = vmatpush1.msra.mxu0 %v70
  %2731 = vmatprep.subr.mxu0 0.0
  %2732 = vmatpush1.msra.mxu0 0.0
  %2733 = vmatprep.subr.mxu0 0.0
  %2734 = vmatpush1.msra.mxu0 0.0
  %2735 = vmatprep.subr.mxu0 0.0
  %2736 = vmatpush1.msra.mxu0 0.0
  %2737 = vmatprep.subr.mxu0 0.0
  %2738 = vmatpush1.msra.mxu0 0.0
  %2739 = vmatprep.subr.mxu0 0.0
  %2740 = vmatpush1.msra.mxu0 0.0
  %2741 = vmatprep.subr.mxu0 0.0
  %2742 = vmatpush1.msra.mxu0 0.0
  %2743 = vmatprep.subr.mxu0 0.0
  %2744 = vmatpush1.msra.mxu0 0.0
  %2745 = vmatprep.subr.mxu0 0.0
  %2746 = vmatpush1.msra.mxu0 0.0
  %2747 = vmatprep.subr.mxu0 0.0
  %2748 = vmatpush1.msra.mxu0 0.0
  %2749 = vmatprep.subr.mxu0 0.0
  %2750 = vmatpush1.msra.mxu0 0.0
  %2751 = vmatprep.subr.mxu0 0.0
  %2752 = vmatpush1.msra.mxu0 0.0
  %2753 = vmatprep.subr.mxu0 0.0
  %2754 = vmatpush1.msra.mxu0 0.0
  %2755 = vmatprep.subr.mxu0 0.0
  %2756 = vmatpush1.msra.mxu0 0.0
  %2757 = vmatprep.subr.mxu0 0.0
  %2758 = vmatpush1.msra.mxu0 0.0
  %2759 = vmatprep.subr.mxu0 0.0
  %2760 = vmatpush1.msra.mxu0 0.0
  %2761 = vmatprep.subr.mxu0 0.0
  %2762 = vmatpush1.msra.mxu0 0.0
  %2763 = vmatprep.subr.mxu0 0.0
  %2764 = vmatpush1.msra.mxu0 0.0
  %2765 = vmatprep.subr.mxu0 0.0
  %2766 = vmatpush1.msra.mxu0 0.0
  %2767 = vmatprep.subr.mxu0 0.0
  %2768 = vmatpush1.msra.mxu0 0.0
  %2769 = vmatprep.subr.mxu0 0.0
  %2770 = vmatpush1.msra.mxu0 0.0
  %2771 = vmatprep.subr.mxu0 0.0
  %2772 = vmatpush1.msra.mxu0 0.0
  %2773 = vmatprep.subr.mxu0 0.0
  %2774 = vmatpush1.msra.mxu0 0.0
  %2775 = vmatprep.subr.mxu0 0.0
  %2776 = vmatpush1.msra.mxu0 0.0
  %2777 = vmatprep.subr.mxu0 0.0
  %2778 = vmatpush1.msra.mxu0 0.0
  %2779 = vmatprep.subr.mxu0 0.0
  %2780 = vmatpush1.msra.mxu0 0.0
  %2781 = vmatprep.subr.mxu0 0.0
  %2782 = vmatpush1.msra.mxu0 0.0
  %2783 = vmatprep.subr.mxu0 0.0
  %2784 = vmatpush1.msra.mxu0 0.0
  %2785 = vmatprep.subr.mxu0 0.0
  %2786 = vmatpush1.msra.mxu0 0.0
  %2787 = vmatprep.mubr.f32.mxu0 0.0
  %2788 = vmatmul.mubr.f32.gmra.mrb[0].mxu0 %v2650
  %v2789 = vpop.f32.mrb[0].mxu0
  %v2790 = vadd.f32 0.0, %v2789
  %v2791 = vpop.f32.mrb[0].mxu0
  %v2792 = vadd.f32 0.0, %v2791
  %2793 = vdwg.mxu0
  %v2794 = vadd.f32 %v1902, %v2719
  %v2795 = vadd.f32 %v1904, %v2721
  %v2796 = vadd.f32 %v1973, %v2790
  %v2797 = vadd.f32 %v1975, %v2792
  %v2798 = vmul.f32 %v2794, 0.5
  %v2799 = vtanh.pop %v2798
  %v2800 = vmul.f32 %v2799, 0.5
  %v2801 = vadd.f32 %v2800, 0.5
  %v2802 = vmul.f32 %v2795, 0.5
  %v2803 = vtanh.pop %v2802
  %v2804 = vmul.f32 %v2803, 0.5
  %v2805 = vadd.f32 %v2804, 0.5
  %v2806 = vtanh.pop %v2796
  %v2807 = vmul.f32 %v2797, 0.5
  %v2808 = vtanh.pop %v2807
  %v2809 = vmul.f32 %v2808, 0.5
  %v2810 = vadd.f32 %v2809, 0.5
  %v2811 = vmul.f32 %v2805, %v2644
  %v2812 = vmul.f32 %v2801, %v2806
  %v2813 = vadd.f32 %v2811, %v2812
  %v2814 = vtanh.pop %v2813
  %v2815 = vmul.f32 %v2810, %v2814
  %s2816 = scalar_lea.vmem [#allocation3], 32
  %2817 = vst.msk [vmem:[%s2816] sm:$0xff] %vm407, %v2815
  %v2819 = vsel %vm407, %v2815, 0
  %2821 = vmatprep.subr.mxu0 %v57
  %2822 = vmatpush1.msra.mxu0 %v56
  %2823 = vmatprep.subr.mxu0 %v61
  %2824 = vmatpush1.msra.mxu0 %v60
  %2825 = vmatprep.subr.mxu0 %v65
  %2826 = vmatpush1.msra.mxu0 %v64
  %2827 = vmatprep.subr.mxu0 %v69
  %2828 = vmatpush1.msra.mxu0 %v68
  %2829 = vmatprep.subr.mxu0 0.0
  %2830 = vmatpush1.msra.mxu0 0.0
  %2831 = vmatprep.subr.mxu0 0.0
  %2832 = vmatpush1.msra.mxu0 0.0
  %2833 = vmatprep.subr.mxu0 0.0
  %2834 = vmatpush1.msra.mxu0 0.0
  %2835 = vmatprep.subr.mxu0 0.0
  %2836 = vmatpush1.msra.mxu0 0.0
  %2837 = vmatprep.subr.mxu0 0.0
  %2838 = vmatpush1.msra.mxu0 0.0
  %2839 = vmatprep.subr.mxu0 0.0
  %2840 = vmatpush1.msra.mxu0 0.0
  %2841 = vmatprep.subr.mxu0 0.0
  %2842 = vmatpush1.msra.mxu0 0.0
  %2843 = vmatprep.subr.mxu0 0.0
  %2844 = vmatpush1.msra.mxu0 0.0
  %2845 = vmatprep.subr.mxu0 0.0
  %2846 = vmatpush1.msra.mxu0 0.0
  %2847 = vmatprep.subr.mxu0 0.0
  %2848 = vmatpush1.msra.mxu0 0.0
  %2849 = vmatprep.subr.mxu0 0.0
  %2850 = vmatpush1.msra.mxu0 0.0
  %2851 = vmatprep.subr.mxu0 0.0
  %2852 = vmatpush1.msra.mxu0 0.0
  %2853 = vmatprep.subr.mxu0 0.0
  %2854 = vmatpush1.msra.mxu0 0.0
  %2855 = vmatprep.subr.mxu0 0.0
  %2856 = vmatpush1.msra.mxu0 0.0
  %2857 = vmatprep.subr.mxu0 0.0
  %2858 = vmatpush1.msra.mxu0 0.0
  %2859 = vmatprep.subr.mxu0 0.0
  %2860 = vmatpush1.msra.mxu0 0.0
  %2861 = vmatprep.subr.mxu0 0.0
  %2862 = vmatpush1.msra.mxu0 0.0
  %2863 = vmatprep.subr.mxu0 0.0
  %2864 = vmatpush1.msra.mxu0 0.0
  %2865 = vmatprep.subr.mxu0 0.0
  %2866 = vmatpush1.msra.mxu0 0.0
  %2867 = vmatprep.subr.mxu0 0.0
  %2868 = vmatpush1.msra.mxu0 0.0
  %2869 = vmatprep.subr.mxu0 0.0
  %2870 = vmatpush1.msra.mxu0 0.0
  %2871 = vmatprep.subr.mxu0 0.0
  %2872 = vmatpush1.msra.mxu0 0.0
  %2873 = vmatprep.subr.mxu0 0.0
  %2874 = vmatpush1.msra.mxu0 0.0
  %2875 = vmatprep.subr.mxu0 0.0
  %2876 = vmatpush1.msra.mxu0 0.0
  %2877 = vmatprep.subr.mxu0 0.0
  %2878 = vmatpush1.msra.mxu0 0.0
  %2879 = vmatprep.subr.mxu0 0.0
  %2880 = vmatpush1.msra.mxu0 0.0
  %2881 = vmatprep.subr.mxu0 0.0
  %2882 = vmatpush1.msra.mxu0 0.0
  %2883 = vmatprep.subr.mxu0 0.0
  %2884 = vmatpush1.msra.mxu0 0.0
  %2885 = vmatprep.mubr.f32.mxu0 0.0
  %2886 = vmatmul.mubr.f32.gmra.mrb[0].mxu0 %v2819
  %v2887 = vpop.f32.mrb[0].mxu0
  %v2888 = vadd.f32 0.0, %v2887
  %v2889 = vpop.f32.mrb[0].mxu0
  %v2890 = vadd.f32 0.0, %v2889
  %2891 = vdwg.mxu0
  %2892 = vmatprep.subr.mxu0 %v59
  %2893 = vmatpush1.msra.mxu0 %v58
  %2894 = vmatprep.subr.mxu0 %v63
  %2895 = vmatpush1.msra.mxu0 %v62
  %2896 = vmatprep.subr.mxu0 %v67
  %2897 = vmatpush1.msra.mxu0 %v66
  %2898 = vmatprep.subr.mxu0 %v71
  %2899 = vmatpush1.msra.mxu0 %v70
  %2900 = vmatprep.subr.mxu0 0.0
  %2901 = vmatpush1.msra.mxu0 0.0
  %2902 = vmatprep.subr.mxu0 0.0
  %2903 = vmatpush1.msra.mxu0 0.0
  %2904 = vmatprep.subr.mxu0 0.0
  %2905 = vmatpush1.msra.mxu0 0.0
  %2906 = vmatprep.subr.mxu0 0.0
  %2907 = vmatpush1.msra.mxu0 0.0
  %2908 = vmatprep.subr.mxu0 0.0
  %2909 = vmatpush1.msra.mxu0 0.0
  %2910 = vmatprep.subr.mxu0 0.0
  %2911 = vmatpush1.msra.mxu0 0.0
  %2912 = vmatprep.subr.mxu0 0.0
  %2913 = vmatpush1.msra.mxu0 0.0
  %2914 = vmatprep.subr.mxu0 0.0
  %2915 = vmatpush1.msra.mxu0 0.0
  %2916 = vmatprep.subr.mxu0 0.0
  %2917 = vmatpush1.msra.mxu0 0.0
  %2918 = vmatprep.subr.mxu0 0.0
  %2919 = vmatpush1.msra.mxu0 0.0
  %2920 = vmatprep.subr.mxu0 0.0
  %2921 = vmatpush1.msra.mxu0 0.0
  %2922 = vmatprep.subr.mxu0 0.0
  %2923 = vmatpush1.msra.mxu0 0.0
  %2924 = vmatprep.subr.mxu0 0.0
  %2925 = vmatpush1.msra.mxu0 0.0
  %2926 = vmatprep.subr.mxu0 0.0
  %2927 = vmatpush1.msra.mxu0 0.0
  %2928 = vmatprep.subr.mxu0 0.0
  %2929 = vmatpush1.msra.mxu0 0.0
  %2930 = vmatprep.subr.mxu0 0.0
  %2931 = vmatpush1.msra.mxu0 0.0
  %2932 = vmatprep.subr.mxu0 0.0
  %2933 = vmatpush1.msra.mxu0 0.0
  %2934 = vmatprep.subr.mxu0 0.0
  %2935 = vmatpush1.msra.mxu0 0.0
  %2936 = vmatprep.subr.mxu0 0.0
  %2937 = vmatpush1.msra.mxu0 0.0
  %2938 = vmatprep.subr.mxu0 0.0
  %2939 = vmatpush1.msra.mxu0 0.0
  %2940 = vmatprep.subr.mxu0 0.0
  %2941 = vmatpush1.msra.mxu0 0.0
  %2942 = vmatprep.subr.mxu0 0.0
  %2943 = vmatpush1.msra.mxu0 0.0
  %2944 = vmatprep.subr.mxu0 0.0
  %2945 = vmatpush1.msra.mxu0 0.0
  %2946 = vmatprep.subr.mxu0 0.0
  %2947 = vmatpush1.msra.mxu0 0.0
  %2948 = vmatprep.subr.mxu0 0.0
  %2949 = vmatpush1.msra.mxu0 0.0
  %2950 = vmatprep.subr.mxu0 0.0
  %2951 = vmatpush1.msra.mxu0 0.0
  %2952 = vmatprep.subr.mxu0 0.0
  %2953 = vmatpush1.msra.mxu0 0.0
  %2954 = vmatprep.subr.mxu0 0.0
  %2955 = vmatpush1.msra.mxu0 0.0
  %2956 = vmatprep.mubr.f32.mxu0 0.0
  %2957 = vmatmul.mubr.f32.gmra.mrb[0].mxu0 %v2819
  %v2958 = vpop.f32.mrb[0].mxu0
  %v2959 = vadd.f32 0.0, %v2958
  %v2960 = vpop.f32.mrb[0].mxu0
  %v2961 = vadd.f32 0.0, %v2960
  %2962 = vdwg.mxu0
  %v2963 = vadd.f32 %v1902, %v2888
  %v2964 = vadd.f32 %v1904, %v2890
  %v2965 = vadd.f32 %v1973, %v2959
  %v2966 = vadd.f32 %v1975, %v2961
  %v2967 = vmul.f32 %v2963, 0.5
  %v2968 = vtanh.pop %v2967
  %v2969 = vmul.f32 %v2968, 0.5
  %v2970 = vadd.f32 %v2969, 0.5
  %v2971 = vmul.f32 %v2964, 0.5
  %v2972 = vtanh.pop %v2971
  %v2973 = vmul.f32 %v2972, 0.5
  %v2974 = vadd.f32 %v2973, 0.5
  %v2975 = vtanh.pop %v2965
  %v2976 = vmul.f32 %v2966, 0.5
  %v2977 = vtanh.pop %v2976
  %v2978 = vmul.f32 %v2977, 0.5
  %v2979 = vadd.f32 %v2978, 0.5
  %v2980 = vmul.f32 %v2974, %v2813
  %v2981 = vmul.f32 %v2970, %v2975
  %v2982 = vadd.f32 %v2980, %v2981
  %v2983 = vtanh.pop %v2982
  %v2984 = vmul.f32 %v2979, %v2983
  %s2985 = scalar_lea.vmem [#allocation3], 40
  %2986 = vst.msk [vmem:[%s2985] sm:$0xff] %vm407, %v2984
  %v2988 = vsel %vm407, %v2984, 0
  %2990 = vmatprep.subr.mxu0 %v57
  %2991 = vmatpush1.msra.mxu0 %v56
  %2992 = vmatprep.subr.mxu0 %v61
  %2993 = vmatpush1.msra.mxu0 %v60
  %2994 = vmatprep.subr.mxu0 %v65
  %2995 = vmatpush1.msra.mxu0 %v64
  %2996 = vmatprep.subr.mxu0 %v69
  %2997 = vmatpush1.msra.mxu0 %v68
  %2998 = vmatprep.subr.mxu0 0.0
  %2999 = vmatpush1.msra.mxu0 0.0
  %3000 = vmatprep.subr.mxu0 0.0
  %3001 = vmatpush1.msra.mxu0 0.0
  %3002 = vmatprep.subr.mxu0 0.0
  %3003 = vmatpush1.msra.mxu0 0.0
  %3004 = vmatprep.subr.mxu0 0.0
  %3005 = vmatpush1.msra.mxu0 0.0
  %3006 = vmatprep.subr.mxu0 0.0
  %3007 = vmatpush1.msra.mxu0 0.0
  %3008 = vmatprep.subr.mxu0 0.0
  %3009 = vmatpush1.msra.mxu0 0.0
  %3010 = vmatprep.subr.mxu0 0.0
  %3011 = vmatpush1.msra.mxu0 0.0
  %3012 = vmatprep.subr.mxu0 0.0
  %3013 = vmatpush1.msra.mxu0 0.0
  %3014 = vmatprep.subr.mxu0 0.0
  %3015 = vmatpush1.msra.mxu0 0.0
  %3016 = vmatprep.subr.mxu0 0.0
  %3017 = vmatpush1.msra.mxu0 0.0
  %3018 = vmatprep.subr.mxu0 0.0
  %3019 = vmatpush1.msra.mxu0 0.0
  %3020 = vmatprep.subr.mxu0 0.0
  %3021 = vmatpush1.msra.mxu0 0.0
  %3022 = vmatprep.subr.mxu0 0.0
  %3023 = vmatpush1.msra.mxu0 0.0
  %3024 = vmatprep.subr.mxu0 0.0
  %3025 = vmatpush1.msra.mxu0 0.0
  %3026 = vmatprep.subr.mxu0 0.0
  %3027 = vmatpush1.msra.mxu0 0.0
  %3028 = vmatprep.subr.mxu0 0.0
  %3029 = vmatpush1.msra.mxu0 0.0
  %3030 = vmatprep.subr.mxu0 0.0
  %3031 = vmatpush1.msra.mxu0 0.0
  %3032 = vmatprep.subr.mxu0 0.0
  %3033 = vmatpush1.msra.mxu0 0.0
  %3034 = vmatprep.subr.mxu0 0.0
  %3035 = vmatpush1.msra.mxu0 0.0
  %3036 = vmatprep.subr.mxu0 0.0
  %3037 = vmatpush1.msra.mxu0 0.0
  %3038 = vmatprep.subr.mxu0 0.0
  %3039 = vmatpush1.msra.mxu0 0.0
  %3040 = vmatprep.subr.mxu0 0.0
  %3041 = vmatpush1.msra.mxu0 0.0
  %3042 = vmatprep.subr.mxu0 0.0
  %3043 = vmatpush1.msra.mxu0 0.0
  %3044 = vmatprep.subr.mxu0 0.0
  %3045 = vmatpush1.msra.mxu0 0.0
  %3046 = vmatprep.subr.mxu0 0.0
  %3047 = vmatpush1.msra.mxu0 0.0
  %3048 = vmatprep.subr.mxu0 0.0
  %3049 = vmatpush1.msra.mxu0 0.0
  %3050 = vmatprep.subr.mxu0 0.0
  %3051 = vmatpush1.msra.mxu0 0.0
  %3052 = vmatprep.subr.mxu0 0.0
  %3053 = vmatpush1.msra.mxu0 0.0
  %3054 = vmatprep.mubr.f32.mxu0 0.0
  %3055 = vmatmul.mubr.f32.gmra.mrb[0].mxu0 %v2988
  %v3056 = vpop.f32.mrb[0].mxu0
  %v3057 = vadd.f32 0.0, %v3056
  %v3058 = vpop.f32.mrb[0].mxu0
  %v3059 = vadd.f32 0.0, %v3058
  %3060 = vdwg.mxu0
  %3061 = vmatprep.subr.mxu0 %v59
  %3062 = vmatpush1.msra.mxu0 %v58
  %3063 = vmatprep.subr.mxu0 %v63
  %3064 = vmatpush1.msra.mxu0 %v62
  %3065 = vmatprep.subr.mxu0 %v67
  %3066 = vmatpush1.msra.mxu0 %v66
  %3067 = vmatprep.subr.mxu0 %v71
  %3068 = vmatpush1.msra.mxu0 %v70
  %3069 = vmatprep.subr.mxu0 0.0
  %3070 = vmatpush1.msra.mxu0 0.0
  %3071 = vmatprep.subr.mxu0 0.0
  %3072 = vmatpush1.msra.mxu0 0.0
  %3073 = vmatprep.subr.mxu0 0.0
  %3074 = vmatpush1.msra.mxu0 0.0
  %3075 = vmatprep.subr.mxu0 0.0
  %3076 = vmatpush1.msra.mxu0 0.0
  %3077 = vmatprep.subr.mxu0 0.0
  %3078 = vmatpush1.msra.mxu0 0.0
  %3079 = vmatprep.subr.mxu0 0.0
  %3080 = vmatpush1.msra.mxu0 0.0
  %3081 = vmatprep.subr.mxu0 0.0
  %3082 = vmatpush1.msra.mxu0 0.0
  %3083 = vmatprep.subr.mxu0 0.0
  %3084 = vmatpush1.msra.mxu0 0.0
  %3085 = vmatprep.subr.mxu0 0.0
  %3086 = vmatpush1.msra.mxu0 0.0
  %3087 = vmatprep.subr.mxu0 0.0
  %3088 = vmatpush1.msra.mxu0 0.0
  %3089 = vmatprep.subr.mxu0 0.0
  %3090 = vmatpush1.msra.mxu0 0.0
  %3091 = vmatprep.subr.mxu0 0.0
  %3092 = vmatpush1.msra.mxu0 0.0
  %3093 = vmatprep.subr.mxu0 0.0
  %3094 = vmatpush1.msra.mxu0 0.0
  %3095 = vmatprep.subr.mxu0 0.0
  %3096 = vmatpush1.msra.mxu0 0.0
  %3097 = vmatprep.subr.mxu0 0.0
  %3098 = vmatpush1.msra.mxu0 0.0
  %3099 = vmatprep.subr.mxu0 0.0
  %3100 = vmatpush1.msra.mxu0 0.0
  %3101 = vmatprep.subr.mxu0 0.0
  %3102 = vmatpush1.msra.mxu0 0.0
  %3103 = vmatprep.subr.mxu0 0.0
  %3104 = vmatpush1.msra.mxu0 0.0
  %3105 = vmatprep.subr.mxu0 0.0
  %3106 = vmatpush1.msra.mxu0 0.0
  %3107 = vmatprep.subr.mxu0 0.0
  %3108 = vmatpush1.msra.mxu0 0.0
  %3109 = vmatprep.subr.mxu0 0.0
  %3110 = vmatpush1.msra.mxu0 0.0
  %3111 = vmatprep.subr.mxu0 0.0
  %3112 = vmatpush1.msra.mxu0 0.0
  %3113 = vmatprep.subr.mxu0 0.0
  %3114 = vmatpush1.msra.mxu0 0.0
  %3115 = vmatprep.subr.mxu0 0.0
  %3116 = vmatpush1.msra.mxu0 0.0
  %3117 = vmatprep.subr.mxu0 0.0
  %3118 = vmatpush1.msra.mxu0 0.0
  %3119 = vmatprep.subr.mxu0 0.0
  %3120 = vmatpush1.msra.mxu0 0.0
  %3121 = vmatprep.subr.mxu0 0.0
  %3122 = vmatpush1.msra.mxu0 0.0
  %3123 = vmatprep.subr.mxu0 0.0
  %3124 = vmatpush1.msra.mxu0 0.0
  %3125 = vmatprep.mubr.f32.mxu0 0.0
  %3126 = vmatmul.mubr.f32.gmra.mrb[0].mxu0 %v2988
  %v3127 = vpop.f32.mrb[0].mxu0
  %v3128 = vadd.f32 0.0, %v3127
  %v3129 = vpop.f32.mrb[0].mxu0
  %v3130 = vadd.f32 0.0, %v3129
  %3131 = vdwg.mxu0
  %v3132 = vadd.f32 %v1902, %v3057
  %v3133 = vadd.f32 %v1904, %v3059
  %v3134 = vadd.f32 %v1973, %v3128
  %v3135 = vadd.f32 %v1975, %v3130
  %v3136 = vmul.f32 %v3132, 0.5
  %v3137 = vtanh.pop %v3136
  %v3138 = vmul.f32 %v3137, 0.5
  %v3139 = vadd.f32 %v3138, 0.5
  %v3140 = vmul.f32 %v3133, 0.5
  %v3141 = vtanh.pop %v3140
  %v3142 = vmul.f32 %v3141, 0.5
  %v3143 = vadd.f32 %v3142, 0.5
  %v3144 = vtanh.pop %v3134
  %v3145 = vmul.f32 %v3135, 0.5
  %v3146 = vtanh.pop %v3145
  %v3147 = vmul.f32 %v3146, 0.5
  %v3148 = vadd.f32 %v3147, 0.5
  %v3149 = vmul.f32 %v3143, %v2982
  %v3150 = vmul.f32 %v3139, %v3144
  %v3151 = vadd.f32 %v3149, %v3150
  %v3152 = vtanh.pop %v3151
  %v3153 = vmul.f32 %v3148, %v3152
  %s3154 = scalar_lea.vmem [#allocation3], 48
  %3155 = vst.msk [vmem:[%s3154] sm:$0xff] %vm407, %v3153
  %v3157 = vsel %vm407, %v3153, 0
  %3159 = vmatprep.subr.mxu0 %v57
  %3160 = vmatpush1.msra.mxu0 %v56
  %3161 = vmatprep.subr.mxu0 %v61
  %3162 = vmatpush1.msra.mxu0 %v60
  %3163 = vmatprep.subr.mxu0 %v65
  %3164 = vmatpush1.msra.mxu0 %v64
  %3165 = vmatprep.subr.mxu0 %v69
  %3166 = vmatpush1.msra.mxu0 %v68
  %3167 = vmatprep.subr.mxu0 0.0
  %3168 = vmatpush1.msra.mxu0 0.0
  %3169 = vmatprep.subr.mxu0 0.0
  %3170 = vmatpush1.msra.mxu0 0.0
  %3171 = vmatprep.subr.mxu0 0.0
  %3172 = vmatpush1.msra.mxu0 0.0
  %3173 = vmatprep.subr.mxu0 0.0
  %3174 = vmatpush1.msra.mxu0 0.0
  %3175 = vmatprep.subr.mxu0 0.0
  %3176 = vmatpush1.msra.mxu0 0.0
  %3177 = vmatprep.subr.mxu0 0.0
  %3178 = vmatpush1.msra.mxu0 0.0
  %3179 = vmatprep.subr.mxu0 0.0
  %3180 = vmatpush1.msra.mxu0 0.0
  %3181 = vmatprep.subr.mxu0 0.0
  %3182 = vmatpush1.msra.mxu0 0.0
  %3183 = vmatprep.subr.mxu0 0.0
  %3184 = vmatpush1.msra.mxu0 0.0
  %3185 = vmatprep.subr.mxu0 0.0
  %3186 = vmatpush1.msra.mxu0 0.0
  %3187 = vmatprep.subr.mxu0 0.0
  %3188 = vmatpush1.msra.mxu0 0.0
  %3189 = vmatprep.subr.mxu0 0.0
  %3190 = vmatpush1.msra.mxu0 0.0
  %3191 = vmatprep.subr.mxu0 0.0
  %3192 = vmatpush1.msra.mxu0 0.0
  %3193 = vmatprep.subr.mxu0 0.0
  %3194 = vmatpush1.msra.mxu0 0.0
  %3195 = vmatprep.subr.mxu0 0.0
  %3196 = vmatpush1.msra.mxu0 0.0
  %3197 = vmatprep.subr.mxu0 0.0
  %3198 = vmatpush1.msra.mxu0 0.0
  %3199 = vmatprep.subr.mxu0 0.0
  %3200 = vmatpush1.msra.mxu0 0.0
  %3201 = vmatprep.subr.mxu0 0.0
  %3202 = vmatpush1.msra.mxu0 0.0
  %3203 = vmatprep.subr.mxu0 0.0
  %3204 = vmatpush1.msra.mxu0 0.0
  %3205 = vmatprep.subr.mxu0 0.0
  %3206 = vmatpush1.msra.mxu0 0.0
  %3207 = vmatprep.subr.mxu0 0.0
  %3208 = vmatpush1.msra.mxu0 0.0
  %3209 = vmatprep.subr.mxu0 0.0
  %3210 = vmatpush1.msra.mxu0 0.0
  %3211 = vmatprep.subr.mxu0 0.0
  %3212 = vmatpush1.msra.mxu0 0.0
  %3213 = vmatprep.subr.mxu0 0.0
  %3214 = vmatpush1.msra.mxu0 0.0
  %3215 = vmatprep.subr.mxu0 0.0
  %3216 = vmatpush1.msra.mxu0 0.0
  %3217 = vmatprep.subr.mxu0 0.0
  %3218 = vmatpush1.msra.mxu0 0.0
  %3219 = vmatprep.subr.mxu0 0.0
  %3220 = vmatpush1.msra.mxu0 0.0
  %3221 = vmatprep.subr.mxu0 0.0
  %3222 = vmatpush1.msra.mxu0 0.0
  %3223 = vmatprep.mubr.f32.mxu0 0.0
  %3224 = vmatmul.mubr.f32.gmra.mrb[0].mxu0 %v3157
  %v3225 = vpop.f32.mrb[0].mxu0
  %v3226 = vadd.f32 0.0, %v3225
  %v3227 = vpop.f32.mrb[0].mxu0
  %v3228 = vadd.f32 0.0, %v3227
  %3229 = vdwg.mxu0
  %3230 = vmatprep.subr.mxu0 %v59
  %3231 = vmatpush1.msra.mxu0 %v58
  %3232 = vmatprep.subr.mxu0 %v63
  %3233 = vmatpush1.msra.mxu0 %v62
  %3234 = vmatprep.subr.mxu0 %v67
  %3235 = vmatpush1.msra.mxu0 %v66
  %3236 = vmatprep.subr.mxu0 %v71
  %3237 = vmatpush1.msra.mxu0 %v70
  %3238 = vmatprep.subr.mxu0 0.0
  %3239 = vmatpush1.msra.mxu0 0.0
  %3240 = vmatprep.subr.mxu0 0.0
  %3241 = vmatpush1.msra.mxu0 0.0
  %3242 = vmatprep.subr.mxu0 0.0
  %3243 = vmatpush1.msra.mxu0 0.0
  %3244 = vmatprep.subr.mxu0 0.0
  %3245 = vmatpush1.msra.mxu0 0.0
  %3246 = vmatprep.subr.mxu0 0.0
  %3247 = vmatpush1.msra.mxu0 0.0
  %3248 = vmatprep.subr.mxu0 0.0
  %3249 = vmatpush1.msra.mxu0 0.0
  %3250 = vmatprep.subr.mxu0 0.0
  %3251 = vmatpush1.msra.mxu0 0.0
  %3252 = vmatprep.subr.mxu0 0.0
  %3253 = vmatpush1.msra.mxu0 0.0
  %3254 = vmatprep.subr.mxu0 0.0
  %3255 = vmatpush1.msra.mxu0 0.0
  %3256 = vmatprep.subr.mxu0 0.0
  %3257 = vmatpush1.msra.mxu0 0.0
  %3258 = vmatprep.subr.mxu0 0.0
  %3259 = vmatpush1.msra.mxu0 0.0
  %3260 = vmatprep.subr.mxu0 0.0
  %3261 = vmatpush1.msra.mxu0 0.0
  %3262 = vmatprep.subr.mxu0 0.0
  %3263 = vmatpush1.msra.mxu0 0.0
  %3264 = vmatprep.subr.mxu0 0.0
  %3265 = vmatpush1.msra.mxu0 0.0
  %3266 = vmatprep.subr.mxu0 0.0
  %3267 = vmatpush1.msra.mxu0 0.0
  %3268 = vmatprep.subr.mxu0 0.0
  %3269 = vmatpush1.msra.mxu0 0.0
  %3270 = vmatprep.subr.mxu0 0.0
  %3271 = vmatpush1.msra.mxu0 0.0
  %3272 = vmatprep.subr.mxu0 0.0
  %3273 = vmatpush1.msra.mxu0 0.0
  %3274 = vmatprep.subr.mxu0 0.0
  %3275 = vmatpush1.msra.mxu0 0.0
  %3276 = vmatprep.subr.mxu0 0.0
  %3277 = vmatpush1.msra.mxu0 0.0
  %3278 = vmatprep.subr.mxu0 0.0
  %3279 = vmatpush1.msra.mxu0 0.0
  %3280 = vmatprep.subr.mxu0 0.0
  %3281 = vmatpush1.msra.mxu0 0.0
  %3282 = vmatprep.subr.mxu0 0.0
  %3283 = vmatpush1.msra.mxu0 0.0
  %3284 = vmatprep.subr.mxu0 0.0
  %3285 = vmatpush1.msra.mxu0 0.0
  %3286 = vmatprep.subr.mxu0 0.0
  %3287 = vmatpush1.msra.mxu0 0.0
  %3288 = vmatprep.subr.mxu0 0.0
  %3289 = vmatpush1.msra.mxu0 0.0
  %3290 = vmatprep.subr.mxu0 0.0
  %3291 = vmatpush1.msra.mxu0 0.0
  %3292 = vmatprep.subr.mxu0 0.0
  %3293 = vmatpush1.msra.mxu0 0.0
  %3294 = vmatprep.mubr.f32.mxu0 0.0
  %3295 = vmatmul.mubr.f32.gmra.mrb[0].mxu0 %v3157
  %v3296 = vpop.f32.mrb[0].mxu0
  %v3297 = vadd.f32 0.0, %v3296
  %v3298 = vpop.f32.mrb[0].mxu0
  %v3299 = vadd.f32 0.0, %v3298
  %3300 = vdwg.mxu0
  %v3301 = vadd.f32 %v1902, %v3226
  %v3302 = vadd.f32 %v1904, %v3228
  %v3303 = vadd.f32 %v1973, %v3297
  %v3304 = vadd.f32 %v1975, %v3299
  %v3305 = vmul.f32 %v3301, 0.5
  %v3306 = vtanh.pop %v3305
  %v3307 = vmul.f32 %v3306, 0.5
  %v3308 = vadd.f32 %v3307, 0.5
  %v3309 = vmul.f32 %v3302, 0.5
  %v3310 = vtanh.pop %v3309
  %v3311 = vmul.f32 %v3310, 0.5
  %v3312 = vadd.f32 %v3311, 0.5
  %v3313 = vtanh.pop %v3303
  %v3314 = vmul.f32 %v3304, 0.5
  %v3315 = vtanh.pop %v3314
  %v3316 = vmul.f32 %v3315, 0.5
  %v3317 = vadd.f32 %v3316, 0.5
  %v3318 = vmul.f32 %v3312, %v3151
  %v3319 = vmul.f32 %v3308, %v3313
  %v3320 = vadd.f32 %v3318, %v3319
  %v3321 = vtanh.pop %v3320
  %v3322 = vmul.f32 %v3317, %v3321
  %s3323 = scalar_lea.vmem [#allocation3], 56
  %3324 = vst.msk [vmem:[%s3323] sm:$0xff] %vm407, %v3322
  %v3325 = vld [vmem:[#allocation3] sm:$0xff]
  %v3326 = vld [vmem:[#allocation3 + $0x8] sm:$0xff]
  %v3327 = vld [vmem:[#allocation3 + $0x10] sm:$0xff]
  %v3328 = vld [vmem:[#allocation3 + $0x18] sm:$0xff]
  %v3329 = vld [vmem:[#allocation3 + $0x20] sm:$0xff]
  %v3330 = vld [vmem:[#allocation3 + $0x28] sm:$0xff]
  %v3331 = vld [vmem:[#allocation3 + $0x30] sm:$0xff]
  %v3332 = vld [vmem:[#allocation3 + $0x38] sm:$0xff]
  %v3333 = vld [vmem:[%s7] sm:$0xff]
  %v3334 = vld [vmem:[%s7 + $0x8] sm:$0xff]
  %v3335 = vld [vmem:[%s7 + $0x10] sm:$0xff]
  %v3336 = vld [vmem:[%s7 + $0x18] sm:$0xff]
  %v3337 = vld [vmem:[%s8] sm:$0x1]
  %v3339 = vlaneseq
  %v3340 = vshrl.u32 %v3339, 7
  %v3341 = vsub.s32 0, %v3340
  %v3342 = vrot.slane %v3337, %v3341
  %v3345 = vsel %vm407, %v3325, 0
  %v3348 = vsel %vm407, %v3326, 0
  %v3351 = vsel %vm407, %v3327, 0
  %v3354 = vsel %vm407, %v3328, 0
  %v3357 = vsel %vm407, %v3329, 0
  %v3360 = vsel %vm407, %v3330, 0
  %v3363 = vsel %vm407, %v3331, 0
  %v3366 = vsel %vm407, %v3332, 0
  %3368 = vmatprep.subr.mxu0 0.0
  %3369 = vmatpush1.msra.mxu0 %v3333
  %3370 = vmatprep.subr.mxu0 0.0
  %3371 = vmatpush1.msra.mxu0 %v3334
  %3372 = vmatprep.subr.mxu0 0.0
  %3373 = vmatpush1.msra.mxu0 %v3335
  %3374 = vmatprep.subr.mxu0 0.0
  %3375 = vmatpush1.msra.mxu0 %v3336
  %3376 = vmatprep.subr.mxu0 0.0
  %3377 = vmatpush1.msra.mxu0 0.0
  %3378 = vmatprep.subr.mxu0 0.0
  %3379 = vmatpush1.msra.mxu0 0.0
  %3380 = vmatprep.subr.mxu0 0.0
  %3381 = vmatpush1.msra.mxu0 0.0
  %3382 = vmatprep.subr.mxu0 0.0
  %3383 = vmatpush1.msra.mxu0 0.0
  %3384 = vmatprep.subr.mxu0 0.0
  %3385 = vmatpush1.msra.mxu0 0.0
  %3386 = vmatprep.subr.mxu0 0.0
  %3387 = vmatpush1.msra.mxu0 0.0
  %3388 = vmatprep.subr.mxu0 0.0
  %3389 = vmatpush1.msra.mxu0 0.0
  %3390 = vmatprep.subr.mxu0 0.0
  %3391 = vmatpush1.msra.mxu0 0.0
  %3392 = vmatprep.subr.mxu0 0.0
  %3393 = vmatpush1.msra.mxu0 0.0
  %3394 = vmatprep.subr.mxu0 0.0
  %3395 = vmatpush1.msra.mxu0 0.0
  %3396 = vmatprep.subr.mxu0 0.0
  %3397 = vmatpush1.msra.mxu0 0.0
  %3398 = vmatprep.subr.mxu0 0.0
  %3399 = vmatpush1.msra.mxu0 0.0
  %3400 = vmatprep.subr.mxu0 0.0
  %3401 = vmatpush1.msra.mxu0 0.0
  %3402 = vmatprep.subr.mxu0 0.0
  %3403 = vmatpush1.msra.mxu0 0.0
  %3404 = vmatprep.subr.mxu0 0.0
  %3405 = vmatpush1.msra.mxu0 0.0
  %3406 = vmatprep.subr.mxu0 0.0
  %3407 = vmatpush1.msra.mxu0 0.0
  %3408 = vmatprep.subr.mxu0 0.0
  %3409 = vmatpush1.msra.mxu0 0.0
  %3410 = vmatprep.subr.mxu0 0.0
  %3411 = vmatpush1.msra.mxu0 0.0
  %3412 = vmatprep.subr.mxu0 0.0
  %3413 = vmatpush1.msra.mxu0 0.0
  %3414 = vmatprep.subr.mxu0 0.0
  %3415 = vmatpush1.msra.mxu0 0.0
  %3416 = vmatprep.subr.mxu0 0.0
  %3417 = vmatpush1.msra.mxu0 0.0
  %3418 = vmatprep.subr.mxu0 0.0
  %3419 = vmatpush1.msra.mxu0 0.0
  %3420 = vmatprep.subr.mxu0 0.0
  %3421 = vmatpush1.msra.mxu0 0.0
  %3422 = vmatprep.subr.mxu0 0.0
  %3423 = vmatpush1.msra.mxu0 0.0
  %3424 = vmatprep.subr.mxu0 0.0
  %3425 = vmatpush1.msra.mxu0 0.0
  %3426 = vmatprep.subr.mxu0 0.0
  %3427 = vmatpush1.msra.mxu0 0.0
  %3428 = vmatprep.subr.mxu0 0.0
  %3429 = vmatpush1.msra.mxu0 0.0
  %3430 = vmatprep.subr.mxu0 0.0
  %3431 = vmatpush1.msra.mxu0 0.0
  %3432 = vmatprep.mubr.f32.mxu0 0.0
  %3433 = vmatmul.mubr.f32.gmra.mrb[0].mxu0 %v3345
  %v3434 = vpop.f32.mrb[0].mxu0
  %v3435 = vadd.f32 %v3342, %v3434
  %v3436 = vpop.f32.mrb[0].mxu0
  %3437 = vmatprep.mubr.f32.mxu0 0.0
  %3438 = vmatmul.mubr.f32.gmra.mrb[0].mxu0 %v3348
  %v3439 = vpop.f32.mrb[0].mxu0
  %v3440 = vadd.f32 %v3342, %v3439
  %v3441 = vpop.f32.mrb[0].mxu0
  %3442 = vmatprep.mubr.f32.mxu0 0.0
  %3443 = vmatmul.mubr.f32.gmra.mrb[0].mxu0 %v3351
  %v3444 = vpop.f32.mrb[0].mxu0
  %v3445 = vadd.f32 %v3342, %v3444
  %v3446 = vpop.f32.mrb[0].mxu0
  %3447 = vmatprep.mubr.f32.mxu0 0.0
  %3448 = vmatmul.mubr.f32.gmra.mrb[0].mxu0 %v3354
  %v3449 = vpop.f32.mrb[0].mxu0
  %v3450 = vadd.f32 %v3342, %v3449
  %v3451 = vpop.f32.mrb[0].mxu0
  %3452 = vmatprep.mubr.f32.mxu0 0.0
  %3453 = vmatmul.mubr.f32.gmra.mrb[0].mxu0 %v3357
  %v3454 = vpop.f32.mrb[0].mxu0
  %v3455 = vadd.f32 %v3342, %v3454
  %v3456 = vpop.f32.mrb[0].mxu0
  %3457 = vmatprep.mubr.f32.mxu0 0.0
  %3458 = vmatmul.mubr.f32.gmra.mrb[0].mxu0 %v3360
  %v3459 = vpop.f32.mrb[0].mxu0
  %v3460 = vadd.f32 %v3342, %v3459
  %v3461 = vpop.f32.mrb[0].mxu0
  %3462 = vmatprep.mubr.f32.mxu0 0.0
  %3463 = vmatmul.mubr.f32.gmra.mrb[0].mxu0 %v3363
  %v3464 = vpop.f32.mrb[0].mxu0
  %v3465 = vadd.f32 %v3342, %v3464
  %v3466 = vpop.f32.mrb[0].mxu0
  %3467 = vmatprep.mubr.f32.mxu0 0.0
  %3468 = vmatmul.mubr.f32.gmra.mrb[0].mxu0 %v3366
  %v3469 = vpop.f32.mrb[0].mxu0
  %v3470 = vadd.f32 %v3342, %v3469
  %v3471 = vpop.f32.mrb[0].mxu0
  %3472 = vdwg.mxu0
  %v3473 = vtanh.pop %v3435
  %v3474 = vtanh.pop %v3440
  %v3475 = vtanh.pop %v3445
  %v3476 = vtanh.pop %v3450
  %v3477 = vtanh.pop %v3455
  %v3478 = vtanh.pop %v3460
  %v3479 = vtanh.pop %v3465
  %v3480 = vtanh.pop %v3470
  %v3481 = vld [vmem:[%s9] sm:$0xff]
  %v3482 = vld [vmem:[%s9 + $0x8] sm:$0xff]
  %v3483 = vld [vmem:[%s9 + $0x10] sm:$0xff]
  %v3484 = vld [vmem:[%s9 + $0x18] sm:$0xff]
  %v3485 = vld [vmem:[%s10] sm:$0x1]
  %v3487 = vlaneseq
  %v3488 = vshrl.u32 %v3487, 7
  %v3489 = vsub.s32 0, %v3488
  %v3490 = vrot.slane %v3485, %v3489
  %v3493 = vsel %vm407, %v3473, 0
  %v3496 = vsel %vm407, %v3474, 0
  %v3499 = vsel %vm407, %v3475, 0
  %v3502 = vsel %vm407, %v3476, 0
  %v3505 = vsel %vm407, %v3477, 0
  %v3508 = vsel %vm407, %v3478, 0
  %v3511 = vsel %vm407, %v3479, 0
  %v3514 = vsel %vm407, %v3480, 0
  %3516 = vmatprep.subr.mxu0 0.0
  %3517 = vmatpush1.msra.mxu0 %v3481
  %3518 = vmatprep.subr.mxu0 0.0
  %3519 = vmatpush1.msra.mxu0 %v3482
  %3520 = vmatprep.subr.mxu0 0.0
  %3521 = vmatpush1.msra.mxu0 %v3483
  %3522 = vmatprep.subr.mxu0 0.0
  %3523 = vmatpush1.msra.mxu0 %v3484
  %3524 = vmatprep.subr.mxu0 0.0
  %3525 = vmatpush1.msra.mxu0 0.0
  %3526 = vmatprep.subr.mxu0 0.0
  %3527 = vmatpush1.msra.mxu0 0.0
  %3528 = vmatprep.subr.mxu0 0.0
  %3529 = vmatpush1.msra.mxu0 0.0
  %3530 = vmatprep.subr.mxu0 0.0
  %3531 = vmatpush1.msra.mxu0 0.0
  %3532 = vmatprep.subr.mxu0 0.0
  %3533 = vmatpush1.msra.mxu0 0.0
  %3534 = vmatprep.subr.mxu0 0.0
  %3535 = vmatpush1.msra.mxu0 0.0
  %3536 = vmatprep.subr.mxu0 0.0
  %3537 = vmatpush1.msra.mxu0 0.0
  %3538 = vmatprep.subr.mxu0 0.0
  %3539 = vmatpush1.msra.mxu0 0.0
  %3540 = vmatprep.subr.mxu0 0.0
  %3541 = vmatpush1.msra.mxu0 0.0
  %3542 = vmatprep.subr.mxu0 0.0
  %3543 = vmatpush1.msra.mxu0 0.0
  %3544 = vmatprep.subr.mxu0 0.0
  %3545 = vmatpush1.msra.mxu0 0.0
  %3546 = vmatprep.subr.mxu0 0.0
  %3547 = vmatpush1.msra.mxu0 0.0
  %3548 = vmatprep.subr.mxu0 0.0
  %3549 = vmatpush1.msra.mxu0 0.0
  %3550 = vmatprep.subr.mxu0 0.0
  %3551 = vmatpush1.msra.mxu0 0.0
  %3552 = vmatprep.subr.mxu0 0.0
  %3553 = vmatpush1.msra.mxu0 0.0
  %3554 = vmatprep.subr.mxu0 0.0
  %3555 = vmatpush1.msra.mxu0 0.0
  %3556 = vmatprep.subr.mxu0 0.0
  %3557 = vmatpush1.msra.mxu0 0.0
  %3558 = vmatprep.subr.mxu0 0.0
  %3559 = vmatpush1.msra.mxu0 0.0
  %3560 = vmatprep.subr.mxu0 0.0
  %3561 = vmatpush1.msra.mxu0 0.0
  %3562 = vmatprep.subr.mxu0 0.0
  %3563 = vmatpush1.msra.mxu0 0.0
  %3564 = vmatprep.subr.mxu0 0.0
  %3565 = vmatpush1.msra.mxu0 0.0
  %3566 = vmatprep.subr.mxu0 0.0
  %3567 = vmatpush1.msra.mxu0 0.0
  %3568 = vmatprep.subr.mxu0 0.0
  %3569 = vmatpush1.msra.mxu0 0.0
  %3570 = vmatprep.subr.mxu0 0.0
  %3571 = vmatpush1.msra.mxu0 0.0
  %3572 = vmatprep.subr.mxu0 0.0
  %3573 = vmatpush1.msra.mxu0 0.0
  %3574 = vmatprep.subr.mxu0 0.0
  %3575 = vmatpush1.msra.mxu0 0.0
  %3576 = vmatprep.subr.mxu0 0.0
  %3577 = vmatpush1.msra.mxu0 0.0
  %3578 = vmatprep.subr.mxu0 0.0
  %3579 = vmatpush1.msra.mxu0 0.0
  %3580 = vmatprep.mubr.f32.mxu0 0.0
  %3581 = vmatmul.mubr.f32.gmra.mrb[0].mxu0 %v3493
  %v3582 = vpop.f32.mrb[0].mxu0
  %v3583 = vadd.f32 %v3490, %v3582
  %v3584 = vpop.f32.mrb[0].mxu0
  %3585 = vmatprep.mubr.f32.mxu0 0.0
  %3586 = vmatmul.mubr.f32.gmra.mrb[0].mxu0 %v3496
  %v3587 = vpop.f32.mrb[0].mxu0
  %v3588 = vadd.f32 %v3490, %v3587
  %v3589 = vpop.f32.mrb[0].mxu0
  %3590 = vmatprep.mubr.f32.mxu0 0.0
  %3591 = vmatmul.mubr.f32.gmra.mrb[0].mxu0 %v3499
  %v3592 = vpop.f32.mrb[0].mxu0
  %v3593 = vadd.f32 %v3490, %v3592
  %v3594 = vpop.f32.mrb[0].mxu0
  %3595 = vmatprep.mubr.f32.mxu0 0.0
  %3596 = vmatmul.mubr.f32.gmra.mrb[0].mxu0 %v3502
  %v3597 = vpop.f32.mrb[0].mxu0
  %v3598 = vadd.f32 %v3490, %v3597
  %v3599 = vpop.f32.mrb[0].mxu0
  %3600 = vmatprep.mubr.f32.mxu0 0.0
  %3601 = vmatmul.mubr.f32.gmra.mrb[0].mxu0 %v3505
  %v3602 = vpop.f32.mrb[0].mxu0
  %v3603 = vadd.f32 %v3490, %v3602
  %v3604 = vpop.f32.mrb[0].mxu0
  %3605 = vmatprep.mubr.f32.mxu0 0.0
  %3606 = vmatmul.mubr.f32.gmra.mrb[0].mxu0 %v3508
  %v3607 = vpop.f32.mrb[0].mxu0
  %v3608 = vadd.f32 %v3490, %v3607
  %v3609 = vpop.f32.mrb[0].mxu0
  %3610 = vmatprep.mubr.f32.mxu0 0.0
  %3611 = vmatmul.mubr.f32.gmra.mrb[0].mxu0 %v3511
  %v3612 = vpop.f32.mrb[0].mxu0
  %v3613 = vadd.f32 %v3490, %v3612
  %v3614 = vpop.f32.mrb[0].mxu0
  %3615 = vmatprep.mubr.f32.mxu0 0.0
  %3616 = vmatmul.mubr.f32.gmra.mrb[0].mxu0 %v3514
  %v3617 = vpop.f32.mrb[0].mxu0
  %v3618 = vadd.f32 %v3490, %v3617
  %v3619 = vpop.f32.mrb[0].mxu0
  %3620 = vdwg.mxu0
  %3621 = vst.msk [vmem:[%s11] sm:$0xff] %vm108, %v3583
  %3622 = vst.msk [vmem:[%s11 + $0x8] sm:$0xff] %vm108, %v3588
  %3623 = vst.msk [vmem:[%s11 + $0x10] sm:$0xff] %vm108, %v3593
  %3624 = vst.msk [vmem:[%s11 + $0x18] sm:$0xff] %vm108, %v3598
  %3625 = vst.msk [vmem:[%s11 + $0x20] sm:$0xff] %vm108, %v3603
  %3626 = vst.msk [vmem:[%s11 + $0x28] sm:$0xff] %vm108, %v3608
  %3627 = vst.msk [vmem:[%s11 + $0x30] sm:$0xff] %vm108, %v3613
  %3628 = vst.msk [vmem:[%s11 + $0x38] sm:$0xff] %vm108, %v3618
  // Predicated region
  $region46: #{lstm_autoencoder_forward.1} parent=0 // pred_check
    _
  $region47: #{lstm_autoencoder_forward.1} parent=0 // pred_check_branch
    %3630 = sbr.rel (0) target = $region49
  $region48: #{lstm_autoencoder_forward.1} parent=0 // pred_region
    _
  $region49: #{lstm_autoencoder_forward.1} parent=0 // pred_fallthru
    _
  // Predicated region
  $region50: #{lstm_autoencoder_forward.1} parent=0 // pred_check
    _
  $region51: #{lstm_autoencoder_forward.1} parent=0 // pred_check_branch
    %3632 = sbr.rel (0) target = $region53
  $region52: #{lstm_autoencoder_forward.1} parent=0 // pred_region
    _
  $region53: #{lstm_autoencoder_forward.1} parent=0 // pred_fallthru
    _
  // Predicated region
  $region54: #{lstm_autoencoder_forward.1} parent=0 // pred_check
    _
  $region55: #{lstm_autoencoder_forward.1} parent=0 // pred_check_branch
    %3634 = sbr.rel (0) target = $region57
  $region56: #{lstm_autoencoder_forward.1} parent=0 // pred_region
    _
  $region57: #{lstm_autoencoder_forward.1} parent=0 // pred_fallthru
    _
  // Predicated region
  $region58: #{lstm_autoencoder_forward.1} parent=0 // pred_check
    _
  $region59: #{lstm_autoencoder_forward.1} parent=0 // pred_check_branch
    %3636 = sbr.rel (0) target = $region61
  $region60: #{lstm_autoencoder_forward.1} parent=0 // pred_region
    _
  $region61: #{lstm_autoencoder_forward.1} parent=0 // pred_fallthru
    _

</llo_original>
